<compile_context>
chip_gen: v5e
topology: v5e:2x2
jax: 0.10.0
libtpu: 0.0.40
codegen_flags: <defaults>
</compile_context>

<pallas_src>
import numpy as np
import jax
import jax.numpy as jnp
from jax.experimental import pallas as pl
from jax.experimental.pallas import tpu as pltpu


def _round_up(x, m):
    return (x + m - 1) // m * m


# ---------------------------------------------------------------------------
# Pallas kernel: fused (patches @ weights) + bias + ReLU on one M-tile
# ---------------------------------------------------------------------------
def matmul_bias_relu_kernel(a_ref, w_ref, b_ref, o_ref):
    acc = jnp.dot(a_ref[...], w_ref[...], preferred_element_type=jnp.float32)
    acc = jnp.maximum(acc + b_ref[...], 0.0)          # bias + ReLU in f32 (safe on v5e too)
    o_ref[...] = acc.astype(o_ref.dtype)


def gemm_bias_relu(patches, wmat, bias, out_dtype=jnp.float32):
    """relu(patches @ wmat + bias).

    patches: [M, K], wmat: [K, N], bias: [N] -> [M, N] in `out_dtype`.
    Pads M to the tile size, K and N to multiples of 128, runs a 1-D grid
    over M tiles (auto double-buffered), and slices the padding off.
    """
    M, K = patches.shape
    K2, N = wmat.shape
    assert K == K2

    K_pad = _round_up(K, 128)
    N_pad = _round_up(N, 128)
    if M <= 1024:
        # Single-block fast path: one grid step, minimal row padding.
        tile_m = _round_up(M, 128)
        M_pad = tile_m
    else:
        tile_m = 512
        M_pad = _round_up(M, tile_m)

    a = patches.astype(jnp.bfloat16)
    if (M_pad != M) or (K_pad != K):
        a = jnp.pad(a, ((0, M_pad - M), (0, K_pad - K)))
    w = wmat.astype(jnp.bfloat16)
    if (K_pad != K) or (N_pad != N):
        w = jnp.pad(w, ((0, K_pad - K), (0, N_pad - N)))
    b2 = bias.astype(jnp.float32)
    if N_pad != N:
        b2 = jnp.pad(b2, (0, N_pad - N))
    b2 = b2.reshape(1, N_pad)

    grid = (M_pad // tile_m,)
    out = pl.pallas_call(
        matmul_bias_relu_kernel,
        out_shape=jax.ShapeDtypeStruct((M_pad, N_pad), out_dtype),
        grid_spec=pltpu.PrefetchScalarGridSpec(
            num_scalar_prefetch=0,
            grid=grid,
            in_specs=[
                pl.BlockSpec((tile_m, K_pad), lambda i: (i, 0)),   # streamed M-tiles of patches
                pl.BlockSpec((K_pad, N_pad), lambda i: (0, 0)),    # weights resident
                pl.BlockSpec((1, N_pad), lambda i: (0, 0)),        # bias resident
            ],
            out_specs=pl.BlockSpec((tile_m, N_pad), lambda i: (i, 0)),  # lane-dense (128) stores
        ),
        compiler_params=pltpu.CompilerParams(
            dimension_semantics=("parallel",),   # megacore-shardable on v7x; harmless elsewhere
        ),
    )(a, w, b2)
    return out[:M, :N]


# ---------------------------------------------------------------------------
# JAX glue: NHWC im2col (feature order = kh, kw, Cin; pure slicing, no transposes)
# ---------------------------------------------------------------------------
def im2col_nhwc(x, kh, kw, stride):
    """x: [B, H, W, C] -> patches [B*Ho*Wo, kh*kw*C], plus (Ho, Wo)."""
    B, H, W, C = x.shape
    Ho = (H - kh) // stride + 1
    Wo = (W - kw) // stride + 1
    cols = []
    for i in range(kh):
        for j in range(kw):
            cols.append(x[:, i:i + stride * Ho:stride, j:j + stride * Wo:stride, :])
    p = jnp.concatenate(cols, axis=-1)                     # [B, Ho, Wo, kh*kw*C]
    return p.reshape(B * Ho * Wo, kh * kw * C), Ho, Wo


def conv2d_relu_nhwc(x, w, b, stride, out_dtype):
    """Conv2d (VALID, given stride) + ReLU.

    x NHWC [B,H,W,Cin], w [Cout,Cin,kh,kw] (PyTorch layout), b [Cout]
    -> NHWC [B,Ho,Wo,Cout] in `out_dtype`.
    """
    B = x.shape[0]
    Cout, Cin, kh, kw = w.shape
    patches, Ho, Wo = im2col_nhwc(x, kh, kw, stride)               # [M, kh*kw*Cin]
    wmat = w.transpose(2, 3, 1, 0).reshape(kh * kw * Cin, Cout)    # matches (kh, kw, Cin) order
    out = gemm_bias_relu(patches, wmat, b, out_dtype=out_dtype)    # Pallas hot path
    return out.reshape(B, Ho, Wo, Cout)


# ---------------------------------------------------------------------------
# Deterministic parameter init (orthogonal with relu gain, zero bias)
# ---------------------------------------------------------------------------
def orthogonal_conv_init(key, shape, gain):
    """Orthogonal init on the (Cout, Cin*kh*kw) flattening, like torch orthogonal_."""
    cout = shape[0]
    rest = int(np.prod(shape[1:]))
    rows, cols = max(cout, rest), min(cout, rest)
    a = jax.random.normal(key, (rows, cols), dtype=jnp.float32)
    q, r = jnp.linalg.qr(a)
    q = q * jnp.sign(jnp.diagonal(r))
    if cout < rest:
        q = q.T
    return (gain * q[:cout, :rest]).reshape(shape).astype(jnp.float32)


def init_params(key):
    gain = float(np.sqrt(2.0))  # calculate_gain('relu')
    k1, k2, k3 = jax.random.split(key, 3)
    return {
        "w1": orthogonal_conv_init(k1, (32, 4, 8, 8), gain),
        "b1": jnp.zeros((32,), jnp.float32),
        "w2": orthogonal_conv_init(k2, (64, 32, 4, 4), gain),
        "b2": jnp.zeros((64,), jnp.float32),
        "w3": orthogonal_conv_init(k3, (32, 64, 3, 3), gain),
        "b3": jnp.zeros((32,), jnp.float32),
    }


# ---------------------------------------------------------------------------
# Forward pass (equivalent to deepmind.forward)
# ---------------------------------------------------------------------------
def deepmind_forward(params, x):
    # One NCHW -> NHWC transpose at the input boundary; bf16 activations internally.
    x = jnp.transpose(x, (0, 2, 3, 1)).astype(jnp.bfloat16)                  # [B, 84, 84, 4]
    x = conv2d_relu_nhwc(x, params["w1"], params["b1"], 4, jnp.bfloat16)     # [B, 20, 20, 32]
    x = conv2d_relu_nhwc(x, params["w2"], params["b2"], 2, jnp.bfloat16)     # [B,  9,  9, 64]
    x = conv2d_relu_nhwc(x, params["w3"], params["b3"], 1, jnp.float32)      # [B,  7,  7, 32]
    # Match PyTorch's NCHW flatten order at the output boundary.
    x = jnp.transpose(x, (0, 3, 1, 2)).reshape(-1, 32 * 7 * 7)               # [B, 1568]
    return x


if __name__ == "__main__":
    key = jax.random.PRNGKey(0)
    kp, kx = jax.random.split(key)
    params = init_params(kp)

    # The flatten to 32*7*7 implies 84x84 spatial input (standard Atari frames).
    B = 2
    x = jax.random.normal(kx, (B, 4, 84, 84), dtype=jnp.float32)

    out = jax.jit(deepmind_forward)(params, x)
    out = jax.block_until_ready(out)

    assert out.shape == (B, 32 * 7 * 7), out.shape
    assert bool(jnp.all(jnp.isfinite(out)))
    assert bool(jnp.all(out >= 0.0))  # final ReLU

    print("KERNEL_OK")
</pallas_src>

<mosaic_0001>
module attributes {stable_mosaic.version = 11 : i64} {
  func.func @matmul_bias_relu_kernel(%arg0: i32, %arg1: memref<896x256xbf16, #tpu.memory_space<vmem>>, %arg2: memref<256x128xbf16, #tpu.memory_space<vmem>>, %arg3: memref<1x128xf32, #tpu.memory_space<vmem>>, %arg4: memref<896x128xbf16, #tpu.memory_space<vmem>>) attributes {dimension_semantics = [#tpu.dimension_semantics<parallel>], iteration_bounds = array<i64: 1>, scalar_prefetch = 0 : i64, scratch_operands = 0 : i64, tpu.core_type = #tpu.core_type<tc>, window_params = [{transform_indices = @transform_0, window_bounds = array<i64: 896, 256>}, {pipeline_mode = #tpu.pipeline_mode<synchronous>, transform_indices = @transform_1, window_bounds = array<i64: 256, 128>}, {pipeline_mode = #tpu.pipeline_mode<synchronous>, transform_indices = @transform_2, window_bounds = array<i64: 1, 128>}, {transform_indices = @transform_3, window_bounds = array<i64: 896, 128>}]} {
    %c0 = arith.constant 0 : index
    %c0_0 = arith.constant 0 : index
    %0 = vector.load %arg1[%c0, %c0_0] : memref<896x256xbf16, #tpu.memory_space<vmem>>, vector<896x256xbf16>
    %c0_1 = arith.constant 0 : index
    %c0_2 = arith.constant 0 : index
    %1 = vector.load %arg2[%c0_1, %c0_2] : memref<256x128xbf16, #tpu.memory_space<vmem>>, vector<256x128xbf16>
    %cst = arith.constant dense<0.000000e+00> : vector<896x128xf32>
    %2 = tpu.matmul %0, %1, %cst {dimension_numbers = #tpu.dot_dimension_numbers<[1], [0], [0], [1], [0, 0, 1, 1], [], []>} : vector<896x256xbf16>, vector<256x128xbf16>, vector<896x128xf32> -> vector<896x128xf32>
    %c0_3 = arith.constant 0 : index
    %c0_4 = arith.constant 0 : index
    %3 = vector.load %arg3[%c0_3, %c0_4] : memref<1x128xf32, #tpu.memory_space<vmem>>, vector<1x128xf32>
    %4 = vector.broadcast %3 : vector<1x128xf32> to vector<896x128xf32>
    %5 = arith.addf %2, %4 : vector<896x128xf32>
    %cst_5 = arith.constant 0.000000e+00 : f32
    %6 = vector.broadcast %cst_5 : f32 to vector<896x128xf32>
    %7 = arith.maximumf %5, %6 : vector<896x128xf32>
    %8 = arith.truncf %7 : vector<896x128xf32> to vector<896x128xbf16>
    %c0_6 = arith.constant 0 : index
    %c0_7 = arith.constant 0 : index
    %9 = vector.load %arg4[%c0_6, %c0_7] : memref<896x128xbf16, #tpu.memory_space<vmem>>, vector<896x128xbf16>
    tpu.vector_store %arg4[%c0_6, %c0_7], %8 {strides = array<i32>} : memref<896x128xbf16, #tpu.memory_space<vmem>>, vector<896x128xbf16>,
    return
  }
  func.func @transform_0(%arg0: i32) -> (i32, i32) {
    %c0_i32 = arith.constant 0 : i32
    %c0_i32_0 = arith.constant 0 : i32
    return %arg0, %c0_i32 : i32, i32
  }
  func.func @transform_1(%arg0: i32) -> (i32, i32) {
    %c0_i32 = arith.constant 0 : i32
    %c0_i32_0 = arith.constant 0 : i32
    %c0_i32_1 = arith.constant 0 : i32
    return %c0_i32, %c0_i32_0 : i32, i32
  }
  func.func @transform_2(%arg0: i32) -> (i32, i32) {
    %c0_i32 = arith.constant 0 : i32
    %c0_i32_0 = arith.constant 0 : i32
    %c0_i32_1 = arith.constant 0 : i32
    return %c0_i32, %c0_i32_0 : i32, i32
  }
  func.func @transform_3(%arg0: i32) -> (i32, i32) {
    %c0_i32 = arith.constant 0 : i32
    %c0_i32_0 = arith.constant 0 : i32
    return %arg0, %c0_i32 : i32, i32
  }
}

module attributes {stable_mosaic.version = 11 : i64} {
  func.func @matmul_bias_relu_kernel(%arg0: i32, %arg1: memref<256x512xbf16, #tpu.memory_space<vmem>>, %arg2: memref<512x128xbf16, #tpu.memory_space<vmem>>, %arg3: memref<1x128xf32, #tpu.memory_space<vmem>>, %arg4: memref<256x128xbf16, #tpu.memory_space<vmem>>) attributes {dimension_semantics = [#tpu.dimension_semantics<parallel>], iteration_bounds = array<i64: 1>, scalar_prefetch = 0 : i64, scratch_operands = 0 : i64, tpu.core_type = #tpu.core_type<tc>, window_params = [{transform_indices = @transform_0, window_bounds = array<i64: 256, 512>}, {pipeline_mode = #tpu.pipeline_mode<synchronous>, transform_indices = @transform_1, window_bounds = array<i64: 512, 128>}, {pipeline_mode = #tpu.pipeline_mode<synchronous>, transform_indices = @transform_2, window_bounds = array<i64: 1, 128>}, {transform_indices = @transform_3, window_bounds = array<i64: 256, 128>}]} {
    %c0 = arith.constant 0 : index
    %c0_0 = arith.constant 0 : index
    %0 = vector.load %arg1[%c0, %c0_0] : memref<256x512xbf16, #tpu.memory_space<vmem>>, vector<256x512xbf16>
    %c0_1 = arith.constant 0 : index
    %c0_2 = arith.constant 0 : index
    %1 = vector.load %arg2[%c0_1, %c0_2] : memref<512x128xbf16, #tpu.memory_space<vmem>>, vector<512x128xbf16>
    %cst = arith.constant dense<0.000000e+00> : vector<256x128xf32>
    %2 = tpu.matmul %0, %1, %cst {dimension_numbers = #tpu.dot_dimension_numbers<[1], [0], [0], [1], [0, 0, 1, 1], [], []>} : vector<256x512xbf16>, vector<512x128xbf16>, vector<256x128xf32> -> vector<256x128xf32>
    %c0_3 = arith.constant 0 : index
    %c0_4 = arith.constant 0 : index
    %3 = vector.load %arg3[%c0_3, %c0_4] : memref<1x128xf32, #tpu.memory_space<vmem>>, vector<1x128xf32>
    %4 = vector.broadcast %3 : vector<1x128xf32> to vector<256x128xf32>
    %5 = arith.addf %2, %4 : vector<256x128xf32>
    %cst_5 = arith.constant 0.000000e+00 : f32
    %6 = vector.broadcast %cst_5 : f32 to vector<256x128xf32>
    %7 = arith.maximumf %5, %6 : vector<256x128xf32>
    %8 = arith.truncf %7 : vector<256x128xf32> to vector<256x128xbf16>
    %c0_6 = arith.constant 0 : index
    %c0_7 = arith.constant 0 : index
    %9 = vector.load %arg4[%c0_6, %c0_7] : memref<256x128xbf16, #tpu.memory_space<vmem>>, vector<256x128xbf16>
    tpu.vector_store %arg4[%c0_6, %c0_7], %8 {strides = array<i32>} : memref<256x128xbf16, #tpu.memory_space<vmem>>, vector<256x128xbf16>,
    return
  }
  func.func @transform_0(%arg0: i32) -> (i32, i32) {
    %c0_i32 = arith.constant 0 : i32
    %c0_i32_0 = arith.constant 0 : i32
    return %arg0, %c0_i32 : i32, i32
  }
  func.func @transform_1(%arg0: i32) -> (i32, i32) {
    %c0_i32 = arith.constant 0 : i32
    %c0_i32_0 = arith.constant 0 : i32
    %c0_i32_1 = arith.constant 0 : i32
    return %c0_i32, %c0_i32_0 : i32, i32
  }
  func.func @transform_2(%arg0: i32) -> (i32, i32) {
    %c0_i32 = arith.constant 0 : i32
    %c0_i32_0 = arith.constant 0 : i32
    %c0_i32_1 = arith.constant 0 : i32
    return %c0_i32, %c0_i32_0 : i32, i32
  }
  func.func @transform_3(%arg0: i32) -> (i32, i32) {
    %c0_i32 = arith.constant 0 : i32
    %c0_i32_0 = arith.constant 0 : i32
    return %arg0, %c0_i32 : i32, i32
  }
}

module attributes {stable_mosaic.version = 11 : i64} {
  func.func @matmul_bias_relu_kernel(%arg0: i32, %arg1: memref<128x640xbf16, #tpu.memory_space<vmem>>, %arg2: memref<640x128xbf16, #tpu.memory_space<vmem>>, %arg3: memref<1x128xf32, #tpu.memory_space<vmem>>, %arg4: memref<128x128xf32, #tpu.memory_space<vmem>>) attributes {dimension_semantics = [#tpu.dimension_semantics<parallel>], iteration_bounds = array<i64: 1>, scalar_prefetch = 0 : i64, scratch_operands = 0 : i64, tpu.core_type = #tpu.core_type<tc>, window_params = [{transform_indices = @transform_0, window_bounds = array<i64: 128, 640>}, {pipeline_mode = #tpu.pipeline_mode<synchronous>, transform_indices = @transform_1, window_bounds = array<i64: 640, 128>}, {pipeline_mode = #tpu.pipeline_mode<synchronous>, transform_indices = @transform_2, window_bounds = array<i64: 1, 128>}, {transform_indices = @transform_3, window_bounds = array<i64: 128, 128>}]} {
    %c0 = arith.constant 0 : index
    %c0_0 = arith.constant 0 : index
    %0 = vector.load %arg1[%c0, %c0_0] : memref<128x640xbf16, #tpu.memory_space<vmem>>, vector<128x640xbf16>
    %c0_1 = arith.constant 0 : index
    %c0_2 = arith.constant 0 : index
    %1 = vector.load %arg2[%c0_1, %c0_2] : memref<640x128xbf16, #tpu.memory_space<vmem>>, vector<640x128xbf16>
    %cst = arith.constant dense<0.000000e+00> : vector<128x128xf32>
    %2 = tpu.matmul %0, %1, %cst {dimension_numbers = #tpu.dot_dimension_numbers<[1], [0], [0], [1], [0, 0, 1, 1], [], []>} : vector<128x640xbf16>, vector<640x128xbf16>, vector<128x128xf32> -> vector<128x128xf32>
    %c0_3 = arith.constant 0 : index
    %c0_4 = arith.constant 0 : index
    %3 = vector.load %arg3[%c0_3, %c0_4] : memref<1x128xf32, #tpu.memory_space<vmem>>, vector<1x128xf32>
    %4 = vector.broadcast %3 : vector<1x128xf32> to vector<128x128xf32>
    %5 = arith.addf %2, %4 : vector<128x128xf32>
    %cst_5 = arith.constant 0.000000e+00 : f32
    %6 = vector.broadcast %cst_5 : f32 to vector<128x128xf32>
    %7 = arith.maximumf %5, %6 : vector<128x128xf32>
    %c0_6 = arith.constant 0 : index
    %c0_7 = arith.constant 0 : index
    %8 = vector.load %arg4[%c0_6, %c0_7] : memref<128x128xf32, #tpu.memory_space<vmem>>, vector<128x128xf32>
    tpu.vector_store %arg4[%c0_6, %c0_7], %7 {strides = array<i32>} : memref<128x128xf32, #tpu.memory_space<vmem>>, vector<128x128xf32>,
    return
  }
  func.func @transform_0(%arg0: i32) -> (i32, i32) {
    %c0_i32 = arith.constant 0 : i32
    %c0_i32_0 = arith.constant 0 : i32
    return %arg0, %c0_i32 : i32, i32
  }
  func.func @transform_1(%arg0: i32) -> (i32, i32) {
    %c0_i32 = arith.constant 0 : i32
    %c0_i32_0 = arith.constant 0 : i32
    %c0_i32_1 = arith.constant 0 : i32
    return %c0_i32, %c0_i32_0 : i32, i32
  }
  func.func @transform_2(%arg0: i32) -> (i32, i32) {
    %c0_i32 = arith.constant 0 : i32
    %c0_i32_0 = arith.constant 0 : i32
    %c0_i32_1 = arith.constant 0 : i32
    return %c0_i32, %c0_i32_0 : i32, i32
  }
  func.func @transform_3(%arg0: i32) -> (i32, i32) {
    %c0_i32 = arith.constant 0 : i32
    %c0_i32_0 = arith.constant 0 : i32
    return %arg0, %c0_i32 : i32, i32
  }
}

</mosaic_0001>

<llo_original>
// kernel: deepmind_forward.3
$region0: #{deepmind_forward.3}
  #allocation0 [shape = 'u32[]', space=smem, size = 0x4, offset = 0x4, fixed_abs, tag = 'smem constant byte address 0x4 - core index']
  #allocation1 [shape = 'u32[72,128]{1,0:T(1,128)}', space=vmem, size = 0x9000, scoped, tag = 'internal scratch']
  %s0 = inlined_call_operand.vmem [shape: bf16[896,256], index: 0, kind: input, shape index: {}]
  %s1 = inlined_call_operand.vmem [shape: bf16[256,128], index: 1, kind: input, shape index: {}]
  %s2 = inlined_call_operand.vmem [shape: f32[1,128], index: 2, kind: input, shape index: {}]
  %s3 = inlined_call_operand.vmem [shape: bf16[896,128], index: 3, kind: output, shape index: {}]
  %s4 = sld [smem:[#allocation0]]
  $region22: #{deepmind_forward.3} parent=0
    _
  %s6 = ssub.s32 1, %s4
  %s7 = scalar_select 0, %s6, %s4
  // Predicated region
  $region2: #{deepmind_forward.3} parent=0 // pred_check
    _
  $region3: #{deepmind_forward.3} parent=0 // pred_check_branch
    %9 = sbr.rel (0) target = $region5
  $region4: #{deepmind_forward.3} parent=0 // pred_region
    _
  $region5: #{deepmind_forward.3} parent=0 // pred_fallthru
    _
  // Predicated region
  $region6: #{deepmind_forward.3} parent=0 // pred_check
    _
  $region7: #{deepmind_forward.3} parent=0 // pred_check_branch
    %11 = sbr.rel (0) target = $region9
  $region8: #{deepmind_forward.3} parent=0 // pred_region
    _
  $region9: #{deepmind_forward.3} parent=0 // pred_fallthru
    _
  // Predicated region
  $region10: #{deepmind_forward.3} parent=0 // pred_check
    _
  $region11: #{deepmind_forward.3} parent=0 // pred_check_branch
    %13 = sbr.rel (0) target = $region13
  $region12: #{deepmind_forward.3} parent=0 // pred_region
    _
  $region13: #{deepmind_forward.3} parent=0 // pred_fallthru
    _
  %v14 = vld [vmem:[%s0] sm:$0xff]
  %v15 = vld [vmem:[%s0 + $0x8] sm:$0xff]
  %v16 = vld [vmem:[%s0 + $0x10] sm:$0xff]
  %v17 = vld [vmem:[%s0 + $0x18] sm:$0xff]
  %v18 = vld [vmem:[%s0 + $0x20] sm:$0xff]
  %v19 = vld [vmem:[%s0 + $0x28] sm:$0xff]
  %v20 = vld [vmem:[%s0 + $0x30] sm:$0xff]
  %v21 = vld [vmem:[%s0 + $0x38] sm:$0xff]
  %v22 = vld [vmem:[%s0 + $0x40] sm:$0xff]
  %v23 = vld [vmem:[%s0 + $0x48] sm:$0xff]
  %v24 = vld [vmem:[%s0 + $0x50] sm:$0xff]
  %v25 = vld [vmem:[%s0 + $0x58] sm:$0xff]
  %v26 = vld [vmem:[%s0 + $0x60] sm:$0xff]
  %v27 = vld [vmem:[%s0 + $0x68] sm:$0xff]
  %v28 = vld [vmem:[%s0 + $0x70] sm:$0xff]
  %v29 = vld [vmem:[%s0 + $0x78] sm:$0xff]
  %v30 = vld [vmem:[%s0 + $0x80] sm:$0xff]
  %v31 = vld [vmem:[%s0 + $0x88] sm:$0xff]
  %v32 = vld [vmem:[%s0 + $0x90] sm:$0xff]
  %v33 = vld [vmem:[%s0 + $0x98] sm:$0xff]
  %v34 = vld [vmem:[%s0 + $0xa0] sm:$0xff]
  %v35 = vld [vmem:[%s0 + $0xa8] sm:$0xff]
  %v36 = vld [vmem:[%s0 + $0xb0] sm:$0xff]
  %v37 = vld [vmem:[%s0 + $0xb8] sm:$0xff]
  %v38 = vld [vmem:[%s0 + $0xc0] sm:$0xff]
  %v39 = vld [vmem:[%s0 + $0xc8] sm:$0xff]
  %v40 = vld [vmem:[%s0 + $0xd0] sm:$0xff]
  %v41 = vld [vmem:[%s0 + $0xd8] sm:$0xff]
  %v42 = vld [vmem:[%s0 + $0xe0] sm:$0xff]
  %v43 = vld [vmem:[%s0 + $0xe8] sm:$0xff]
  %v44 = vld [vmem:[%s0 + $0xf0] sm:$0xff]
  %v45 = vld [vmem:[%s0 + $0xf8] sm:$0xff]
  %v46 = vld [vmem:[%s0 + $0x100] sm:$0xff]
  %v47 = vld [vmem:[%s0 + $0x108] sm:$0xff]
  %v48 = vld [vmem:[%s0 + $0x110] sm:$0xff]
  %v49 = vld [vmem:[%s0 + $0x118] sm:$0xff]
  %v50 = vld [vmem:[%s0 + $0x120] sm:$0xff]
  %v51 = vld [vmem:[%s0 + $0x128] sm:$0xff]
  %v52 = vld [vmem:[%s0 + $0x130] sm:$0xff]
  %v53 = vld [vmem:[%s0 + $0x138] sm:$0xff]
  %v54 = vld [vmem:[%s0 + $0x140] sm:$0xff]
  %v55 = vld [vmem:[%s0 + $0x148] sm:$0xff]
  %v56 = vld [vmem:[%s0 + $0x150] sm:$0xff]
  %v57 = vld [vmem:[%s0 + $0x158] sm:$0xff]
  %v58 = vld [vmem:[%s0 + $0x160] sm:$0xff]
  %v59 = vld [vmem:[%s0 + $0x168] sm:$0xff]
  %v60 = vld [vmem:[%s0 + $0x170] sm:$0xff]
  %v61 = vld [vmem:[%s0 + $0x178] sm:$0xff]
  %v62 = vld [vmem:[%s0 + $0x180] sm:$0xff]
  %v63 = vld [vmem:[%s0 + $0x188] sm:$0xff]
  %v64 = vld [vmem:[%s0 + $0x190] sm:$0xff]
  %v65 = vld [vmem:[%s0 + $0x198] sm:$0xff]
  %v66 = vld [vmem:[%s0 + $0x1a0] sm:$0xff]
  %v67 = vld [vmem:[%s0 + $0x1a8] sm:$0xff]
  %v68 = vld [vmem:[%s0 + $0x1b0] sm:$0xff]
  %v69 = vld [vmem:[%s0 + $0x1b8] sm:$0xff]
  %v70 = vld [vmem:[%s0 + $0x1c0] sm:$0xff]
  %v71 = vld [vmem:[%s0 + $0x1c8] sm:$0xff]
  %v72 = vld [vmem:[%s0 + $0x1d0] sm:$0xff]
  %v73 = vld [vmem:[%s0 + $0x1d8] sm:$0xff]
  %v74 = vld [vmem:[%s0 + $0x1e0] sm:$0xff]
  %v75 = vld [vmem:[%s0 + $0x1e8] sm:$0xff]
  %v76 = vld [vmem:[%s0 + $0x1f0] sm:$0xff]
  %v77 = vld [vmem:[%s0 + $0x1f8] sm:$0xff]
  %v78 = vld [vmem:[%s0 + $0x200] sm:$0xff]
  %v79 = vld [vmem:[%s0 + $0x208] sm:$0xff]
  %v80 = vld [vmem:[%s0 + $0x210] sm:$0xff]
  %v81 = vld [vmem:[%s0 + $0x218] sm:$0xff]
  %v82 = vld [vmem:[%s0 + $0x220] sm:$0xff]
  %v83 = vld [vmem:[%s0 + $0x228] sm:$0xff]
  %v84 = vld [vmem:[%s0 + $0x230] sm:$0xff]
  %v85 = vld [vmem:[%s0 + $0x238] sm:$0xff]
  %v86 = vld [vmem:[%s0 + $0x240] sm:$0xff]
  %v87 = vld [vmem:[%s0 + $0x248] sm:$0xff]
  %v88 = vld [vmem:[%s0 + $0x250] sm:$0xff]
  %v89 = vld [vmem:[%s0 + $0x258] sm:$0xff]
  %v90 = vld [vmem:[%s0 + $0x260] sm:$0xff]
  %v91 = vld [vmem:[%s0 + $0x268] sm:$0xff]
  %v92 = vld [vmem:[%s0 + $0x270] sm:$0xff]
  %v93 = vld [vmem:[%s0 + $0x278] sm:$0xff]
  %v94 = vld [vmem:[%s0 + $0x280] sm:$0xff]
  %v95 = vld [vmem:[%s0 + $0x288] sm:$0xff]
  %v96 = vld [vmem:[%s0 + $0x290] sm:$0xff]
  %v97 = vld [vmem:[%s0 + $0x298] sm:$0xff]
  %v98 = vld [vmem:[%s0 + $0x2a0] sm:$0xff]
  %v99 = vld [vmem:[%s0 + $0x2a8] sm:$0xff]
  %v100 = vld [vmem:[%s0 + $0x2b0] sm:$0xff]
  %v101 = vld [vmem:[%s0 + $0x2b8] sm:$0xff]
  %v102 = vld [vmem:[%s0 + $0x2c0] sm:$0xff]
  %v103 = vld [vmem:[%s0 + $0x2c8] sm:$0xff]
  %v104 = vld [vmem:[%s0 + $0x2d0] sm:$0xff]
  %v105 = vld [vmem:[%s0 + $0x2d8] sm:$0xff]
  %v106 = vld [vmem:[%s0 + $0x2e0] sm:$0xff]
  %v107 = vld [vmem:[%s0 + $0x2e8] sm:$0xff]
  %v108 = vld [vmem:[%s0 + $0x2f0] sm:$0xff]
  %v109 = vld [vmem:[%s0 + $0x2f8] sm:$0xff]
  %v110 = vld [vmem:[%s0 + $0x300] sm:$0xff]
  %v111 = vld [vmem:[%s0 + $0x308] sm:$0xff]
  %v112 = vld [vmem:[%s0 + $0x310] sm:$0xff]
  %v113 = vld [vmem:[%s0 + $0x318] sm:$0xff]
  %v114 = vld [vmem:[%s0 + $0x320] sm:$0xff]
  %v115 = vld [vmem:[%s0 + $0x328] sm:$0xff]
  %v116 = vld [vmem:[%s0 + $0x330] sm:$0xff]
  %v117 = vld [vmem:[%s0 + $0x338] sm:$0xff]
  %v118 = vld [vmem:[%s0 + $0x340] sm:$0xff]
  %v119 = vld [vmem:[%s0 + $0x348] sm:$0xff]
  %v120 = vld [vmem:[%s0 + $0x350] sm:$0xff]
  %v121 = vld [vmem:[%s0 + $0x358] sm:$0xff]
  %v122 = vld [vmem:[%s0 + $0x360] sm:$0xff]
  %v123 = vld [vmem:[%s0 + $0x368] sm:$0xff]
  %v124 = vld [vmem:[%s0 + $0x370] sm:$0xff]
  %v125 = vld [vmem:[%s0 + $0x378] sm:$0xff]
  %v126 = vld [vmem:[%s1] sm:$0xf]
  %v127 = vld [vmem:[%s1 + $0x4] sm:$0xf]
  %v128 = vld [vmem:[%s1 + $0x8] sm:$0xf]
  %v129 = vld [vmem:[%s1 + $0xc] sm:$0xf]
  %v130 = vld [vmem:[%s1 + $0x10] sm:$0xf]
  %v131 = vld [vmem:[%s1 + $0x14] sm:$0xf]
  %v132 = vld [vmem:[%s1 + $0x18] sm:$0xf]
  %v133 = vld [vmem:[%s1 + $0x1c] sm:$0xf]
  %v134 = vld [vmem:[%s1 + $0x20] sm:$0xf]
  %v135 = vld [vmem:[%s1 + $0x24] sm:$0xf]
  %v136 = vld [vmem:[%s1 + $0x28] sm:$0xf]
  %v137 = vld [vmem:[%s1 + $0x2c] sm:$0xf]
  %v138 = vld [vmem:[%s1 + $0x30] sm:$0xf]
  %v139 = vld [vmem:[%s1 + $0x34] sm:$0xf]
  %v140 = vld [vmem:[%s1 + $0x38] sm:$0xf]
  %v141 = vld [vmem:[%s1 + $0x3c] sm:$0xf]
  %v142 = vld [vmem:[%s1 + $0x40] sm:$0xf]
  %v143 = vld [vmem:[%s1 + $0x44] sm:$0xf]
  %v144 = vld [vmem:[%s1 + $0x48] sm:$0xf]
  %v145 = vld [vmem:[%s1 + $0x4c] sm:$0xf]
  %v146 = vld [vmem:[%s1 + $0x50] sm:$0xf]
  %v147 = vld [vmem:[%s1 + $0x54] sm:$0xf]
  %v148 = vld [vmem:[%s1 + $0x58] sm:$0xf]
  %v149 = vld [vmem:[%s1 + $0x5c] sm:$0xf]
  %v150 = vld [vmem:[%s1 + $0x60] sm:$0xf]
  %v151 = vld [vmem:[%s1 + $0x64] sm:$0xf]
  %v152 = vld [vmem:[%s1 + $0x68] sm:$0xf]
  %v153 = vld [vmem:[%s1 + $0x6c] sm:$0xf]
  %v154 = vld [vmem:[%s1 + $0x70] sm:$0xf]
  %v155 = vld [vmem:[%s1 + $0x74] sm:$0xf]
  %v156 = vld [vmem:[%s1 + $0x78] sm:$0xf]
  %v157 = vld [vmem:[%s1 + $0x7c] sm:$0xf]
  %v158 = vld [vmem:[%s2] sm:$0x1]
  %v160 = vperm.slane %v158, 0
  %v274 = vunpack.c.l.b16 %v14
  %v275 = vunpack.c.h.b16 %v14
  %v276 = vunpack.c.l.b16 %v15
  %v277 = vunpack.c.h.b16 %v15
  %v278 = vunpack.c.l.b16 %v16
  %v279 = vunpack.c.h.b16 %v16
  %v280 = vunpack.c.l.b16 %v17
  %v281 = vunpack.c.h.b16 %v17
  %v282 = vunpack.c.l.b16 %v18
  %v283 = vunpack.c.h.b16 %v18
  %v284 = vunpack.c.l.b16 %v19
  %v285 = vunpack.c.h.b16 %v19
  %v286 = vunpack.c.l.b16 %v20
  %v287 = vunpack.c.h.b16 %v20
  %v288 = vunpack.c.l.b16 %v21
  %v289 = vunpack.c.h.b16 %v21
  %v290 = vunpack.c.l.b16 %v22
  %v291 = vunpack.c.h.b16 %v22
  %v292 = vunpack.c.l.b16 %v23
  %v293 = vunpack.c.h.b16 %v23
  %v294 = vunpack.c.l.b16 %v24
  %v295 = vunpack.c.h.b16 %v24
  %v296 = vunpack.c.l.b16 %v25
  %v297 = vunpack.c.h.b16 %v25
  %v298 = vunpack.c.l.b16 %v26
  %v299 = vunpack.c.h.b16 %v26
  %v300 = vunpack.c.l.b16 %v27
  %v301 = vunpack.c.h.b16 %v27
  %v302 = vunpack.c.l.b16 %v28
  %v303 = vunpack.c.h.b16 %v28
  %v304 = vunpack.c.l.b16 %v29
  %v305 = vunpack.c.h.b16 %v29
  %v306 = vunpack.c.l.b16 %v30
  %v307 = vunpack.c.h.b16 %v30
  %v308 = vunpack.c.l.b16 %v31
  %v309 = vunpack.c.h.b16 %v31
  %v310 = vunpack.c.l.b16 %v32
  %v311 = vunpack.c.h.b16 %v32
  %v312 = vunpack.c.l.b16 %v33
  %v313 = vunpack.c.h.b16 %v33
  %v314 = vunpack.c.l.b16 %v34
  %v315 = vunpack.c.h.b16 %v34
  %v316 = vunpack.c.l.b16 %v35
  %v317 = vunpack.c.h.b16 %v35
  %v318 = vunpack.c.l.b16 %v36
  %v319 = vunpack.c.h.b16 %v36
  %v320 = vunpack.c.l.b16 %v37
  %v321 = vunpack.c.h.b16 %v37
  %v322 = vunpack.c.l.b16 %v38
  %v323 = vunpack.c.h.b16 %v38
  %v324 = vunpack.c.l.b16 %v39
  %v325 = vunpack.c.h.b16 %v39
  %v326 = vunpack.c.l.b16 %v40
  %v327 = vunpack.c.h.b16 %v40
  %v328 = vunpack.c.l.b16 %v41
  %v329 = vunpack.c.h.b16 %v41
  %v330 = vunpack.c.l.b16 %v42
  %v331 = vunpack.c.h.b16 %v42
  %v332 = vunpack.c.l.b16 %v43
  %v333 = vunpack.c.h.b16 %v43
  %v334 = vunpack.c.l.b16 %v44
  %v335 = vunpack.c.h.b16 %v44
  %v336 = vunpack.c.l.b16 %v45
  %v337 = vunpack.c.h.b16 %v45
  %v338 = vunpack.c.l.b16 %v46
  %v339 = vunpack.c.h.b16 %v46
  %v340 = vunpack.c.l.b16 %v47
  %v341 = vunpack.c.h.b16 %v47
  %v342 = vunpack.c.l.b16 %v48
  %v343 = vunpack.c.h.b16 %v48
  %v344 = vunpack.c.l.b16 %v49
  %v345 = vunpack.c.h.b16 %v49
  %v346 = vunpack.c.l.b16 %v50
  %v347 = vunpack.c.h.b16 %v50
  %v348 = vunpack.c.l.b16 %v51
  %v349 = vunpack.c.h.b16 %v51
  %v350 = vunpack.c.l.b16 %v52
  %v351 = vunpack.c.h.b16 %v52
  %v352 = vunpack.c.l.b16 %v53
  %v353 = vunpack.c.h.b16 %v53
  %v354 = vunpack.c.l.b16 %v54
  %v355 = vunpack.c.h.b16 %v54
  %v356 = vunpack.c.l.b16 %v55
  %v357 = vunpack.c.h.b16 %v55
  %v358 = vunpack.c.l.b16 %v56
  %v359 = vunpack.c.h.b16 %v56
  %v360 = vunpack.c.l.b16 %v57
  %v361 = vunpack.c.h.b16 %v57
  %v362 = vunpack.c.l.b16 %v58
  %v363 = vunpack.c.h.b16 %v58
  %v364 = vunpack.c.l.b16 %v59
  %v365 = vunpack.c.h.b16 %v59
  %v366 = vunpack.c.l.b16 %v60
  %v367 = vunpack.c.h.b16 %v60
  %v368 = vunpack.c.l.b16 %v61
  %v369 = vunpack.c.h.b16 %v61
  %v370 = vunpack.c.l.b16 %v62
  %v371 = vunpack.c.h.b16 %v62
  %v372 = vunpack.c.l.b16 %v63
  %v373 = vunpack.c.h.b16 %v63
  %v374 = vunpack.c.l.b16 %v64
  %v375 = vunpack.c.h.b16 %v64
  %v376 = vunpack.c.l.b16 %v65
  %v377 = vunpack.c.h.b16 %v65
  %v378 = vunpack.c.l.b16 %v66
  %v379 = vunpack.c.h.b16 %v66
  %v380 = vunpack.c.l.b16 %v67
  %v381 = vunpack.c.h.b16 %v67
  %v382 = vunpack.c.l.b16 %v68
  %v383 = vunpack.c.h.b16 %v68
  %v384 = vunpack.c.l.b16 %v69
  %v385 = vunpack.c.h.b16 %v69
  %v386 = vunpack.c.l.b16 %v70
  %v387 = vunpack.c.h.b16 %v70
  %v388 = vunpack.c.l.b16 %v71
  %v389 = vunpack.c.h.b16 %v71
  %v390 = vunpack.c.l.b16 %v72
  %v391 = vunpack.c.h.b16 %v72
  %v392 = vunpack.c.l.b16 %v73
  %v393 = vunpack.c.h.b16 %v73
  %v394 = vunpack.c.l.b16 %v74
  %v395 = vunpack.c.h.b16 %v74
  %v396 = vunpack.c.l.b16 %v75
  %v397 = vunpack.c.h.b16 %v75
  %v398 = vunpack.c.l.b16 %v76
  %v399 = vunpack.c.h.b16 %v76
  %v400 = vunpack.c.l.b16 %v77
  %v401 = vunpack.c.h.b16 %v77
  %v402 = vunpack.c.l.b16 %v78
  %v403 = vunpack.c.h.b16 %v78
  %v404 = vunpack.c.l.b16 %v79
  %v405 = vunpack.c.h.b16 %v79
  %v406 = vunpack.c.l.b16 %v80
  %v407 = vunpack.c.h.b16 %v80
  %v408 = vunpack.c.l.b16 %v81
  %v409 = vunpack.c.h.b16 %v81
  %v410 = vunpack.c.l.b16 %v82
  %v411 = vunpack.c.h.b16 %v82
  %v412 = vunpack.c.l.b16 %v83
  %v413 = vunpack.c.h.b16 %v83
  %v414 = vunpack.c.l.b16 %v84
  %v415 = vunpack.c.h.b16 %v84
  %v416 = vunpack.c.l.b16 %v85
  %v417 = vunpack.c.h.b16 %v85
  %v418 = vunpack.c.l.b16 %v86
  %v419 = vunpack.c.h.b16 %v86
  %v420 = vunpack.c.l.b16 %v87
  %v421 = vunpack.c.h.b16 %v87
  %v422 = vunpack.c.l.b16 %v88
  %v423 = vunpack.c.h.b16 %v88
  %v424 = vunpack.c.l.b16 %v89
  %v425 = vunpack.c.h.b16 %v89
  %v426 = vunpack.c.l.b16 %v90
  %v427 = vunpack.c.h.b16 %v90
  %v428 = vunpack.c.l.b16 %v91
  %v429 = vunpack.c.h.b16 %v91
  %v430 = vunpack.c.l.b16 %v92
  %v431 = vunpack.c.h.b16 %v92
  %v432 = vunpack.c.l.b16 %v93
  %v433 = vunpack.c.h.b16 %v93
  %v434 = vunpack.c.l.b16 %v94
  %v435 = vunpack.c.h.b16 %v94
  %v436 = vunpack.c.l.b16 %v95
  %v437 = vunpack.c.h.b16 %v95
  %v438 = vunpack.c.l.b16 %v96
  %v439 = vunpack.c.h.b16 %v96
  %v440 = vunpack.c.l.b16 %v97
  %v441 = vunpack.c.h.b16 %v97
  %v442 = vunpack.c.l.b16 %v98
  %v443 = vunpack.c.h.b16 %v98
  %v444 = vunpack.c.l.b16 %v99
  %v445 = vunpack.c.h.b16 %v99
  %v446 = vunpack.c.l.b16 %v100
  %v447 = vunpack.c.h.b16 %v100
  %v448 = vunpack.c.l.b16 %v101
  %v449 = vunpack.c.h.b16 %v101
  %v450 = vunpack.c.l.b16 %v102
  %v451 = vunpack.c.h.b16 %v102
  %v452 = vunpack.c.l.b16 %v103
  %v453 = vunpack.c.h.b16 %v103
  %v454 = vunpack.c.l.b16 %v104
  %v455 = vunpack.c.h.b16 %v104
  %v456 = vunpack.c.l.b16 %v105
  %v457 = vunpack.c.h.b16 %v105
  %v458 = vunpack.c.l.b16 %v106
  %v459 = vunpack.c.h.b16 %v106
  %v460 = vunpack.c.l.b16 %v107
  %v461 = vunpack.c.h.b16 %v107
  %v462 = vunpack.c.l.b16 %v108
  %v463 = vunpack.c.h.b16 %v108
  %v464 = vunpack.c.l.b16 %v109
  %v465 = vunpack.c.h.b16 %v109
  %v466 = vunpack.c.l.b16 %v110
  %v467 = vunpack.c.h.b16 %v110
  %v468 = vunpack.c.l.b16 %v111
  %v469 = vunpack.c.h.b16 %v111
  %v470 = vunpack.c.l.b16 %v112
  %v471 = vunpack.c.h.b16 %v112
  %v472 = vunpack.c.l.b16 %v113
  %v473 = vunpack.c.h.b16 %v113
  %v474 = vunpack.c.l.b16 %v114
  %v475 = vunpack.c.h.b16 %v114
  %v476 = vunpack.c.l.b16 %v115
  %v477 = vunpack.c.h.b16 %v115
  %v478 = vunpack.c.l.b16 %v116
  %v479 = vunpack.c.h.b16 %v116
  %v480 = vunpack.c.l.b16 %v117
  %v481 = vunpack.c.h.b16 %v117
  %v482 = vunpack.c.l.b16 %v118
  %v483 = vunpack.c.h.b16 %v118
  %v484 = vunpack.c.l.b16 %v119
  %v485 = vunpack.c.h.b16 %v119
  %v486 = vunpack.c.l.b16 %v120
  %v487 = vunpack.c.h.b16 %v120
  %v488 = vunpack.c.l.b16 %v121
  %v489 = vunpack.c.h.b16 %v121
  %v490 = vunpack.c.l.b16 %v122
  %v491 = vunpack.c.h.b16 %v122
  %v492 = vunpack.c.l.b16 %v123
  %v493 = vunpack.c.h.b16 %v123
  %v494 = vunpack.c.l.b16 %v124
  %v495 = vunpack.c.h.b16 %v124
  %v496 = vunpack.c.l.b16 %v125
  %v497 = vunpack.c.h.b16 %v125
  %v498 = vpack.c.b16 %v276, %v274
  %v499 = vpack.c.b16 %v277, %v275
  %v500 = vpack.c.b16 %v280, %v278
  %v501 = vpack.c.b16 %v281, %v279
  %v502 = vpack.c.b16 %v284, %v282
  %v503 = vpack.c.b16 %v285, %v283
  %v504 = vpack.c.b16 %v288, %v286
  %v505 = vpack.c.b16 %v289, %v287
  %v506 = vpack.c.b16 %v292, %v290
  %v507 = vpack.c.b16 %v293, %v291
  %v508 = vpack.c.b16 %v296, %v294
  %v509 = vpack.c.b16 %v297, %v295
  %v510 = vpack.c.b16 %v300, %v298
  %v511 = vpack.c.b16 %v301, %v299
  %v512 = vpack.c.b16 %v304, %v302
  %v513 = vpack.c.b16 %v305, %v303
  %v514 = vpack.c.b16 %v308, %v306
  %v515 = vpack.c.b16 %v309, %v307
  %v516 = vpack.c.b16 %v312, %v310
  %v517 = vpack.c.b16 %v313, %v311
  %v518 = vpack.c.b16 %v316, %v314
  %v519 = vpack.c.b16 %v317, %v315
  %v520 = vpack.c.b16 %v320, %v318
  %v521 = vpack.c.b16 %v321, %v319
  %v522 = vpack.c.b16 %v324, %v322
  %v523 = vpack.c.b16 %v325, %v323
  %v524 = vpack.c.b16 %v328, %v326
  %v525 = vpack.c.b16 %v329, %v327
  %v526 = vpack.c.b16 %v332, %v330
  %v527 = vpack.c.b16 %v333, %v331
  %v528 = vpack.c.b16 %v336, %v334
  %v529 = vpack.c.b16 %v337, %v335
  %v530 = vpack.c.b16 %v340, %v338
  %v531 = vpack.c.b16 %v341, %v339
  %v532 = vpack.c.b16 %v344, %v342
  %v533 = vpack.c.b16 %v345, %v343
  %v534 = vpack.c.b16 %v348, %v346
  %v535 = vpack.c.b16 %v349, %v347
  %v536 = vpack.c.b16 %v352, %v350
  %v537 = vpack.c.b16 %v353, %v351
  %v538 = vpack.c.b16 %v356, %v354
  %v539 = vpack.c.b16 %v357, %v355
  %v540 = vpack.c.b16 %v360, %v358
  %v541 = vpack.c.b16 %v361, %v359
  %v542 = vpack.c.b16 %v364, %v362
  %v543 = vpack.c.b16 %v365, %v363
  %v544 = vpack.c.b16 %v368, %v366
  %v545 = vpack.c.b16 %v369, %v367
  %v546 = vpack.c.b16 %v372, %v370
  %v547 = vpack.c.b16 %v373, %v371
  %v548 = vpack.c.b16 %v376, %v374
  %v549 = vpack.c.b16 %v377, %v375
  %v550 = vpack.c.b16 %v380, %v378
  %v551 = vpack.c.b16 %v381, %v379
  %v552 = vpack.c.b16 %v384, %v382
  %v553 = vpack.c.b16 %v385, %v383
  %v554 = vpack.c.b16 %v388, %v386
  %v555 = vpack.c.b16 %v389, %v387
  %v556 = vpack.c.b16 %v392, %v390
  %v557 = vpack.c.b16 %v393, %v391
  %v558 = vpack.c.b16 %v396, %v394
  %v559 = vpack.c.b16 %v397, %v395
  %v560 = vpack.c.b16 %v400, %v398
  %v561 = vpack.c.b16 %v401, %v399
  %v562 = vpack.c.b16 %v404, %v402
  %v563 = vpack.c.b16 %v405, %v403
  %v564 = vpack.c.b16 %v408, %v406
  %v565 = vpack.c.b16 %v409, %v407
  %v566 = vpack.c.b16 %v412, %v410
  %v567 = vpack.c.b16 %v413, %v411
  %v568 = vpack.c.b16 %v416, %v414
  %v569 = vpack.c.b16 %v417, %v415
  %v570 = vpack.c.b16 %v420, %v418
  %v571 = vpack.c.b16 %v421, %v419
  %v572 = vpack.c.b16 %v424, %v422
  %v573 = vpack.c.b16 %v425, %v423
  %v574 = vpack.c.b16 %v428, %v426
  %v575 = vpack.c.b16 %v429, %v427
  %v576 = vpack.c.b16 %v432, %v430
  %v577 = vpack.c.b16 %v433, %v431
  %v578 = vpack.c.b16 %v436, %v434
  %v579 = vpack.c.b16 %v437, %v435
  %v580 = vpack.c.b16 %v440, %v438
  %v581 = vpack.c.b16 %v441, %v439
  %v582 = vpack.c.b16 %v444, %v442
  %v583 = vpack.c.b16 %v445, %v443
  %v584 = vpack.c.b16 %v448, %v446
  %v585 = vpack.c.b16 %v449, %v447
  %v586 = vpack.c.b16 %v452, %v450
  %v587 = vpack.c.b16 %v453, %v451
  %v588 = vpack.c.b16 %v456, %v454
  %v589 = vpack.c.b16 %v457, %v455
  %v590 = vpack.c.b16 %v460, %v458
  %v591 = vpack.c.b16 %v461, %v459
  %v592 = vpack.c.b16 %v464, %v462
  %v593 = vpack.c.b16 %v465, %v463
  %v594 = vpack.c.b16 %v468, %v466
  %v595 = vpack.c.b16 %v469, %v467
  %v596 = vpack.c.b16 %v472, %v470
  %v597 = vpack.c.b16 %v473, %v471
  %v598 = vpack.c.b16 %v476, %v474
  %v599 = vpack.c.b16 %v477, %v475
  %v600 = vpack.c.b16 %v480, %v478
  %v601 = vpack.c.b16 %v481, %v479
  %v602 = vpack.c.b16 %v484, %v482
  %v603 = vpack.c.b16 %v485, %v483
  %v604 = vpack.c.b16 %v488, %v486
  %v605 = vpack.c.b16 %v489, %v487
  %v606 = vpack.c.b16 %v492, %v490
  %v607 = vpack.c.b16 %v493, %v491
  %v608 = vpack.c.b16 %v496, %v494
  %v609 = vpack.c.b16 %v497, %v495
  %v754 = vunpack.c.l.b16 %v126
  %v755 = vunpack.c.l.b16 %v127
  %v756 = vunpack.c.l.b16 %v128
  %v757 = vunpack.c.l.b16 %v129
  %v758 = vunpack.c.l.b16 %v130
  %v759 = vunpack.c.l.b16 %v131
  %v760 = vunpack.c.l.b16 %v132
  %v761 = vunpack.c.l.b16 %v133
  %v762 = vunpack.c.l.b16 %v134
  %v763 = vunpack.c.l.b16 %v135
  %v764 = vunpack.c.l.b16 %v136
  %v765 = vunpack.c.l.b16 %v137
  %v766 = vunpack.c.l.b16 %v138
  %v767 = vunpack.c.l.b16 %v139
  %v768 = vunpack.c.l.b16 %v140
  %v769 = vunpack.c.l.b16 %v141
  %v770 = vunpack.c.l.b16 %v142
  %v771 = vunpack.c.l.b16 %v143
  %v772 = vunpack.c.l.b16 %v144
  %v773 = vunpack.c.l.b16 %v145
  %v774 = vunpack.c.l.b16 %v146
  %v775 = vunpack.c.l.b16 %v147
  %v776 = vunpack.c.l.b16 %v148
  %v777 = vunpack.c.l.b16 %v149
  %v778 = vunpack.c.l.b16 %v150
  %v779 = vunpack.c.l.b16 %v151
  %v780 = vunpack.c.l.b16 %v152
  %v781 = vunpack.c.l.b16 %v153
  %v782 = vunpack.c.l.b16 %v154
  %v783 = vunpack.c.l.b16 %v155
  %v784 = vunpack.c.l.b16 %v156
  %v785 = vunpack.c.l.b16 %v157
  %v786 = vpack.c.b16 %v755, %v754
  %v787 = vpack.c.b16 %v757, %v756
  %v788 = vpack.c.b16 %v759, %v758
  %v789 = vpack.c.b16 %v761, %v760
  %v790 = vpack.c.b16 %v763, %v762
  %v791 = vpack.c.b16 %v765, %v764
  %v792 = vpack.c.b16 %v767, %v766
  %v793 = vpack.c.b16 %v769, %v768
  %v794 = vpack.c.b16 %v771, %v770
  %v795 = vpack.c.b16 %v773, %v772
  %v796 = vpack.c.b16 %v775, %v774
  %v797 = vpack.c.b16 %v777, %v776
  %v798 = vpack.c.b16 %v779, %v778
  %v799 = vpack.c.b16 %v781, %v780
  %v800 = vpack.c.b16 %v783, %v782
  %v801 = vpack.c.b16 %v785, %v784
  %818 = vmatpush.bf16.msra.mxu0 %v793
  %819 = vmatpush.bf16.msra.mxu0 %v792
  %820 = vmatpush.bf16.msra.mxu0 %v791
  %821 = vmatpush.bf16.msra.mxu0 %v790
  %822 = vmatpush.bf16.msra.mxu0 %v789
  %823 = vmatpush.bf16.msra.mxu0 %v788
  %824 = vmatpush.bf16.msra.mxu0 %v787
  %825 = vmatpush.bf16.msra.mxu0 %v786
  %826 = vmatmul.bf16.gmra.mxu0 %v498
  %v827 = vpop.f32.mrf.mxu0
  %v828 = vadd.f32 %v160, %v827
  %v829 = vpop.f32.mrf.mxu0
  %v830 = vadd.f32 %v160, %v829
  %831 = vmatmul.bf16.gmra.mxu0 %v500
  %v832 = vpop.f32.mrf.mxu0
  %v833 = vadd.f32 %v160, %v832
  %v834 = vpop.f32.mrf.mxu0
  %v835 = vadd.f32 %v160, %v834
  %836 = vmatmul.bf16.gmra.mxu0 %v502
  %v837 = vpop.f32.mrf.mxu0
  %v838 = vadd.f32 %v160, %v837
  %v839 = vpop.f32.mrf.mxu0
  %v840 = vadd.f32 %v160, %v839
  %841 = vmatmul.bf16.gmra.mxu0 %v504
  %v842 = vpop.f32.mrf.mxu0
  %v843 = vadd.f32 %v160, %v842
  %v844 = vpop.f32.mrf.mxu0
  %v845 = vadd.f32 %v160, %v844
  %846 = vmatmul.bf16.gmra.mxu0 %v506
  %v847 = vpop.f32.mrf.mxu0
  %v848 = vadd.f32 %v160, %v847
  %v849 = vpop.f32.mrf.mxu0
  %v850 = vadd.f32 %v160, %v849
  %851 = vmatmul.bf16.gmra.mxu0 %v508
  %v852 = vpop.f32.mrf.mxu0
  %v853 = vadd.f32 %v160, %v852
  %v854 = vpop.f32.mrf.mxu0
  %v855 = vadd.f32 %v160, %v854
  %856 = vmatmul.bf16.gmra.mxu0 %v510
  %v857 = vpop.f32.mrf.mxu0
  %v858 = vadd.f32 %v160, %v857
  %v859 = vpop.f32.mrf.mxu0
  %v860 = vadd.f32 %v160, %v859
  %861 = vmatmul.bf16.gmra.mxu0 %v512
  %v862 = vpop.f32.mrf.mxu0
  %v863 = vadd.f32 %v160, %v862
  %v864 = vpop.f32.mrf.mxu0
  %v865 = vadd.f32 %v160, %v864
  %866 = vmatmul.bf16.gmra.mxu0 %v514
  %v867 = vpop.f32.mrf.mxu0
  %v868 = vadd.f32 %v160, %v867
  %v869 = vpop.f32.mrf.mxu0
  %v870 = vadd.f32 %v160, %v869
  %871 = vmatmul.bf16.gmra.mxu0 %v516
  %v872 = vpop.f32.mrf.mxu0
  %v873 = vadd.f32 %v160, %v872
  %v874 = vpop.f32.mrf.mxu0
  %v875 = vadd.f32 %v160, %v874
  %876 = vmatmul.bf16.gmra.mxu0 %v518
  %v877 = vpop.f32.mrf.mxu0
  %v878 = vadd.f32 %v160, %v877
  %v879 = vpop.f32.mrf.mxu0
  %v880 = vadd.f32 %v160, %v879
  %881 = vmatmul.bf16.gmra.mxu0 %v520
  %v882 = vpop.f32.mrf.mxu0
  %v883 = vadd.f32 %v160, %v882
  %v884 = vpop.f32.mrf.mxu0
  %v885 = vadd.f32 %v160, %v884
  %886 = vmatmul.bf16.gmra.mxu0 %v522
  %v887 = vpop.f32.mrf.mxu0
  %v888 = vadd.f32 %v160, %v887
  %v889 = vpop.f32.mrf.mxu0
  %v890 = vadd.f32 %v160, %v889
  %891 = vmatmul.bf16.gmra.mxu0 %v524
  %v892 = vpop.f32.mrf.mxu0
  %v893 = vadd.f32 %v160, %v892
  %v894 = vpop.f32.mrf.mxu0
  %v895 = vadd.f32 %v160, %v894
  %896 = vmatmul.bf16.gmra.mxu0 %v526
  %v897 = vpop.f32.mrf.mxu0
  %v898 = vadd.f32 %v160, %v897
  %v899 = vpop.f32.mrf.mxu0
  %v900 = vadd.f32 %v160, %v899
  %901 = vmatmul.bf16.gmra.mxu0 %v528
  %v902 = vpop.f32.mrf.mxu0
  %v903 = vadd.f32 %v160, %v902
  %v904 = vpop.f32.mrf.mxu0
  %v905 = vadd.f32 %v160, %v904
  %906 = vmatmul.bf16.gmra.mxu0 %v530
  %v907 = vpop.f32.mrf.mxu0
  %v908 = vadd.f32 %v160, %v907
  %v909 = vpop.f32.mrf.mxu0
  %v910 = vadd.f32 %v160, %v909
  %911 = vmatmul.bf16.gmra.mxu0 %v532
  %v912 = vpop.f32.mrf.mxu0
  %v913 = vadd.f32 %v160, %v912
  %v914 = vpop.f32.mrf.mxu0
  %v915 = vadd.f32 %v160, %v914
  %916 = vmatmul.bf16.gmra.mxu0 %v534
  %v917 = vpop.f32.mrf.mxu0
  %v918 = vadd.f32 %v160, %v917
  %v919 = vpop.f32.mrf.mxu0
  %v920 = vadd.f32 %v160, %v919
  %921 = vmatmul.bf16.gmra.mxu0 %v536
  %v922 = vpop.f32.mrf.mxu0
  %v923 = vadd.f32 %v160, %v922
  %v924 = vpop.f32.mrf.mxu0
  %v925 = vadd.f32 %v160, %v924
  %926 = vmatmul.bf16.gmra.mxu0 %v538
  %v927 = vpop.f32.mrf.mxu0
  %v928 = vadd.f32 %v160, %v927
  %v929 = vpop.f32.mrf.mxu0
  %v930 = vadd.f32 %v160, %v929
  %931 = vmatmul.bf16.gmra.mxu0 %v540
  %v932 = vpop.f32.mrf.mxu0
  %v933 = vadd.f32 %v160, %v932
  %v934 = vpop.f32.mrf.mxu0
  %v935 = vadd.f32 %v160, %v934
  %936 = vmatmul.bf16.gmra.mxu0 %v542
  %v937 = vpop.f32.mrf.mxu0
  %v938 = vadd.f32 %v160, %v937
  %v939 = vpop.f32.mrf.mxu0
  %v940 = vadd.f32 %v160, %v939
  %941 = vmatmul.bf16.gmra.mxu0 %v544
  %v942 = vpop.f32.mrf.mxu0
  %v943 = vadd.f32 %v160, %v942
  %v944 = vpop.f32.mrf.mxu0
  %v945 = vadd.f32 %v160, %v944
  %946 = vmatmul.bf16.gmra.mxu0 %v546
  %v947 = vpop.f32.mrf.mxu0
  %v948 = vadd.f32 %v160, %v947
  %v949 = vpop.f32.mrf.mxu0
  %v950 = vadd.f32 %v160, %v949
  %951 = vmatmul.bf16.gmra.mxu0 %v548
  %v952 = vpop.f32.mrf.mxu0
  %v953 = vadd.f32 %v160, %v952
  %v954 = vpop.f32.mrf.mxu0
  %v955 = vadd.f32 %v160, %v954
  %956 = vmatmul.bf16.gmra.mxu0 %v550
  %v957 = vpop.f32.mrf.mxu0
  %v958 = vadd.f32 %v160, %v957
  %v959 = vpop.f32.mrf.mxu0
  %v960 = vadd.f32 %v160, %v959
  %961 = vmatmul.bf16.gmra.mxu0 %v552
  %v962 = vpop.f32.mrf.mxu0
  %v963 = vadd.f32 %v160, %v962
  %v964 = vpop.f32.mrf.mxu0
  %v965 = vadd.f32 %v160, %v964
  %966 = vmatmul.bf16.gmra.mxu0 %v554
  %v967 = vpop.f32.mrf.mxu0
  %v968 = vadd.f32 %v160, %v967
  %v969 = vpop.f32.mrf.mxu0
  %v970 = vadd.f32 %v160, %v969
  %971 = vmatmul.bf16.gmra.mxu0 %v556
  %v972 = vpop.f32.mrf.mxu0
  %v973 = vadd.f32 %v160, %v972
  %v974 = vpop.f32.mrf.mxu0
  %v975 = vadd.f32 %v160, %v974
  %976 = vmatmul.bf16.gmra.mxu0 %v558
  %v977 = vpop.f32.mrf.mxu0
  %v978 = vadd.f32 %v160, %v977
  %v979 = vpop.f32.mrf.mxu0
  %v980 = vadd.f32 %v160, %v979
  %981 = vmatmul.bf16.gmra.mxu0 %v560
  %v982 = vpop.f32.mrf.mxu0
  %v983 = vadd.f32 %v160, %v982
  %v984 = vpop.f32.mrf.mxu0
  %v985 = vadd.f32 %v160, %v984
  %986 = vmatmul.bf16.gmra.mxu0 %v562
  %v987 = vpop.f32.mrf.mxu0
  %v988 = vadd.f32 %v160, %v987
  %v989 = vpop.f32.mrf.mxu0
  %v990 = vadd.f32 %v160, %v989
  %991 = vmatmul.bf16.gmra.mxu0 %v564
  %v992 = vpop.f32.mrf.mxu0
  %v993 = vadd.f32 %v160, %v992
  %v994 = vpop.f32.mrf.mxu0
  %v995 = vadd.f32 %v160, %v994
  %996 = vmatmul.bf16.gmra.mxu0 %v566
  %v997 = vpop.f32.mrf.mxu0
  %v998 = vadd.f32 %v160, %v997
  %v999 = vpop.f32.mrf.mxu0
  %v1000 = vadd.f32 %v160, %v999
  %1001 = vmatmul.bf16.gmra.mxu0 %v568
  %v1002 = vpop.f32.mrf.mxu0
  %v1003 = vadd.f32 %v160, %v1002
  %v1004 = vpop.f32.mrf.mxu0
  %v1005 = vadd.f32 %v160, %v1004
  %1006 = vmatmul.bf16.gmra.mxu0 %v570
  %v1007 = vpop.f32.mrf.mxu0
  %v1008 = vadd.f32 %v160, %v1007
  %v1009 = vpop.f32.mrf.mxu0
  %v1010 = vadd.f32 %v160, %v1009
  %1011 = vmatmul.bf16.gmra.mxu0 %v572
  %v1012 = vpop.f32.mrf.mxu0
  %v1013 = vadd.f32 %v160, %v1012
  %v1014 = vpop.f32.mrf.mxu0
  %v1015 = vadd.f32 %v160, %v1014
  %1016 = vmatmul.bf16.gmra.mxu0 %v574
  %v1017 = vpop.f32.mrf.mxu0
  %v1018 = vadd.f32 %v160, %v1017
  %v1019 = vpop.f32.mrf.mxu0
  %v1020 = vadd.f32 %v160, %v1019
  %1021 = vmatmul.bf16.gmra.mxu0 %v576
  %v1022 = vpop.f32.mrf.mxu0
  %v1023 = vadd.f32 %v160, %v1022
  %v1024 = vpop.f32.mrf.mxu0
  %v1025 = vadd.f32 %v160, %v1024
  %1026 = vmatmul.bf16.gmra.mxu0 %v578
  %v1027 = vpop.f32.mrf.mxu0
  %v1028 = vadd.f32 %v160, %v1027
  %v1029 = vpop.f32.mrf.mxu0
  %v1030 = vadd.f32 %v160, %v1029
  %1031 = vmatmul.bf16.gmra.mxu0 %v580
  %v1032 = vpop.f32.mrf.mxu0
  %v1033 = vadd.f32 %v160, %v1032
  %v1034 = vpop.f32.mrf.mxu0
  %v1035 = vadd.f32 %v160, %v1034
  %1036 = vmatmul.bf16.gmra.mxu0 %v582
  %v1037 = vpop.f32.mrf.mxu0
  %v1038 = vadd.f32 %v160, %v1037
  %v1039 = vpop.f32.mrf.mxu0
  %v1040 = vadd.f32 %v160, %v1039
  %1041 = vmatmul.bf16.gmra.mxu0 %v584
  %v1042 = vpop.f32.mrf.mxu0
  %v1043 = vadd.f32 %v160, %v1042
  %v1044 = vpop.f32.mrf.mxu0
  %v1045 = vadd.f32 %v160, %v1044
  %1046 = vmatmul.bf16.gmra.mxu0 %v586
  %v1047 = vpop.f32.mrf.mxu0
  %v1048 = vadd.f32 %v160, %v1047
  %v1049 = vpop.f32.mrf.mxu0
  %v1050 = vadd.f32 %v160, %v1049
  %1051 = vmatmul.bf16.gmra.mxu0 %v588
  %v1052 = vpop.f32.mrf.mxu0
  %v1053 = vadd.f32 %v160, %v1052
  %v1054 = vpop.f32.mrf.mxu0
  %v1055 = vadd.f32 %v160, %v1054
  %1056 = vmatmul.bf16.gmra.mxu0 %v590
  %v1057 = vpop.f32.mrf.mxu0
  %v1058 = vadd.f32 %v160, %v1057
  %v1059 = vpop.f32.mrf.mxu0
  %v1060 = vadd.f32 %v160, %v1059
  %1061 = vmatmul.bf16.gmra.mxu0 %v592
  %v1062 = vpop.f32.mrf.mxu0
  %v1063 = vadd.f32 %v160, %v1062
  %v1064 = vpop.f32.mrf.mxu0
  %v1065 = vadd.f32 %v160, %v1064
  %1066 = vmatmul.bf16.gmra.mxu0 %v594
  %v1067 = vpop.f32.mrf.mxu0
  %v1068 = vadd.f32 %v160, %v1067
  %v1069 = vpop.f32.mrf.mxu0
  %v1070 = vadd.f32 %v160, %v1069
  %1071 = vmatmul.bf16.gmra.mxu0 %v596
  %v1072 = vpop.f32.mrf.mxu0
  %v1073 = vadd.f32 %v160, %v1072
  %v1074 = vpop.f32.mrf.mxu0
  %v1075 = vadd.f32 %v160, %v1074
  %1076 = vmatmul.bf16.gmra.mxu0 %v598
  %v1077 = vpop.f32.mrf.mxu0
  %v1078 = vadd.f32 %v160, %v1077
  %v1079 = vpop.f32.mrf.mxu0
  %v1080 = vadd.f32 %v160, %v1079
  %1081 = vmatmul.bf16.gmra.mxu0 %v600
  %v1082 = vpop.f32.mrf.mxu0
  %v1083 = vadd.f32 %v160, %v1082
  %v1084 = vpop.f32.mrf.mxu0
  %v1085 = vadd.f32 %v160, %v1084
  %1086 = vmatmul.bf16.gmra.mxu0 %v602
  %v1087 = vpop.f32.mrf.mxu0
  %v1088 = vadd.f32 %v160, %v1087
  %v1089 = vpop.f32.mrf.mxu0
  %v1090 = vadd.f32 %v160, %v1089
  %1091 = vmatmul.bf16.gmra.mxu0 %v604
  %v1092 = vpop.f32.mrf.mxu0
  %v1093 = vadd.f32 %v160, %v1092
  %v1094 = vpop.f32.mrf.mxu0
  %v1095 = vadd.f32 %v160, %v1094
  %1096 = vmatmul.bf16.gmra.mxu0 %v606
  %v1097 = vpop.f32.mrf.mxu0
  %v1098 = vadd.f32 %v160, %v1097
  %v1099 = vpop.f32.mrf.mxu0
  %v1100 = vadd.f32 %v160, %v1099
  %1101 = vmatmul.bf16.gmra.mxu0 %v608
  %v1102 = vpop.f32.mrf.mxu0
  %v1103 = vadd.f32 %v160, %v1102
  %v1104 = vpop.f32.mrf.mxu0
  %v1105 = vadd.f32 %v160, %v1104
  %1106 = vdwg.mxu0
  %1107 = vmatpush.bf16.msra.mxu0 %v801
  %1108 = vmatpush.bf16.msra.mxu0 %v800
  %1109 = vmatpush.bf16.msra.mxu0 %v799
  %1110 = vmatpush.bf16.msra.mxu0 %v798
  %1111 = vmatpush.bf16.msra.mxu0 %v797
  %1112 = vmatpush.bf16.msra.mxu0 %v796
  %1113 = vmatpush.bf16.msra.mxu0 %v795
  %1114 = vmatpush.bf16.msra.mxu0 %v794
  %1115 = vmatmul.bf16.gmra.mxu0 %v499
  %v1116 = vpop.f32.mrf.mxu0
  %v1117 = vadd.f32 %v828, %v1116
  %v1118 = vpop.f32.mrf.mxu0
  %v1119 = vadd.f32 %v830, %v1118
  %1120 = vmatmul.bf16.gmra.mxu0 %v501
  %v1121 = vpop.f32.mrf.mxu0
  %v1122 = vadd.f32 %v833, %v1121
  %v1123 = vpop.f32.mrf.mxu0
  %v1124 = vadd.f32 %v835, %v1123
  %1125 = vmatmul.bf16.gmra.mxu0 %v503
  %v1126 = vpop.f32.mrf.mxu0
  %v1127 = vadd.f32 %v838, %v1126
  %v1128 = vpop.f32.mrf.mxu0
  %v1129 = vadd.f32 %v840, %v1128
  %1130 = vmatmul.bf16.gmra.mxu0 %v505
  %v1131 = vpop.f32.mrf.mxu0
  %v1132 = vadd.f32 %v843, %v1131
  %v1133 = vpop.f32.mrf.mxu0
  %v1134 = vadd.f32 %v845, %v1133
  %1135 = vmatmul.bf16.gmra.mxu0 %v507
  %v1136 = vpop.f32.mrf.mxu0
  %v1137 = vadd.f32 %v848, %v1136
  %v1138 = vpop.f32.mrf.mxu0
  %v1139 = vadd.f32 %v850, %v1138
  %1140 = vmatmul.bf16.gmra.mxu0 %v509
  %v1141 = vpop.f32.mrf.mxu0
  %v1142 = vadd.f32 %v853, %v1141
  %v1143 = vpop.f32.mrf.mxu0
  %v1144 = vadd.f32 %v855, %v1143
  %1145 = vmatmul.bf16.gmra.mxu0 %v511
  %v1146 = vpop.f32.mrf.mxu0
  %v1147 = vadd.f32 %v858, %v1146
  %v1148 = vpop.f32.mrf.mxu0
  %v1149 = vadd.f32 %v860, %v1148
  %1150 = vmatmul.bf16.gmra.mxu0 %v513
  %v1151 = vpop.f32.mrf.mxu0
  %v1152 = vadd.f32 %v863, %v1151
  %v1153 = vpop.f32.mrf.mxu0
  %v1154 = vadd.f32 %v865, %v1153
  %1155 = vmatmul.bf16.gmra.mxu0 %v515
  %v1156 = vpop.f32.mrf.mxu0
  %v1157 = vadd.f32 %v868, %v1156
  %v1158 = vpop.f32.mrf.mxu0
  %v1159 = vadd.f32 %v870, %v1158
  %1160 = vmatmul.bf16.gmra.mxu0 %v517
  %v1161 = vpop.f32.mrf.mxu0
  %v1162 = vadd.f32 %v873, %v1161
  %v1163 = vpop.f32.mrf.mxu0
  %v1164 = vadd.f32 %v875, %v1163
  %1165 = vmatmul.bf16.gmra.mxu0 %v519
  %v1166 = vpop.f32.mrf.mxu0
  %v1167 = vadd.f32 %v878, %v1166
  %v1168 = vpop.f32.mrf.mxu0
  %v1169 = vadd.f32 %v880, %v1168
  %1170 = vmatmul.bf16.gmra.mxu0 %v521
  %v1171 = vpop.f32.mrf.mxu0
  %v1172 = vadd.f32 %v883, %v1171
  %v1173 = vpop.f32.mrf.mxu0
  %v1174 = vadd.f32 %v885, %v1173
  %1175 = vmatmul.bf16.gmra.mxu0 %v523
  %v1176 = vpop.f32.mrf.mxu0
  %v1177 = vadd.f32 %v888, %v1176
  %v1178 = vpop.f32.mrf.mxu0
  %v1179 = vadd.f32 %v890, %v1178
  %1180 = vmatmul.bf16.gmra.mxu0 %v525
  %v1181 = vpop.f32.mrf.mxu0
  %v1182 = vadd.f32 %v893, %v1181
  %v1183 = vpop.f32.mrf.mxu0
  %v1184 = vadd.f32 %v895, %v1183
  %1185 = vmatmul.bf16.gmra.mxu0 %v527
  %v1186 = vpop.f32.mrf.mxu0
  %v1187 = vadd.f32 %v898, %v1186
  %v1188 = vpop.f32.mrf.mxu0
  %v1189 = vadd.f32 %v900, %v1188
  %1190 = vmatmul.bf16.gmra.mxu0 %v529
  %v1191 = vpop.f32.mrf.mxu0
  %v1192 = vadd.f32 %v903, %v1191
  %v1193 = vpop.f32.mrf.mxu0
  %v1194 = vadd.f32 %v905, %v1193
  %1195 = vmatmul.bf16.gmra.mxu0 %v531
  %v1196 = vpop.f32.mrf.mxu0
  %v1197 = vadd.f32 %v908, %v1196
  %v1198 = vpop.f32.mrf.mxu0
  %v1199 = vadd.f32 %v910, %v1198
  %1200 = vmatmul.bf16.gmra.mxu0 %v533
  %v1201 = vpop.f32.mrf.mxu0
  %v1202 = vadd.f32 %v913, %v1201
  %v1203 = vpop.f32.mrf.mxu0
  %v1204 = vadd.f32 %v915, %v1203
  %1205 = vmatmul.bf16.gmra.mxu0 %v535
  %v1206 = vpop.f32.mrf.mxu0
  %v1207 = vadd.f32 %v918, %v1206
  %v1208 = vpop.f32.mrf.mxu0
  %v1209 = vadd.f32 %v920, %v1208
  %1210 = vmatmul.bf16.gmra.mxu0 %v537
  %v1211 = vpop.f32.mrf.mxu0
  %v1212 = vadd.f32 %v923, %v1211
  %v1213 = vpop.f32.mrf.mxu0
  %v1214 = vadd.f32 %v925, %v1213
  %1215 = vmatmul.bf16.gmra.mxu0 %v539
  %v1216 = vpop.f32.mrf.mxu0
  %v1217 = vadd.f32 %v928, %v1216
  %v1218 = vpop.f32.mrf.mxu0
  %v1219 = vadd.f32 %v930, %v1218
  %1220 = vmatmul.bf16.gmra.mxu0 %v541
  %v1221 = vpop.f32.mrf.mxu0
  %v1222 = vadd.f32 %v933, %v1221
  %v1223 = vpop.f32.mrf.mxu0
  %v1224 = vadd.f32 %v935, %v1223
  %1225 = vmatmul.bf16.gmra.mxu0 %v543
  %v1226 = vpop.f32.mrf.mxu0
  %v1227 = vadd.f32 %v938, %v1226
  %v1228 = vpop.f32.mrf.mxu0
  %v1229 = vadd.f32 %v940, %v1228
  %1230 = vmatmul.bf16.gmra.mxu0 %v545
  %v1231 = vpop.f32.mrf.mxu0
  %v1232 = vadd.f32 %v943, %v1231
  %v1233 = vpop.f32.mrf.mxu0
  %v1234 = vadd.f32 %v945, %v1233
  %1235 = vmatmul.bf16.gmra.mxu0 %v547
  %v1236 = vpop.f32.mrf.mxu0
  %v1237 = vadd.f32 %v948, %v1236
  %v1238 = vpop.f32.mrf.mxu0
  %v1239 = vadd.f32 %v950, %v1238
  %1240 = vmatmul.bf16.gmra.mxu0 %v549
  %v1241 = vpop.f32.mrf.mxu0
  %v1242 = vadd.f32 %v953, %v1241
  %v1243 = vpop.f32.mrf.mxu0
  %v1244 = vadd.f32 %v955, %v1243
  %1245 = vmatmul.bf16.gmra.mxu0 %v551
  %v1246 = vpop.f32.mrf.mxu0
  %v1247 = vadd.f32 %v958, %v1246
  %v1248 = vpop.f32.mrf.mxu0
  %v1249 = vadd.f32 %v960, %v1248
  %1250 = vmatmul.bf16.gmra.mxu0 %v553
  %v1251 = vpop.f32.mrf.mxu0
  %v1252 = vadd.f32 %v963, %v1251
  %v1253 = vpop.f32.mrf.mxu0
  %v1254 = vadd.f32 %v965, %v1253
  %1255 = vmatmul.bf16.gmra.mxu0 %v555
  %v1256 = vpop.f32.mrf.mxu0
  %v1257 = vadd.f32 %v968, %v1256
  %v1258 = vpop.f32.mrf.mxu0
  %v1259 = vadd.f32 %v970, %v1258
  %1260 = vmatmul.bf16.gmra.mxu0 %v557
  %v1261 = vpop.f32.mrf.mxu0
  %v1262 = vadd.f32 %v973, %v1261
  %v1263 = vpop.f32.mrf.mxu0
  %v1264 = vadd.f32 %v975, %v1263
  %1265 = vmatmul.bf16.gmra.mxu0 %v559
  %v1266 = vpop.f32.mrf.mxu0
  %v1267 = vadd.f32 %v978, %v1266
  %v1268 = vpop.f32.mrf.mxu0
  %v1269 = vadd.f32 %v980, %v1268
  %1270 = vmatmul.bf16.gmra.mxu0 %v561
  %v1271 = vpop.f32.mrf.mxu0
  %v1272 = vadd.f32 %v983, %v1271
  %v1273 = vpop.f32.mrf.mxu0
  %v1274 = vadd.f32 %v985, %v1273
  %1275 = vmatmul.bf16.gmra.mxu0 %v563
  %v1276 = vpop.f32.mrf.mxu0
  %v1277 = vadd.f32 %v988, %v1276
  %v1278 = vpop.f32.mrf.mxu0
  %v1279 = vadd.f32 %v990, %v1278
  %1280 = vmatmul.bf16.gmra.mxu0 %v565
  %v1281 = vpop.f32.mrf.mxu0
  %v1282 = vadd.f32 %v993, %v1281
  %v1283 = vpop.f32.mrf.mxu0
  %v1284 = vadd.f32 %v995, %v1283
  %1285 = vmatmul.bf16.gmra.mxu0 %v567
  %v1286 = vpop.f32.mrf.mxu0
  %v1287 = vadd.f32 %v998, %v1286
  %v1288 = vpop.f32.mrf.mxu0
  %v1289 = vadd.f32 %v1000, %v1288
  %1290 = vmatmul.bf16.gmra.mxu0 %v569
  %v1291 = vpop.f32.mrf.mxu0
  %v1292 = vadd.f32 %v1003, %v1291
  %v1293 = vpop.f32.mrf.mxu0
  %v1294 = vadd.f32 %v1005, %v1293
  %1295 = vmatmul.bf16.gmra.mxu0 %v571
  %v1296 = vpop.f32.mrf.mxu0
  %v1297 = vadd.f32 %v1008, %v1296
  %v1298 = vpop.f32.mrf.mxu0
  %v1299 = vadd.f32 %v1010, %v1298
  %1300 = vmatmul.bf16.gmra.mxu0 %v573
  %v1301 = vpop.f32.mrf.mxu0
  %v1302 = vadd.f32 %v1013, %v1301
  %v1303 = vpop.f32.mrf.mxu0
  %v1304 = vadd.f32 %v1015, %v1303
  %1305 = vmatmul.bf16.gmra.mxu0 %v575
  %v1306 = vpop.f32.mrf.mxu0
  %v1307 = vadd.f32 %v1018, %v1306
  %v1308 = vpop.f32.mrf.mxu0
  %v1309 = vadd.f32 %v1020, %v1308
  %1310 = vmatmul.bf16.gmra.mxu0 %v577
  %v1311 = vpop.f32.mrf.mxu0
  %v1312 = vadd.f32 %v1023, %v1311
  %v1313 = vpop.f32.mrf.mxu0
  %v1314 = vadd.f32 %v1025, %v1313
  %1315 = vmatmul.bf16.gmra.mxu0 %v579
  %v1316 = vpop.f32.mrf.mxu0
  %v1317 = vadd.f32 %v1028, %v1316
  %v1318 = vpop.f32.mrf.mxu0
  %v1319 = vadd.f32 %v1030, %v1318
  %1320 = vmatmul.bf16.gmra.mxu0 %v581
  %v1321 = vpop.f32.mrf.mxu0
  %v1322 = vadd.f32 %v1033, %v1321
  %v1323 = vpop.f32.mrf.mxu0
  %v1324 = vadd.f32 %v1035, %v1323
  %1325 = vmatmul.bf16.gmra.mxu0 %v583
  %v1326 = vpop.f32.mrf.mxu0
  %v1327 = vadd.f32 %v1038, %v1326
  %v1328 = vpop.f32.mrf.mxu0
  %v1329 = vadd.f32 %v1040, %v1328
  %1330 = vmatmul.bf16.gmra.mxu0 %v585
  %v1331 = vpop.f32.mrf.mxu0
  %v1332 = vadd.f32 %v1043, %v1331
  %v1333 = vpop.f32.mrf.mxu0
  %v1334 = vadd.f32 %v1045, %v1333
  %1335 = vmatmul.bf16.gmra.mxu0 %v587
  %v1336 = vpop.f32.mrf.mxu0
  %v1337 = vadd.f32 %v1048, %v1336
  %v1338 = vpop.f32.mrf.mxu0
  %v1339 = vadd.f32 %v1050, %v1338
  %1340 = vmatmul.bf16.gmra.mxu0 %v589
  %v1341 = vpop.f32.mrf.mxu0
  %v1342 = vadd.f32 %v1053, %v1341
  %v1343 = vpop.f32.mrf.mxu0
  %v1344 = vadd.f32 %v1055, %v1343
  %1345 = vmatmul.bf16.gmra.mxu0 %v591
  %v1346 = vpop.f32.mrf.mxu0
  %v1347 = vadd.f32 %v1058, %v1346
  %v1348 = vpop.f32.mrf.mxu0
  %v1349 = vadd.f32 %v1060, %v1348
  %1350 = vmatmul.bf16.gmra.mxu0 %v593
  %v1351 = vpop.f32.mrf.mxu0
  %v1352 = vadd.f32 %v1063, %v1351
  %v1353 = vpop.f32.mrf.mxu0
  %v1354 = vadd.f32 %v1065, %v1353
  %1355 = vmatmul.bf16.gmra.mxu0 %v595
  %v1356 = vpop.f32.mrf.mxu0
  %v1357 = vadd.f32 %v1068, %v1356
  %v1358 = vpop.f32.mrf.mxu0
  %v1359 = vadd.f32 %v1070, %v1358
  %1360 = vmatmul.bf16.gmra.mxu0 %v597
  %v1361 = vpop.f32.mrf.mxu0
  %v1362 = vadd.f32 %v1073, %v1361
  %v1363 = vpop.f32.mrf.mxu0
  %v1364 = vadd.f32 %v1075, %v1363
  %1365 = vmatmul.bf16.gmra.mxu0 %v599
  %v1366 = vpop.f32.mrf.mxu0
  %v1367 = vadd.f32 %v1078, %v1366
  %v1368 = vpop.f32.mrf.mxu0
  %v1369 = vadd.f32 %v1080, %v1368
  %1370 = vmatmul.bf16.gmra.mxu0 %v601
  %v1371 = vpop.f32.mrf.mxu0
  %v1372 = vadd.f32 %v1083, %v1371
  %v1373 = vpop.f32.mrf.mxu0
  %v1374 = vadd.f32 %v1085, %v1373
  %1375 = vmatmul.bf16.gmra.mxu0 %v603
  %v1376 = vpop.f32.mrf.mxu0
  %v1377 = vadd.f32 %v1088, %v1376
  %v1378 = vpop.f32.mrf.mxu0
  %v1379 = vadd.f32 %v1090, %v1378
  %1380 = vmatmul.bf16.gmra.mxu0 %v605
  %v1381 = vpop.f32.mrf.mxu0
  %v1382 = vadd.f32 %v1093, %v1381
  %v1383 = vpop.f32.mrf.mxu0
  %v1384 = vadd.f32 %v1095, %v1383
  %1385 = vmatmul.bf16.gmra.mxu0 %v607
  %v1386 = vpop.f32.mrf.mxu0
  %v1387 = vadd.f32 %v1098, %v1386
  %v1388 = vpop.f32.mrf.mxu0
  %v1389 = vadd.f32 %v1100, %v1388
  %1390 = vmatmul.bf16.gmra.mxu0 %v609
  %v1391 = vpop.f32.mrf.mxu0
  %v1392 = vadd.f32 %v1103, %v1391
  %v1393 = vpop.f32.mrf.mxu0
  %v1394 = vadd.f32 %v1105, %v1393
  %1395 = vdwg.mxu0
  %v1396 = vmax.f32 %v1117, 0.0
  %v1397 = vmax.f32 %v1119, 0.0
  %v1398 = vmax.f32 %v1122, 0.0
  %v1399 = vmax.f32 %v1124, 0.0
  %v1400 = vmax.f32 %v1127, 0.0
  %v1401 = vmax.f32 %v1129, 0.0
  %v1402 = vmax.f32 %v1132, 0.0
  %v1403 = vmax.f32 %v1134, 0.0
  %v1404 = vmax.f32 %v1137, 0.0
  %v1405 = vmax.f32 %v1139, 0.0
  %v1406 = vmax.f32 %v1142, 0.0
  %v1407 = vmax.f32 %v1144, 0.0
  %v1408 = vmax.f32 %v1147, 0.0
  %v1409 = vmax.f32 %v1149, 0.0
  %v1410 = vmax.f32 %v1152, 0.0
  %v1411 = vmax.f32 %v1154, 0.0
  %v1412 = vmax.f32 %v1157, 0.0
  %v1413 = vmax.f32 %v1159, 0.0
  %v1414 = vmax.f32 %v1162, 0.0
  %v1415 = vmax.f32 %v1164, 0.0
  %v1416 = vmax.f32 %v1167, 0.0
  %v1417 = vmax.f32 %v1169, 0.0
  %v1418 = vmax.f32 %v1172, 0.0
  %v1419 = vmax.f32 %v1174, 0.0
  %v1420 = vmax.f32 %v1177, 0.0
  %v1421 = vmax.f32 %v1179, 0.0
  %v1422 = vmax.f32 %v1182, 0.0
  %v1423 = vmax.f32 %v1184, 0.0
  %v1424 = vmax.f32 %v1187, 0.0
  %v1425 = vmax.f32 %v1189, 0.0
  %v1426 = vmax.f32 %v1192, 0.0
  %v1427 = vmax.f32 %v1194, 0.0
  %v1428 = vmax.f32 %v1197, 0.0
  %v1429 = vmax.f32 %v1199, 0.0
  %v1430 = vmax.f32 %v1202, 0.0
  %v1431 = vmax.f32 %v1204, 0.0
  %v1432 = vmax.f32 %v1207, 0.0
  %v1433 = vmax.f32 %v1209, 0.0
  %v1434 = vmax.f32 %v1212, 0.0
  %v1435 = vmax.f32 %v1214, 0.0
  %v1436 = vmax.f32 %v1217, 0.0
  %v1437 = vmax.f32 %v1219, 0.0
  %v1438 = vmax.f32 %v1222, 0.0
  %v1439 = vmax.f32 %v1224, 0.0
  %v1440 = vmax.f32 %v1227, 0.0
  %v1441 = vmax.f32 %v1229, 0.0
  %v1442 = vmax.f32 %v1232, 0.0
  %v1443 = vmax.f32 %v1234, 0.0
  %v1444 = vmax.f32 %v1237, 0.0
  %v1445 = vmax.f32 %v1239, 0.0
  %v1446 = vmax.f32 %v1242, 0.0
  %v1447 = vmax.f32 %v1244, 0.0
  %v1448 = vmax.f32 %v1247, 0.0
  %v1449 = vmax.f32 %v1249, 0.0
  %v1450 = vmax.f32 %v1252, 0.0
  %v1451 = vmax.f32 %v1254, 0.0
  %v1452 = vmax.f32 %v1257, 0.0
  %v1453 = vmax.f32 %v1259, 0.0
  %v1454 = vmax.f32 %v1262, 0.0
  %v1455 = vmax.f32 %v1264, 0.0
  %v1456 = vmax.f32 %v1267, 0.0
  %v1457 = vmax.f32 %v1269, 0.0
  %v1458 = vmax.f32 %v1272, 0.0
  %v1459 = vmax.f32 %v1274, 0.0
  %v1460 = vmax.f32 %v1277, 0.0
  %v1461 = vmax.f32 %v1279, 0.0
  %v1462 = vmax.f32 %v1282, 0.0
  %v1463 = vmax.f32 %v1284, 0.0
  %v1464 = vmax.f32 %v1287, 0.0
  %v1465 = vmax.f32 %v1289, 0.0
  %v1466 = vmax.f32 %v1292, 0.0
  %v1467 = vmax.f32 %v1294, 0.0
  %v1468 = vmax.f32 %v1297, 0.0
  %v1469 = vmax.f32 %v1299, 0.0
  %v1470 = vmax.f32 %v1302, 0.0
  %v1471 = vmax.f32 %v1304, 0.0
  %v1472 = vmax.f32 %v1307, 0.0
  %v1473 = vmax.f32 %v1309, 0.0
  %v1474 = vmax.f32 %v1312, 0.0
  %v1475 = vmax.f32 %v1314, 0.0
  %v1476 = vmax.f32 %v1317, 0.0
  %v1477 = vmax.f32 %v1319, 0.0
  %v1478 = vmax.f32 %v1322, 0.0
  %v1479 = vmax.f32 %v1324, 0.0
  %v1480 = vmax.f32 %v1327, 0.0
  %v1481 = vmax.f32 %v1329, 0.0
  %v1482 = vmax.f32 %v1332, 0.0
  %v1483 = vmax.f32 %v1334, 0.0
  %v1484 = vmax.f32 %v1337, 0.0
  %v1485 = vmax.f32 %v1339, 0.0
  %v1486 = vmax.f32 %v1342, 0.0
  %v1487 = vmax.f32 %v1344, 0.0
  %v1488 = vmax.f32 %v1347, 0.0
  %v1489 = vmax.f32 %v1349, 0.0
  %v1490 = vmax.f32 %v1352, 0.0
  %v1491 = vmax.f32 %v1354, 0.0
  %v1492 = vmax.f32 %v1357, 0.0
  %v1493 = vmax.f32 %v1359, 0.0
  %v1494 = vmax.f32 %v1362, 0.0
  %v1495 = vmax.f32 %v1364, 0.0
  %v1496 = vmax.f32 %v1367, 0.0
  %v1497 = vmax.f32 %v1369, 0.0
  %v1498 = vmax.f32 %v1372, 0.0
  %v1499 = vmax.f32 %v1374, 0.0
  %v1500 = vmax.f32 %v1377, 0.0
  %v1501 = vmax.f32 %v1379, 0.0
  %v1502 = vmax.f32 %v1382, 0.0
  %v1503 = vmax.f32 %v1384, 0.0
  %v1504 = vmax.f32 %v1387, 0.0
  %v1505 = vmax.f32 %v1389, 0.0
  %v1506 = vmax.f32 %v1392, 0.0
  %v1507 = vmax.f32 %v1394, 0.0
  %v1508 = vpack.c.bf16 %v1396, %v1396
  %v1509 = vpack.c.bf16 %v1397, %v1397
  %v1510 = vpack.c.bf16 %v1398, %v1398
  %v1511 = vpack.c.bf16 %v1399, %v1399
  %v1512 = vpack.c.bf16 %v1400, %v1400
  %v1513 = vpack.c.bf16 %v1401, %v1401
  %v1514 = vpack.c.bf16 %v1402, %v1402
  %v1515 = vpack.c.bf16 %v1403, %v1403
  %v1516 = vpack.c.bf16 %v1404, %v1404
  %v1517 = vpack.c.bf16 %v1405, %v1405
  %v1518 = vpack.c.bf16 %v1406, %v1406
  %v1519 = vpack.c.bf16 %v1407, %v1407
  %v1520 = vpack.c.bf16 %v1408, %v1408
  %v1521 = vpack.c.bf16 %v1409, %v1409
  %v1522 = vpack.c.bf16 %v1410, %v1410
  %v1523 = vpack.c.bf16 %v1411, %v1411
  %v1524 = vpack.c.bf16 %v1412, %v1412
  %v1525 = vpack.c.bf16 %v1413, %v1413
  %v1526 = vpack.c.bf16 %v1414, %v1414
  %v1527 = vpack.c.bf16 %v1415, %v1415
  %v1528 = vpack.c.bf16 %v1416, %v1416
  %v1529 = vpack.c.bf16 %v1417, %v1417
  %v1530 = vpack.c.bf16 %v1418, %v1418
  %v1531 = vpack.c.bf16 %v1419, %v1419
  %v1532 = vpack.c.bf16 %v1420, %v1420
  %v1533 = vpack.c.bf16 %v1421, %v1421
  %v1534 = vpack.c.bf16 %v1422, %v1422
  %v1535 = vpack.c.bf16 %v1423, %v1423
  %v1536 = vpack.c.bf16 %v1424, %v1424
  %v1537 = vpack.c.bf16 %v1425, %v1425
  %v1538 = vpack.c.bf16 %v1426, %v1426
  %v1539 = vpack.c.bf16 %v1427, %v1427
  %v1540 = vpack.c.bf16 %v1428, %v1428
  %v1541 = vpack.c.bf16 %v1429, %v1429
  %v1542 = vpack.c.bf16 %v1430, %v1430
  %v1543 = vpack.c.bf16 %v1431, %v1431
  %v1544 = vpack.c.bf16 %v1432, %v1432
  %v1545 = vpack.c.bf16 %v1433, %v1433
  %v1546 = vpack.c.bf16 %v1434, %v1434
  %v1547 = vpack.c.bf16 %v1435, %v1435
  %v1548 = vpack.c.bf16 %v1436, %v1436
  %v1549 = vpack.c.bf16 %v1437, %v1437
  %v1550 = vpack.c.bf16 %v1438, %v1438
  %v1551 = vpack.c.bf16 %v1439, %v1439
  %v1552 = vpack.c.bf16 %v1440, %v1440
  %v1553 = vpack.c.bf16 %v1441, %v1441
  %v1554 = vpack.c.bf16 %v1442, %v1442
  %v1555 = vpack.c.bf16 %v1443, %v1443
  %v1556 = vpack.c.bf16 %v1444, %v1444
  %v1557 = vpack.c.bf16 %v1445, %v1445
  %v1558 = vpack.c.bf16 %v1446, %v1446
  %v1559 = vpack.c.bf16 %v1447, %v1447
  %v1560 = vpack.c.bf16 %v1448, %v1448
  %v1561 = vpack.c.bf16 %v1449, %v1449
  %v1562 = vpack.c.bf16 %v1450, %v1450
  %v1563 = vpack.c.bf16 %v1451, %v1451
  %v1564 = vpack.c.bf16 %v1452, %v1452
  %v1565 = vpack.c.bf16 %v1453, %v1453
  %v1566 = vpack.c.bf16 %v1454, %v1454
  %v1567 = vpack.c.bf16 %v1455, %v1455
  %v1568 = vpack.c.bf16 %v1456, %v1456
  %v1569 = vpack.c.bf16 %v1457, %v1457
  %v1570 = vpack.c.bf16 %v1458, %v1458
  %v1571 = vpack.c.bf16 %v1459, %v1459
  %v1572 = vpack.c.bf16 %v1460, %v1460
  %v1573 = vpack.c.bf16 %v1461, %v1461
  %v1574 = vpack.c.bf16 %v1462, %v1462
  %v1575 = vpack.c.bf16 %v1463, %v1463
  %v1576 = vpack.c.bf16 %v1464, %v1464
  %v1577 = vpack.c.bf16 %v1465, %v1465
  %v1578 = vpack.c.bf16 %v1466, %v1466
  %v1579 = vpack.c.bf16 %v1467, %v1467
  %v1580 = vpack.c.bf16 %v1468, %v1468
  %v1581 = vpack.c.bf16 %v1469, %v1469
  %v1582 = vpack.c.bf16 %v1470, %v1470
  %v1583 = vpack.c.bf16 %v1471, %v1471
  %v1584 = vpack.c.bf16 %v1472, %v1472
  %v1585 = vpack.c.bf16 %v1473, %v1473
  %v1586 = vpack.c.bf16 %v1474, %v1474
  %v1587 = vpack.c.bf16 %v1475, %v1475
  %v1588 = vpack.c.bf16 %v1476, %v1476
  %v1589 = vpack.c.bf16 %v1477, %v1477
  %v1590 = vpack.c.bf16 %v1478, %v1478
  %v1591 = vpack.c.bf16 %v1479, %v1479
  %v1592 = vpack.c.bf16 %v1480, %v1480
  %v1593 = vpack.c.bf16 %v1481, %v1481
  %v1594 = vpack.c.bf16 %v1482, %v1482
  %v1595 = vpack.c.bf16 %v1483, %v1483
  %v1596 = vpack.c.bf16 %v1484, %v1484
  %v1597 = vpack.c.bf16 %v1485, %v1485
  %v1598 = vpack.c.bf16 %v1486, %v1486
  %v1599 = vpack.c.bf16 %v1487, %v1487
  %v1600 = vpack.c.bf16 %v1488, %v1488
  %v1601 = vpack.c.bf16 %v1489, %v1489
  %v1602 = vpack.c.bf16 %v1490, %v1490
  %v1603 = vpack.c.bf16 %v1491, %v1491
  %v1604 = vpack.c.bf16 %v1492, %v1492
  %v1605 = vpack.c.bf16 %v1493, %v1493
  %v1606 = vpack.c.bf16 %v1494, %v1494
  %v1607 = vpack.c.bf16 %v1495, %v1495
  %v1608 = vpack.c.bf16 %v1496, %v1496
  %v1609 = vpack.c.bf16 %v1497, %v1497
  %v1610 = vpack.c.bf16 %v1498, %v1498
  %v1611 = vpack.c.bf16 %v1499, %v1499
  %v1612 = vpack.c.bf16 %v1500, %v1500
  %v1613 = vpack.c.bf16 %v1501, %v1501
  %v1614 = vpack.c.bf16 %v1502, %v1502
  %v1615 = vpack.c.bf16 %v1503, %v1503
  %v1616 = vpack.c.bf16 %v1504, %v1504
  %v1617 = vpack.c.bf16 %v1505, %v1505
  %v1618 = vpack.c.bf16 %v1506, %v1506
  %v1619 = vpack.c.bf16 %v1507, %v1507
  %1620 = vst [vmem:[%s3] sm:$0xf] %v1508
  %1621 = vst [vmem:[%s3 + $0x4] sm:$0xf] %v1509
  %1622 = vst [vmem:[%s3 + $0x8] sm:$0xf] %v1510
  %1623 = vst [vmem:[%s3 + $0xc] sm:$0xf] %v1511
  %1624 = vst [vmem:[%s3 + $0x10] sm:$0xf] %v1512
  %1625 = vst [vmem:[%s3 + $0x14] sm:$0xf] %v1513
  %1626 = vst [vmem:[%s3 + $0x18] sm:$0xf] %v1514
  %1627 = vst [vmem:[%s3 + $0x1c] sm:$0xf] %v1515
  %1628 = vst [vmem:[%s3 + $0x20] sm:$0xf] %v1516
  %1629 = vst [vmem:[%s3 + $0x24] sm:$0xf] %v1517
  %1630 = vst [vmem:[%s3 + $0x28] sm:$0xf] %v1518
  %1631 = vst [vmem:[%s3 + $0x2c] sm:$0xf] %v1519
  %1632 = vst [vmem:[%s3 + $0x30] sm:$0xf] %v1520
  %1633 = vst [vmem:[%s3 + $0x34] sm:$0xf] %v1521
  %1634 = vst [vmem:[%s3 + $0x38] sm:$0xf] %v1522
  %1635 = vst [vmem:[%s3 + $0x3c] sm:$0xf] %v1523
  %1636 = vst [vmem:[%s3 + $0x40] sm:$0xf] %v1524
  %1637 = vst [vmem:[%s3 + $0x44] sm:$0xf] %v1525
  %1638 = vst [vmem:[%s3 + $0x48] sm:$0xf] %v1526
  %1639 = vst [vmem:[%s3 + $0x4c] sm:$0xf] %v1527
  %1640 = vst [vmem:[%s3 + $0x50] sm:$0xf] %v1528
  %1641 = vst [vmem:[%s3 + $0x54] sm:$0xf] %v1529
  %1642 = vst [vmem:[%s3 + $0x58] sm:$0xf] %v1530
  %1643 = vst [vmem:[%s3 + $0x5c] sm:$0xf] %v1531
  %1644 = vst [vmem:[%s3 + $0x60] sm:$0xf] %v1532
  %1645 = vst [vmem:[%s3 + $0x64] sm:$0xf] %v1533
  %1646 = vst [vmem:[%s3 + $0x68] sm:$0xf] %v1534
  %1647 = vst [vmem:[%s3 + $0x6c] sm:$0xf] %v1535
  %1648 = vst [vmem:[%s3 + $0x70] sm:$0xf] %v1536
  %1649 = vst [vmem:[%s3 + $0x74] sm:$0xf] %v1537
  %1650 = vst [vmem:[%s3 + $0x78] sm:$0xf] %v1538
  %1651 = vst [vmem:[%s3 + $0x7c] sm:$0xf] %v1539
  %1652 = vst [vmem:[%s3 + $0x80] sm:$0xf] %v1540
  %1653 = vst [vmem:[%s3 + $0x84] sm:$0xf] %v1541
  %1654 = vst [vmem:[%s3 + $0x88] sm:$0xf] %v1542
  %1655 = vst [vmem:[%s3 + $0x8c] sm:$0xf] %v1543
  %1656 = vst [vmem:[%s3 + $0x90] sm:$0xf] %v1544
  %1657 = vst [vmem:[%s3 + $0x94] sm:$0xf] %v1545
  %1658 = vst [vmem:[%s3 + $0x98] sm:$0xf] %v1546
  %1659 = vst [vmem:[%s3 + $0x9c] sm:$0xf] %v1547
  %1660 = vst [vmem:[%s3 + $0xa0] sm:$0xf] %v1548
  %1661 = vst [vmem:[%s3 + $0xa4] sm:$0xf] %v1549
  %1662 = vst [vmem:[%s3 + $0xa8] sm:$0xf] %v1550
  %1663 = vst [vmem:[%s3 + $0xac] sm:$0xf] %v1551
  %1664 = vst [vmem:[%s3 + $0xb0] sm:$0xf] %v1552
  %1665 = vst [vmem:[%s3 + $0xb4] sm:$0xf] %v1553
  %1666 = vst [vmem:[%s3 + $0xb8] sm:$0xf] %v1554
  %1667 = vst [vmem:[%s3 + $0xbc] sm:$0xf] %v1555
  %1668 = vst [vmem:[%s3 + $0xc0] sm:$0xf] %v1556
  %1669 = vst [vmem:[%s3 + $0xc4] sm:$0xf] %v1557
  %1670 = vst [vmem:[%s3 + $0xc8] sm:$0xf] %v1558
  %1671 = vst [vmem:[%s3 + $0xcc] sm:$0xf] %v1559
  %1672 = vst [vmem:[%s3 + $0xd0] sm:$0xf] %v1560
  %1673 = vst [vmem:[%s3 + $0xd4] sm:$0xf] %v1561
  %1674 = vst [vmem:[%s3 + $0xd8] sm:$0xf] %v1562
  %1675 = vst [vmem:[%s3 + $0xdc] sm:$0xf] %v1563
  %1676 = vst [vmem:[%s3 + $0xe0] sm:$0xf] %v1564
  %1677 = vst [vmem:[%s3 + $0xe4] sm:$0xf] %v1565
  %1678 = vst [vmem:[%s3 + $0xe8] sm:$0xf] %v1566
  %1679 = vst [vmem:[%s3 + $0xec] sm:$0xf] %v1567
  %1680 = vst [vmem:[%s3 + $0xf0] sm:$0xf] %v1568
  %1681 = vst [vmem:[%s3 + $0xf4] sm:$0xf] %v1569
  %1682 = vst [vmem:[%s3 + $0xf8] sm:$0xf] %v1570
  %1683 = vst [vmem:[%s3 + $0xfc] sm:$0xf] %v1571
  %1684 = vst [vmem:[%s3 + $0x100] sm:$0xf] %v1572
  %1685 = vst [vmem:[%s3 + $0x104] sm:$0xf] %v1573
  %1686 = vst [vmem:[%s3 + $0x108] sm:$0xf] %v1574
  %1687 = vst [vmem:[%s3 + $0x10c] sm:$0xf] %v1575
  %1688 = vst [vmem:[%s3 + $0x110] sm:$0xf] %v1576
  %1689 = vst [vmem:[%s3 + $0x114] sm:$0xf] %v1577
  %1690 = vst [vmem:[%s3 + $0x118] sm:$0xf] %v1578
  %1691 = vst [vmem:[%s3 + $0x11c] sm:$0xf] %v1579
  %1692 = vst [vmem:[%s3 + $0x120] sm:$0xf] %v1580
  %1693 = vst [vmem:[%s3 + $0x124] sm:$0xf] %v1581
  %1694 = vst [vmem:[%s3 + $0x128] sm:$0xf] %v1582
  %1695 = vst [vmem:[%s3 + $0x12c] sm:$0xf] %v1583
  %1696 = vst [vmem:[%s3 + $0x130] sm:$0xf] %v1584
  %1697 = vst [vmem:[%s3 + $0x134] sm:$0xf] %v1585
  %1698 = vst [vmem:[%s3 + $0x138] sm:$0xf] %v1586
  %1699 = vst [vmem:[%s3 + $0x13c] sm:$0xf] %v1587
  %1700 = vst [vmem:[%s3 + $0x140] sm:$0xf] %v1588
  %1701 = vst [vmem:[%s3 + $0x144] sm:$0xf] %v1589
  %1702 = vst [vmem:[%s3 + $0x148] sm:$0xf] %v1590
  %1703 = vst [vmem:[%s3 + $0x14c] sm:$0xf] %v1591
  %1704 = vst [vmem:[%s3 + $0x150] sm:$0xf] %v1592
  %1705 = vst [vmem:[%s3 + $0x154] sm:$0xf] %v1593
  %1706 = vst [vmem:[%s3 + $0x158] sm:$0xf] %v1594
  %1707 = vst [vmem:[%s3 + $0x15c] sm:$0xf] %v1595
  %1708 = vst [vmem:[%s3 + $0x160] sm:$0xf] %v1596
  %1709 = vst [vmem:[%s3 + $0x164] sm:$0xf] %v1597
  %1710 = vst [vmem:[%s3 + $0x168] sm:$0xf] %v1598
  %1711 = vst [vmem:[%s3 + $0x16c] sm:$0xf] %v1599
  %1712 = vst [vmem:[%s3 + $0x170] sm:$0xf] %v1600
  %1713 = vst [vmem:[%s3 + $0x174] sm:$0xf] %v1601
  %1714 = vst [vmem:[%s3 + $0x178] sm:$0xf] %v1602
  %1715 = vst [vmem:[%s3 + $0x17c] sm:$0xf] %v1603
  %1716 = vst [vmem:[%s3 + $0x180] sm:$0xf] %v1604
  %1717 = vst [vmem:[%s3 + $0x184] sm:$0xf] %v1605
  %1718 = vst [vmem:[%s3 + $0x188] sm:$0xf] %v1606
  %1719 = vst [vmem:[%s3 + $0x18c] sm:$0xf] %v1607
  %1720 = vst [vmem:[%s3 + $0x190] sm:$0xf] %v1608
  %1721 = vst [vmem:[%s3 + $0x194] sm:$0xf] %v1609
  %1722 = vst [vmem:[%s3 + $0x198] sm:$0xf] %v1610
  %1723 = vst [vmem:[%s3 + $0x19c] sm:$0xf] %v1611
  %1724 = vst [vmem:[%s3 + $0x1a0] sm:$0xf] %v1612
  %1725 = vst [vmem:[%s3 + $0x1a4] sm:$0xf] %v1613
  %1726 = vst [vmem:[%s3 + $0x1a8] sm:$0xf] %v1614
  %1727 = vst [vmem:[%s3 + $0x1ac] sm:$0xf] %v1615
  %1728 = vst [vmem:[%s3 + $0x1b0] sm:$0xf] %v1616
  %1729 = vst [vmem:[%s3 + $0x1b4] sm:$0xf] %v1617
  %1730 = vst [vmem:[%s3 + $0x1b8] sm:$0xf] %v1618
  %1731 = vst [vmem:[%s3 + $0x1bc] sm:$0xf] %v1619
  // Predicated region
  $region14: #{deepmind_forward.3} parent=0 // pred_check
    _
  $region15: #{deepmind_forward.3} parent=0 // pred_check_branch
    %1733 = sbr.rel (0) target = $region17
  $region16: #{deepmind_forward.3} parent=0 // pred_region
    _
  $region17: #{deepmind_forward.3} parent=0 // pred_fallthru
    _
  // Predicated region
  $region18: #{deepmind_forward.3} parent=0 // pred_check
    _
  $region19: #{deepmind_forward.3} parent=0 // pred_check_branch
    %1735 = sbr.rel (0) target = $region21
  $region20: #{deepmind_forward.3} parent=0 // pred_region
    _
  $region21: #{deepmind_forward.3} parent=0 // pred_fallthru
    _

// kernel: deepmind_forward.4
$region0: #{deepmind_forward.4}
  #allocation0 [shape = 'u32[]', space=smem, size = 0x4, offset = 0x4, fixed_abs, tag = 'smem constant byte address 0x4 - core index']
  #allocation1 [shape = 'u32[72,128]{1,0:T(1,128)}', space=vmem, size = 0x9000, scoped, tag = 'internal scratch']
  %s0 = inlined_call_operand.vmem [shape: bf16[256,512], index: 0, kind: input, shape index: {}]
  %s1 = inlined_call_operand.vmem [shape: bf16[512,128], index: 1, kind: input, shape index: {}]
  %s2 = inlined_call_operand.vmem [shape: f32[1,128], index: 2, kind: input, shape index: {}]
  %s3 = inlined_call_operand.vmem [shape: bf16[256,128], index: 3, kind: output, shape index: {}]
  %s4 = sld [smem:[#allocation0]]
  $region22: #{deepmind_forward.4} parent=0
    _
  %s6 = ssub.s32 1, %s4
  %s7 = scalar_select 0, %s6, %s4
  // Predicated region
  $region2: #{deepmind_forward.4} parent=0 // pred_check
    _
  $region3: #{deepmind_forward.4} parent=0 // pred_check_branch
    %9 = sbr.rel (0) target = $region5
  $region4: #{deepmind_forward.4} parent=0 // pred_region
    _
  $region5: #{deepmind_forward.4} parent=0 // pred_fallthru
    _
  // Predicated region
  $region6: #{deepmind_forward.4} parent=0 // pred_check
    _
  $region7: #{deepmind_forward.4} parent=0 // pred_check_branch
    %11 = sbr.rel (0) target = $region9
  $region8: #{deepmind_forward.4} parent=0 // pred_region
    _
  $region9: #{deepmind_forward.4} parent=0 // pred_fallthru
    _
  // Predicated region
  $region10: #{deepmind_forward.4} parent=0 // pred_check
    _
  $region11: #{deepmind_forward.4} parent=0 // pred_check_branch
    %13 = sbr.rel (0) target = $region13
  $region12: #{deepmind_forward.4} parent=0 // pred_region
    _
  $region13: #{deepmind_forward.4} parent=0 // pred_fallthru
    _
  %v14 = vld [vmem:[%s0] sm:$0xff]
  %v15 = vld [vmem:[%s0 + $0x8] sm:$0xff]
  %v16 = vld [vmem:[%s0 + $0x10] sm:$0xff]
  %v17 = vld [vmem:[%s0 + $0x18] sm:$0xff]
  %v18 = vld [vmem:[%s0 + $0x20] sm:$0xff]
  %v19 = vld [vmem:[%s0 + $0x28] sm:$0xff]
  %v20 = vld [vmem:[%s0 + $0x30] sm:$0xff]
  %v21 = vld [vmem:[%s0 + $0x38] sm:$0xff]
  %v22 = vld [vmem:[%s0 + $0x40] sm:$0xff]
  %v23 = vld [vmem:[%s0 + $0x48] sm:$0xff]
  %v24 = vld [vmem:[%s0 + $0x50] sm:$0xff]
  %v25 = vld [vmem:[%s0 + $0x58] sm:$0xff]
  %v26 = vld [vmem:[%s0 + $0x60] sm:$0xff]
  %v27 = vld [vmem:[%s0 + $0x68] sm:$0xff]
  %v28 = vld [vmem:[%s0 + $0x70] sm:$0xff]
  %v29 = vld [vmem:[%s0 + $0x78] sm:$0xff]
  %v30 = vld [vmem:[%s0 + $0x80] sm:$0xff]
  %v31 = vld [vmem:[%s0 + $0x88] sm:$0xff]
  %v32 = vld [vmem:[%s0 + $0x90] sm:$0xff]
  %v33 = vld [vmem:[%s0 + $0x98] sm:$0xff]
  %v34 = vld [vmem:[%s0 + $0xa0] sm:$0xff]
  %v35 = vld [vmem:[%s0 + $0xa8] sm:$0xff]
  %v36 = vld [vmem:[%s0 + $0xb0] sm:$0xff]
  %v37 = vld [vmem:[%s0 + $0xb8] sm:$0xff]
  %v38 = vld [vmem:[%s0 + $0xc0] sm:$0xff]
  %v39 = vld [vmem:[%s0 + $0xc8] sm:$0xff]
  %v40 = vld [vmem:[%s0 + $0xd0] sm:$0xff]
  %v41 = vld [vmem:[%s0 + $0xd8] sm:$0xff]
  %v42 = vld [vmem:[%s0 + $0xe0] sm:$0xff]
  %v43 = vld [vmem:[%s0 + $0xe8] sm:$0xff]
  %v44 = vld [vmem:[%s0 + $0xf0] sm:$0xff]
  %v45 = vld [vmem:[%s0 + $0xf8] sm:$0xff]
  %v46 = vld [vmem:[%s0 + $0x100] sm:$0xff]
  %v47 = vld [vmem:[%s0 + $0x108] sm:$0xff]
  %v48 = vld [vmem:[%s0 + $0x110] sm:$0xff]
  %v49 = vld [vmem:[%s0 + $0x118] sm:$0xff]
  %v50 = vld [vmem:[%s0 + $0x120] sm:$0xff]
  %v51 = vld [vmem:[%s0 + $0x128] sm:$0xff]
  %v52 = vld [vmem:[%s0 + $0x130] sm:$0xff]
  %v53 = vld [vmem:[%s0 + $0x138] sm:$0xff]
  %v54 = vld [vmem:[%s0 + $0x140] sm:$0xff]
  %v55 = vld [vmem:[%s0 + $0x148] sm:$0xff]
  %v56 = vld [vmem:[%s0 + $0x150] sm:$0xff]
  %v57 = vld [vmem:[%s0 + $0x158] sm:$0xff]
  %v58 = vld [vmem:[%s0 + $0x160] sm:$0xff]
  %v59 = vld [vmem:[%s0 + $0x168] sm:$0xff]
  %v60 = vld [vmem:[%s0 + $0x170] sm:$0xff]
  %v61 = vld [vmem:[%s0 + $0x178] sm:$0xff]
  %v62 = vld [vmem:[%s0 + $0x180] sm:$0xff]
  %v63 = vld [vmem:[%s0 + $0x188] sm:$0xff]
  %v64 = vld [vmem:[%s0 + $0x190] sm:$0xff]
  %v65 = vld [vmem:[%s0 + $0x198] sm:$0xff]
  %v66 = vld [vmem:[%s0 + $0x1a0] sm:$0xff]
  %v67 = vld [vmem:[%s0 + $0x1a8] sm:$0xff]
  %v68 = vld [vmem:[%s0 + $0x1b0] sm:$0xff]
  %v69 = vld [vmem:[%s0 + $0x1b8] sm:$0xff]
  %v70 = vld [vmem:[%s0 + $0x1c0] sm:$0xff]
  %v71 = vld [vmem:[%s0 + $0x1c8] sm:$0xff]
  %v72 = vld [vmem:[%s0 + $0x1d0] sm:$0xff]
  %v73 = vld [vmem:[%s0 + $0x1d8] sm:$0xff]
  %v74 = vld [vmem:[%s0 + $0x1e0] sm:$0xff]
  %v75 = vld [vmem:[%s0 + $0x1e8] sm:$0xff]
  %v76 = vld [vmem:[%s0 + $0x1f0] sm:$0xff]
  %v77 = vld [vmem:[%s0 + $0x1f8] sm:$0xff]
  %v78 = vld [vmem:[%s1] sm:$0xf]
  %v79 = vld [vmem:[%s1 + $0x4] sm:$0xf]
  %v80 = vld [vmem:[%s1 + $0x8] sm:$0xf]
  %v81 = vld [vmem:[%s1 + $0xc] sm:$0xf]
  %v82 = vld [vmem:[%s1 + $0x10] sm:$0xf]
  %v83 = vld [vmem:[%s1 + $0x14] sm:$0xf]
  %v84 = vld [vmem:[%s1 + $0x18] sm:$0xf]
  %v85 = vld [vmem:[%s1 + $0x1c] sm:$0xf]
  %v86 = vld [vmem:[%s1 + $0x20] sm:$0xf]
  %v87 = vld [vmem:[%s1 + $0x24] sm:$0xf]
  %v88 = vld [vmem:[%s1 + $0x28] sm:$0xf]
  %v89 = vld [vmem:[%s1 + $0x2c] sm:$0xf]
  %v90 = vld [vmem:[%s1 + $0x30] sm:$0xf]
  %v91 = vld [vmem:[%s1 + $0x34] sm:$0xf]
  %v92 = vld [vmem:[%s1 + $0x38] sm:$0xf]
  %v93 = vld [vmem:[%s1 + $0x3c] sm:$0xf]
  %v94 = vld [vmem:[%s1 + $0x40] sm:$0xf]
  %v95 = vld [vmem:[%s1 + $0x44] sm:$0xf]
  %v96 = vld [vmem:[%s1 + $0x48] sm:$0xf]
  %v97 = vld [vmem:[%s1 + $0x4c] sm:$0xf]
  %v98 = vld [vmem:[%s1 + $0x50] sm:$0xf]
  %v99 = vld [vmem:[%s1 + $0x54] sm:$0xf]
  %v100 = vld [vmem:[%s1 + $0x58] sm:$0xf]
  %v101 = vld [vmem:[%s1 + $0x5c] sm:$0xf]
  %v102 = vld [vmem:[%s1 + $0x60] sm:$0xf]
  %v103 = vld [vmem:[%s1 + $0x64] sm:$0xf]
  %v104 = vld [vmem:[%s1 + $0x68] sm:$0xf]
  %v105 = vld [vmem:[%s1 + $0x6c] sm:$0xf]
  %v106 = vld [vmem:[%s1 + $0x70] sm:$0xf]
  %v107 = vld [vmem:[%s1 + $0x74] sm:$0xf]
  %v108 = vld [vmem:[%s1 + $0x78] sm:$0xf]
  %v109 = vld [vmem:[%s1 + $0x7c] sm:$0xf]
  %v110 = vld [vmem:[%s1 + $0x80] sm:$0xf]
  %v111 = vld [vmem:[%s1 + $0x84] sm:$0xf]
  %v112 = vld [vmem:[%s1 + $0x88] sm:$0xf]
  %v113 = vld [vmem:[%s1 + $0x8c] sm:$0xf]
  %v114 = vld [vmem:[%s1 + $0x90] sm:$0xf]
  %v115 = vld [vmem:[%s1 + $0x94] sm:$0xf]
  %v116 = vld [vmem:[%s1 + $0x98] sm:$0xf]
  %v117 = vld [vmem:[%s1 + $0x9c] sm:$0xf]
  %v118 = vld [vmem:[%s1 + $0xa0] sm:$0xf]
  %v119 = vld [vmem:[%s1 + $0xa4] sm:$0xf]
  %v120 = vld [vmem:[%s1 + $0xa8] sm:$0xf]
  %v121 = vld [vmem:[%s1 + $0xac] sm:$0xf]
  %v122 = vld [vmem:[%s1 + $0xb0] sm:$0xf]
  %v123 = vld [vmem:[%s1 + $0xb4] sm:$0xf]
  %v124 = vld [vmem:[%s1 + $0xb8] sm:$0xf]
  %v125 = vld [vmem:[%s1 + $0xbc] sm:$0xf]
  %v126 = vld [vmem:[%s1 + $0xc0] sm:$0xf]
  %v127 = vld [vmem:[%s1 + $0xc4] sm:$0xf]
  %v128 = vld [vmem:[%s1 + $0xc8] sm:$0xf]
  %v129 = vld [vmem:[%s1 + $0xcc] sm:$0xf]
  %v130 = vld [vmem:[%s1 + $0xd0] sm:$0xf]
  %v131 = vld [vmem:[%s1 + $0xd4] sm:$0xf]
  %v132 = vld [vmem:[%s1 + $0xd8] sm:$0xf]
  %v133 = vld [vmem:[%s1 + $0xdc] sm:$0xf]
  %v134 = vld [vmem:[%s1 + $0xe0] sm:$0xf]
  %v135 = vld [vmem:[%s1 + $0xe4] sm:$0xf]
  %v136 = vld [vmem:[%s1 + $0xe8] sm:$0xf]
  %v137 = vld [vmem:[%s1 + $0xec] sm:$0xf]
  %v138 = vld [vmem:[%s1 + $0xf0] sm:$0xf]
  %v139 = vld [vmem:[%s1 + $0xf4] sm:$0xf]
  %v140 = vld [vmem:[%s1 + $0xf8] sm:$0xf]
  %v141 = vld [vmem:[%s1 + $0xfc] sm:$0xf]
  %v142 = vld [vmem:[%s2] sm:$0x1]
  %v144 = vperm.slane %v142, 0
  %v210 = vunpack.c.l.b16 %v14
  %v211 = vunpack.c.h.b16 %v14
  %v212 = vunpack.c.l.b16 %v15
  %v213 = vunpack.c.h.b16 %v15
  %v214 = vunpack.c.l.b16 %v16
  %v215 = vunpack.c.h.b16 %v16
  %v216 = vunpack.c.l.b16 %v17
  %v217 = vunpack.c.h.b16 %v17
  %v218 = vunpack.c.l.b16 %v18
  %v219 = vunpack.c.h.b16 %v18
  %v220 = vunpack.c.l.b16 %v19
  %v221 = vunpack.c.h.b16 %v19
  %v222 = vunpack.c.l.b16 %v20
  %v223 = vunpack.c.h.b16 %v20
  %v224 = vunpack.c.l.b16 %v21
  %v225 = vunpack.c.h.b16 %v21
  %v226 = vunpack.c.l.b16 %v22
  %v227 = vunpack.c.h.b16 %v22
  %v228 = vunpack.c.l.b16 %v23
  %v229 = vunpack.c.h.b16 %v23
  %v230 = vunpack.c.l.b16 %v24
  %v231 = vunpack.c.h.b16 %v24
  %v232 = vunpack.c.l.b16 %v25
  %v233 = vunpack.c.h.b16 %v25
  %v234 = vunpack.c.l.b16 %v26
  %v235 = vunpack.c.h.b16 %v26
  %v236 = vunpack.c.l.b16 %v27
  %v237 = vunpack.c.h.b16 %v27
  %v238 = vunpack.c.l.b16 %v28
  %v239 = vunpack.c.h.b16 %v28
  %v240 = vunpack.c.l.b16 %v29
  %v241 = vunpack.c.h.b16 %v29
  %v242 = vunpack.c.l.b16 %v30
  %v243 = vunpack.c.h.b16 %v30
  %v244 = vunpack.c.l.b16 %v31
  %v245 = vunpack.c.h.b16 %v31
  %v246 = vunpack.c.l.b16 %v32
  %v247 = vunpack.c.h.b16 %v32
  %v248 = vunpack.c.l.b16 %v33
  %v249 = vunpack.c.h.b16 %v33
  %v250 = vunpack.c.l.b16 %v34
  %v251 = vunpack.c.h.b16 %v34
  %v252 = vunpack.c.l.b16 %v35
  %v253 = vunpack.c.h.b16 %v35
  %v254 = vunpack.c.l.b16 %v36
  %v255 = vunpack.c.h.b16 %v36
  %v256 = vunpack.c.l.b16 %v37
  %v257 = vunpack.c.h.b16 %v37
  %v258 = vunpack.c.l.b16 %v38
  %v259 = vunpack.c.h.b16 %v38
  %v260 = vunpack.c.l.b16 %v39
  %v261 = vunpack.c.h.b16 %v39
  %v262 = vunpack.c.l.b16 %v40
  %v263 = vunpack.c.h.b16 %v40
  %v264 = vunpack.c.l.b16 %v41
  %v265 = vunpack.c.h.b16 %v41
  %v266 = vunpack.c.l.b16 %v42
  %v267 = vunpack.c.h.b16 %v42
  %v268 = vunpack.c.l.b16 %v43
  %v269 = vunpack.c.h.b16 %v43
  %v270 = vunpack.c.l.b16 %v44
  %v271 = vunpack.c.h.b16 %v44
  %v272 = vunpack.c.l.b16 %v45
  %v273 = vunpack.c.h.b16 %v45
  %v274 = vunpack.c.l.b16 %v46
  %v275 = vunpack.c.h.b16 %v46
  %v276 = vunpack.c.l.b16 %v47
  %v277 = vunpack.c.h.b16 %v47
  %v278 = vunpack.c.l.b16 %v48
  %v279 = vunpack.c.h.b16 %v48
  %v280 = vunpack.c.l.b16 %v49
  %v281 = vunpack.c.h.b16 %v49
  %v282 = vunpack.c.l.b16 %v50
  %v283 = vunpack.c.h.b16 %v50
  %v284 = vunpack.c.l.b16 %v51
  %v285 = vunpack.c.h.b16 %v51
  %v286 = vunpack.c.l.b16 %v52
  %v287 = vunpack.c.h.b16 %v52
  %v288 = vunpack.c.l.b16 %v53
  %v289 = vunpack.c.h.b16 %v53
  %v290 = vunpack.c.l.b16 %v54
  %v291 = vunpack.c.h.b16 %v54
  %v292 = vunpack.c.l.b16 %v55
  %v293 = vunpack.c.h.b16 %v55
  %v294 = vunpack.c.l.b16 %v56
  %v295 = vunpack.c.h.b16 %v56
  %v296 = vunpack.c.l.b16 %v57
  %v297 = vunpack.c.h.b16 %v57
  %v298 = vunpack.c.l.b16 %v58
  %v299 = vunpack.c.h.b16 %v58
  %v300 = vunpack.c.l.b16 %v59
  %v301 = vunpack.c.h.b16 %v59
  %v302 = vunpack.c.l.b16 %v60
  %v303 = vunpack.c.h.b16 %v60
  %v304 = vunpack.c.l.b16 %v61
  %v305 = vunpack.c.h.b16 %v61
  %v306 = vunpack.c.l.b16 %v62
  %v307 = vunpack.c.h.b16 %v62
  %v308 = vunpack.c.l.b16 %v63
  %v309 = vunpack.c.h.b16 %v63
  %v310 = vunpack.c.l.b16 %v64
  %v311 = vunpack.c.h.b16 %v64
  %v312 = vunpack.c.l.b16 %v65
  %v313 = vunpack.c.h.b16 %v65
  %v314 = vunpack.c.l.b16 %v66
  %v315 = vunpack.c.h.b16 %v66
  %v316 = vunpack.c.l.b16 %v67
  %v317 = vunpack.c.h.b16 %v67
  %v318 = vunpack.c.l.b16 %v68
  %v319 = vunpack.c.h.b16 %v68
  %v320 = vunpack.c.l.b16 %v69
  %v321 = vunpack.c.h.b16 %v69
  %v322 = vunpack.c.l.b16 %v70
  %v323 = vunpack.c.h.b16 %v70
  %v324 = vunpack.c.l.b16 %v71
  %v325 = vunpack.c.h.b16 %v71
  %v326 = vunpack.c.l.b16 %v72
  %v327 = vunpack.c.h.b16 %v72
  %v328 = vunpack.c.l.b16 %v73
  %v329 = vunpack.c.h.b16 %v73
  %v330 = vunpack.c.l.b16 %v74
  %v331 = vunpack.c.h.b16 %v74
  %v332 = vunpack.c.l.b16 %v75
  %v333 = vunpack.c.h.b16 %v75
  %v334 = vunpack.c.l.b16 %v76
  %v335 = vunpack.c.h.b16 %v76
  %v336 = vunpack.c.l.b16 %v77
  %v337 = vunpack.c.h.b16 %v77
  %v338 = vpack.c.b16 %v214, %v210
  %v339 = vpack.c.b16 %v215, %v211
  %v340 = vpack.c.b16 %v216, %v212
  %v341 = vpack.c.b16 %v217, %v213
  %v342 = vpack.c.b16 %v222, %v218
  %v343 = vpack.c.b16 %v223, %v219
  %v344 = vpack.c.b16 %v224, %v220
  %v345 = vpack.c.b16 %v225, %v221
  %v346 = vpack.c.b16 %v230, %v226
  %v347 = vpack.c.b16 %v231, %v227
  %v348 = vpack.c.b16 %v232, %v228
  %v349 = vpack.c.b16 %v233, %v229
  %v350 = vpack.c.b16 %v238, %v234
  %v351 = vpack.c.b16 %v239, %v235
  %v352 = vpack.c.b16 %v240, %v236
  %v353 = vpack.c.b16 %v241, %v237
  %v354 = vpack.c.b16 %v246, %v242
  %v355 = vpack.c.b16 %v247, %v243
  %v356 = vpack.c.b16 %v248, %v244
  %v357 = vpack.c.b16 %v249, %v245
  %v358 = vpack.c.b16 %v254, %v250
  %v359 = vpack.c.b16 %v255, %v251
  %v360 = vpack.c.b16 %v256, %v252
  %v361 = vpack.c.b16 %v257, %v253
  %v362 = vpack.c.b16 %v262, %v258
  %v363 = vpack.c.b16 %v263, %v259
  %v364 = vpack.c.b16 %v264, %v260
  %v365 = vpack.c.b16 %v265, %v261
  %v366 = vpack.c.b16 %v270, %v266
  %v367 = vpack.c.b16 %v271, %v267
  %v368 = vpack.c.b16 %v272, %v268
  %v369 = vpack.c.b16 %v273, %v269
  %v370 = vpack.c.b16 %v278, %v274
  %v371 = vpack.c.b16 %v279, %v275
  %v372 = vpack.c.b16 %v280, %v276
  %v373 = vpack.c.b16 %v281, %v277
  %v374 = vpack.c.b16 %v286, %v282
  %v375 = vpack.c.b16 %v287, %v283
  %v376 = vpack.c.b16 %v288, %v284
  %v377 = vpack.c.b16 %v289, %v285
  %v378 = vpack.c.b16 %v294, %v290
  %v379 = vpack.c.b16 %v295, %v291
  %v380 = vpack.c.b16 %v296, %v292
  %v381 = vpack.c.b16 %v297, %v293
  %v382 = vpack.c.b16 %v302, %v298
  %v383 = vpack.c.b16 %v303, %v299
  %v384 = vpack.c.b16 %v304, %v300
  %v385 = vpack.c.b16 %v305, %v301
  %v386 = vpack.c.b16 %v310, %v306
  %v387 = vpack.c.b16 %v311, %v307
  %v388 = vpack.c.b16 %v312, %v308
  %v389 = vpack.c.b16 %v313, %v309
  %v390 = vpack.c.b16 %v318, %v314
  %v391 = vpack.c.b16 %v319, %v315
  %v392 = vpack.c.b16 %v320, %v316
  %v393 = vpack.c.b16 %v321, %v317
  %v394 = vpack.c.b16 %v326, %v322
  %v395 = vpack.c.b16 %v327, %v323
  %v396 = vpack.c.b16 %v328, %v324
  %v397 = vpack.c.b16 %v329, %v325
  %v398 = vpack.c.b16 %v334, %v330
  %v399 = vpack.c.b16 %v335, %v331
  %v400 = vpack.c.b16 %v336, %v332
  %v401 = vpack.c.b16 %v337, %v333
  %v530 = vunpack.c.l.b16 %v78
  %v531 = vunpack.c.l.b16 %v79
  %v532 = vunpack.c.l.b16 %v80
  %v533 = vunpack.c.l.b16 %v81
  %v534 = vunpack.c.l.b16 %v82
  %v535 = vunpack.c.l.b16 %v83
  %v536 = vunpack.c.l.b16 %v84
  %v537 = vunpack.c.l.b16 %v85
  %v538 = vunpack.c.l.b16 %v86
  %v539 = vunpack.c.l.b16 %v87
  %v540 = vunpack.c.l.b16 %v88
  %v541 = vunpack.c.l.b16 %v89
  %v542 = vunpack.c.l.b16 %v90
  %v543 = vunpack.c.l.b16 %v91
  %v544 = vunpack.c.l.b16 %v92
  %v545 = vunpack.c.l.b16 %v93
  %v546 = vunpack.c.l.b16 %v94
  %v547 = vunpack.c.l.b16 %v95
  %v548 = vunpack.c.l.b16 %v96
  %v549 = vunpack.c.l.b16 %v97
  %v550 = vunpack.c.l.b16 %v98
  %v551 = vunpack.c.l.b16 %v99
  %v552 = vunpack.c.l.b16 %v100
  %v553 = vunpack.c.l.b16 %v101
  %v554 = vunpack.c.l.b16 %v102
  %v555 = vunpack.c.l.b16 %v103
  %v556 = vunpack.c.l.b16 %v104
  %v557 = vunpack.c.l.b16 %v105
  %v558 = vunpack.c.l.b16 %v106
  %v559 = vunpack.c.l.b16 %v107
  %v560 = vunpack.c.l.b16 %v108
  %v561 = vunpack.c.l.b16 %v109
  %v562 = vunpack.c.l.b16 %v110
  %v563 = vunpack.c.l.b16 %v111
  %v564 = vunpack.c.l.b16 %v112
  %v565 = vunpack.c.l.b16 %v113
  %v566 = vunpack.c.l.b16 %v114
  %v567 = vunpack.c.l.b16 %v115
  %v568 = vunpack.c.l.b16 %v116
  %v569 = vunpack.c.l.b16 %v117
  %v570 = vunpack.c.l.b16 %v118
  %v571 = vunpack.c.l.b16 %v119
  %v572 = vunpack.c.l.b16 %v120
  %v573 = vunpack.c.l.b16 %v121
  %v574 = vunpack.c.l.b16 %v122
  %v575 = vunpack.c.l.b16 %v123
  %v576 = vunpack.c.l.b16 %v124
  %v577 = vunpack.c.l.b16 %v125
  %v578 = vunpack.c.l.b16 %v126
  %v579 = vunpack.c.l.b16 %v127
  %v580 = vunpack.c.l.b16 %v128
  %v581 = vunpack.c.l.b16 %v129
  %v582 = vunpack.c.l.b16 %v130
  %v583 = vunpack.c.l.b16 %v131
  %v584 = vunpack.c.l.b16 %v132
  %v585 = vunpack.c.l.b16 %v133
  %v586 = vunpack.c.l.b16 %v134
  %v587 = vunpack.c.l.b16 %v135
  %v588 = vunpack.c.l.b16 %v136
  %v589 = vunpack.c.l.b16 %v137
  %v590 = vunpack.c.l.b16 %v138
  %v591 = vunpack.c.l.b16 %v139
  %v592 = vunpack.c.l.b16 %v140
  %v593 = vunpack.c.l.b16 %v141
  %v594 = vpack.c.b16 %v531, %v530
  %v595 = vpack.c.b16 %v533, %v532
  %v596 = vpack.c.b16 %v535, %v534
  %v597 = vpack.c.b16 %v537, %v536
  %v598 = vpack.c.b16 %v539, %v538
  %v599 = vpack.c.b16 %v541, %v540
  %v600 = vpack.c.b16 %v543, %v542
  %v601 = vpack.c.b16 %v545, %v544
  %v602 = vpack.c.b16 %v547, %v546
  %v603 = vpack.c.b16 %v549, %v548
  %v604 = vpack.c.b16 %v551, %v550
  %v605 = vpack.c.b16 %v553, %v552
  %v606 = vpack.c.b16 %v555, %v554
  %v607 = vpack.c.b16 %v557, %v556
  %v608 = vpack.c.b16 %v559, %v558
  %v609 = vpack.c.b16 %v561, %v560
  %v610 = vpack.c.b16 %v563, %v562
  %v611 = vpack.c.b16 %v565, %v564
  %v612 = vpack.c.b16 %v567, %v566
  %v613 = vpack.c.b16 %v569, %v568
  %v614 = vpack.c.b16 %v571, %v570
  %v615 = vpack.c.b16 %v573, %v572
  %v616 = vpack.c.b16 %v575, %v574
  %v617 = vpack.c.b16 %v577, %v576
  %v618 = vpack.c.b16 %v579, %v578
  %v619 = vpack.c.b16 %v581, %v580
  %v620 = vpack.c.b16 %v583, %v582
  %v621 = vpack.c.b16 %v585, %v584
  %v622 = vpack.c.b16 %v587, %v586
  %v623 = vpack.c.b16 %v589, %v588
  %v624 = vpack.c.b16 %v591, %v590
  %v625 = vpack.c.b16 %v593, %v592
  %658 = vmatpush.bf16.msra.mxu0 %v601
  %659 = vmatpush.bf16.msra.mxu0 %v600
  %660 = vmatpush.bf16.msra.mxu0 %v599
  %661 = vmatpush.bf16.msra.mxu0 %v598
  %662 = vmatpush.bf16.msra.mxu0 %v597
  %663 = vmatpush.bf16.msra.mxu0 %v596
  %664 = vmatpush.bf16.msra.mxu0 %v595
  %665 = vmatpush.bf16.msra.mxu0 %v594
  %666 = vmatmul.bf16.gmra.mxu0 %v338
  %v667 = vpop.f32.mrf.mxu0
  %v668 = vadd.f32 %v144, %v667
  %v669 = vpop.f32.mrf.mxu0
  %v670 = vadd.f32 %v144, %v669
  %671 = vmatmul.bf16.gmra.mxu0 %v342
  %v672 = vpop.f32.mrf.mxu0
  %v673 = vadd.f32 %v144, %v672
  %v674 = vpop.f32.mrf.mxu0
  %v675 = vadd.f32 %v144, %v674
  %676 = vmatmul.bf16.gmra.mxu0 %v346
  %v677 = vpop.f32.mrf.mxu0
  %v678 = vadd.f32 %v144, %v677
  %v679 = vpop.f32.mrf.mxu0
  %v680 = vadd.f32 %v144, %v679
  %681 = vmatmul.bf16.gmra.mxu0 %v350
  %v682 = vpop.f32.mrf.mxu0
  %v683 = vadd.f32 %v144, %v682
  %v684 = vpop.f32.mrf.mxu0
  %v685 = vadd.f32 %v144, %v684
  %686 = vmatmul.bf16.gmra.mxu0 %v354
  %v687 = vpop.f32.mrf.mxu0
  %v688 = vadd.f32 %v144, %v687
  %v689 = vpop.f32.mrf.mxu0
  %v690 = vadd.f32 %v144, %v689
  %691 = vmatmul.bf16.gmra.mxu0 %v358
  %v692 = vpop.f32.mrf.mxu0
  %v693 = vadd.f32 %v144, %v692
  %v694 = vpop.f32.mrf.mxu0
  %v695 = vadd.f32 %v144, %v694
  %696 = vmatmul.bf16.gmra.mxu0 %v362
  %v697 = vpop.f32.mrf.mxu0
  %v698 = vadd.f32 %v144, %v697
  %v699 = vpop.f32.mrf.mxu0
  %v700 = vadd.f32 %v144, %v699
  %701 = vmatmul.bf16.gmra.mxu0 %v366
  %v702 = vpop.f32.mrf.mxu0
  %v703 = vadd.f32 %v144, %v702
  %v704 = vpop.f32.mrf.mxu0
  %v705 = vadd.f32 %v144, %v704
  %706 = vmatmul.bf16.gmra.mxu0 %v370
  %v707 = vpop.f32.mrf.mxu0
  %v708 = vadd.f32 %v144, %v707
  %v709 = vpop.f32.mrf.mxu0
  %v710 = vadd.f32 %v144, %v709
  %711 = vmatmul.bf16.gmra.mxu0 %v374
  %v712 = vpop.f32.mrf.mxu0
  %v713 = vadd.f32 %v144, %v712
  %v714 = vpop.f32.mrf.mxu0
  %v715 = vadd.f32 %v144, %v714
  %716 = vmatmul.bf16.gmra.mxu0 %v378
  %v717 = vpop.f32.mrf.mxu0
  %v718 = vadd.f32 %v144, %v717
  %v719 = vpop.f32.mrf.mxu0
  %v720 = vadd.f32 %v144, %v719
  %721 = vmatmul.bf16.gmra.mxu0 %v382
  %v722 = vpop.f32.mrf.mxu0
  %v723 = vadd.f32 %v144, %v722
  %v724 = vpop.f32.mrf.mxu0
  %v725 = vadd.f32 %v144, %v724
  %726 = vmatmul.bf16.gmra.mxu0 %v386
  %v727 = vpop.f32.mrf.mxu0
  %v728 = vadd.f32 %v144, %v727
  %v729 = vpop.f32.mrf.mxu0
  %v730 = vadd.f32 %v144, %v729
  %731 = vmatmul.bf16.gmra.mxu0 %v390
  %v732 = vpop.f32.mrf.mxu0
  %v733 = vadd.f32 %v144, %v732
  %v734 = vpop.f32.mrf.mxu0
  %v735 = vadd.f32 %v144, %v734
  %736 = vmatmul.bf16.gmra.mxu0 %v394
  %v737 = vpop.f32.mrf.mxu0
  %v738 = vadd.f32 %v144, %v737
  %v739 = vpop.f32.mrf.mxu0
  %v740 = vadd.f32 %v144, %v739
  %741 = vmatmul.bf16.gmra.mxu0 %v398
  %v742 = vpop.f32.mrf.mxu0
  %v743 = vadd.f32 %v144, %v742
  %v744 = vpop.f32.mrf.mxu0
  %v745 = vadd.f32 %v144, %v744
  %746 = vdwg.mxu0
  %747 = vmatpush.bf16.msra.mxu0 %v609
  %748 = vmatpush.bf16.msra.mxu0 %v608
  %749 = vmatpush.bf16.msra.mxu0 %v607
  %750 = vmatpush.bf16.msra.mxu0 %v606
  %751 = vmatpush.bf16.msra.mxu0 %v605
  %752 = vmatpush.bf16.msra.mxu0 %v604
  %753 = vmatpush.bf16.msra.mxu0 %v603
  %754 = vmatpush.bf16.msra.mxu0 %v602
  %755 = vmatmul.bf16.gmra.mxu0 %v339
  %v756 = vpop.f32.mrf.mxu0
  %v757 = vadd.f32 %v668, %v756
  %v758 = vpop.f32.mrf.mxu0
  %v759 = vadd.f32 %v670, %v758
  %760 = vmatmul.bf16.gmra.mxu0 %v343
  %v761 = vpop.f32.mrf.mxu0
  %v762 = vadd.f32 %v673, %v761
  %v763 = vpop.f32.mrf.mxu0
  %v764 = vadd.f32 %v675, %v763
  %765 = vmatmul.bf16.gmra.mxu0 %v347
  %v766 = vpop.f32.mrf.mxu0
  %v767 = vadd.f32 %v678, %v766
  %v768 = vpop.f32.mrf.mxu0
  %v769 = vadd.f32 %v680, %v768
  %770 = vmatmul.bf16.gmra.mxu0 %v351
  %v771 = vpop.f32.mrf.mxu0
  %v772 = vadd.f32 %v683, %v771
  %v773 = vpop.f32.mrf.mxu0
  %v774 = vadd.f32 %v685, %v773
  %775 = vmatmul.bf16.gmra.mxu0 %v355
  %v776 = vpop.f32.mrf.mxu0
  %v777 = vadd.f32 %v688, %v776
  %v778 = vpop.f32.mrf.mxu0
  %v779 = vadd.f32 %v690, %v778
  %780 = vmatmul.bf16.gmra.mxu0 %v359
  %v781 = vpop.f32.mrf.mxu0
  %v782 = vadd.f32 %v693, %v781
  %v783 = vpop.f32.mrf.mxu0
  %v784 = vadd.f32 %v695, %v783
  %785 = vmatmul.bf16.gmra.mxu0 %v363
  %v786 = vpop.f32.mrf.mxu0
  %v787 = vadd.f32 %v698, %v786
  %v788 = vpop.f32.mrf.mxu0
  %v789 = vadd.f32 %v700, %v788
  %790 = vmatmul.bf16.gmra.mxu0 %v367
  %v791 = vpop.f32.mrf.mxu0
  %v792 = vadd.f32 %v703, %v791
  %v793 = vpop.f32.mrf.mxu0
  %v794 = vadd.f32 %v705, %v793
  %795 = vmatmul.bf16.gmra.mxu0 %v371
  %v796 = vpop.f32.mrf.mxu0
  %v797 = vadd.f32 %v708, %v796
  %v798 = vpop.f32.mrf.mxu0
  %v799 = vadd.f32 %v710, %v798
  %800 = vmatmul.bf16.gmra.mxu0 %v375
  %v801 = vpop.f32.mrf.mxu0
  %v802 = vadd.f32 %v713, %v801
  %v803 = vpop.f32.mrf.mxu0
  %v804 = vadd.f32 %v715, %v803
  %805 = vmatmul.bf16.gmra.mxu0 %v379
  %v806 = vpop.f32.mrf.mxu0
  %v807 = vadd.f32 %v718, %v806
  %v808 = vpop.f32.mrf.mxu0
  %v809 = vadd.f32 %v720, %v808
  %810 = vmatmul.bf16.gmra.mxu0 %v383
  %v811 = vpop.f32.mrf.mxu0
  %v812 = vadd.f32 %v723, %v811
  %v813 = vpop.f32.mrf.mxu0
  %v814 = vadd.f32 %v725, %v813
  %815 = vmatmul.bf16.gmra.mxu0 %v387
  %v816 = vpop.f32.mrf.mxu0
  %v817 = vadd.f32 %v728, %v816
  %v818 = vpop.f32.mrf.mxu0
  %v819 = vadd.f32 %v730, %v818
  %820 = vmatmul.bf16.gmra.mxu0 %v391
  %v821 = vpop.f32.mrf.mxu0
  %v822 = vadd.f32 %v733, %v821
  %v823 = vpop.f32.mrf.mxu0
  %v824 = vadd.f32 %v735, %v823
  %825 = vmatmul.bf16.gmra.mxu0 %v395
  %v826 = vpop.f32.mrf.mxu0
  %v827 = vadd.f32 %v738, %v826
  %v828 = vpop.f32.mrf.mxu0
  %v829 = vadd.f32 %v740, %v828
  %830 = vmatmul.bf16.gmra.mxu0 %v399
  %v831 = vpop.f32.mrf.mxu0
  %v832 = vadd.f32 %v743, %v831
  %v833 = vpop.f32.mrf.mxu0
  %v834 = vadd.f32 %v745, %v833
  %835 = vdwg.mxu0
  %836 = vmatpush.bf16.msra.mxu0 %v617
  %837 = vmatpush.bf16.msra.mxu0 %v616
  %838 = vmatpush.bf16.msra.mxu0 %v615
  %839 = vmatpush.bf16.msra.mxu0 %v614
  %840 = vmatpush.bf16.msra.mxu0 %v613
  %841 = vmatpush.bf16.msra.mxu0 %v612
  %842 = vmatpush.bf16.msra.mxu0 %v611
  %843 = vmatpush.bf16.msra.mxu0 %v610
  %844 = vmatmul.bf16.gmra.mxu0 %v340
  %v845 = vpop.f32.mrf.mxu0
  %v846 = vadd.f32 %v757, %v845
  %v847 = vpop.f32.mrf.mxu0
  %v848 = vadd.f32 %v759, %v847
  %849 = vmatmul.bf16.gmra.mxu0 %v344
  %v850 = vpop.f32.mrf.mxu0
  %v851 = vadd.f32 %v762, %v850
  %v852 = vpop.f32.mrf.mxu0
  %v853 = vadd.f32 %v764, %v852
  %854 = vmatmul.bf16.gmra.mxu0 %v348
  %v855 = vpop.f32.mrf.mxu0
  %v856 = vadd.f32 %v767, %v855
  %v857 = vpop.f32.mrf.mxu0
  %v858 = vadd.f32 %v769, %v857
  %859 = vmatmul.bf16.gmra.mxu0 %v352
  %v860 = vpop.f32.mrf.mxu0
  %v861 = vadd.f32 %v772, %v860
  %v862 = vpop.f32.mrf.mxu0
  %v863 = vadd.f32 %v774, %v862
  %864 = vmatmul.bf16.gmra.mxu0 %v356
  %v865 = vpop.f32.mrf.mxu0
  %v866 = vadd.f32 %v777, %v865
  %v867 = vpop.f32.mrf.mxu0
  %v868 = vadd.f32 %v779, %v867
  %869 = vmatmul.bf16.gmra.mxu0 %v360
  %v870 = vpop.f32.mrf.mxu0
  %v871 = vadd.f32 %v782, %v870
  %v872 = vpop.f32.mrf.mxu0
  %v873 = vadd.f32 %v784, %v872
  %874 = vmatmul.bf16.gmra.mxu0 %v364
  %v875 = vpop.f32.mrf.mxu0
  %v876 = vadd.f32 %v787, %v875
  %v877 = vpop.f32.mrf.mxu0
  %v878 = vadd.f32 %v789, %v877
  %879 = vmatmul.bf16.gmra.mxu0 %v368
  %v880 = vpop.f32.mrf.mxu0
  %v881 = vadd.f32 %v792, %v880
  %v882 = vpop.f32.mrf.mxu0
  %v883 = vadd.f32 %v794, %v882
  %884 = vmatmul.bf16.gmra.mxu0 %v372
  %v885 = vpop.f32.mrf.mxu0
  %v886 = vadd.f32 %v797, %v885
  %v887 = vpop.f32.mrf.mxu0
  %v888 = vadd.f32 %v799, %v887
  %889 = vmatmul.bf16.gmra.mxu0 %v376
  %v890 = vpop.f32.mrf.mxu0
  %v891 = vadd.f32 %v802, %v890
  %v892 = vpop.f32.mrf.mxu0
  %v893 = vadd.f32 %v804, %v892
  %894 = vmatmul.bf16.gmra.mxu0 %v380
  %v895 = vpop.f32.mrf.mxu0
  %v896 = vadd.f32 %v807, %v895
  %v897 = vpop.f32.mrf.mxu0
  %v898 = vadd.f32 %v809, %v897
  %899 = vmatmul.bf16.gmra.mxu0 %v384
  %v900 = vpop.f32.mrf.mxu0
  %v901 = vadd.f32 %v812, %v900
  %v902 = vpop.f32.mrf.mxu0
  %v903 = vadd.f32 %v814, %v902
  %904 = vmatmul.bf16.gmra.mxu0 %v388
  %v905 = vpop.f32.mrf.mxu0
  %v906 = vadd.f32 %v817, %v905
  %v907 = vpop.f32.mrf.mxu0
  %v908 = vadd.f32 %v819, %v907
  %909 = vmatmul.bf16.gmra.mxu0 %v392
  %v910 = vpop.f32.mrf.mxu0
  %v911 = vadd.f32 %v822, %v910
  %v912 = vpop.f32.mrf.mxu0
  %v913 = vadd.f32 %v824, %v912
  %914 = vmatmul.bf16.gmra.mxu0 %v396
  %v915 = vpop.f32.mrf.mxu0
  %v916 = vadd.f32 %v827, %v915
  %v917 = vpop.f32.mrf.mxu0
  %v918 = vadd.f32 %v829, %v917
  %919 = vmatmul.bf16.gmra.mxu0 %v400
  %v920 = vpop.f32.mrf.mxu0
  %v921 = vadd.f32 %v832, %v920
  %v922 = vpop.f32.mrf.mxu0
  %v923 = vadd.f32 %v834, %v922
  %924 = vdwg.mxu0
  %925 = vmatpush.bf16.msra.mxu0 %v625
  %926 = vmatpush.bf16.msra.mxu0 %v624
  %927 = vmatpush.bf16.msra.mxu0 %v623
  %928 = vmatpush.bf16.msra.mxu0 %v622
  %929 = vmatpush.bf16.msra.mxu0 %v621
  %930 = vmatpush.bf16.msra.mxu0 %v620
  %931 = vmatpush.bf16.msra.mxu0 %v619
  %932 = vmatpush.bf16.msra.mxu0 %v618
  %933 = vmatmul.bf16.gmra.mxu0 %v341
  %v934 = vpop.f32.mrf.mxu0
  %v935 = vadd.f32 %v846, %v934
  %v936 = vpop.f32.mrf.mxu0
  %v937 = vadd.f32 %v848, %v936
  %938 = vmatmul.bf16.gmra.mxu0 %v345
  %v939 = vpop.f32.mrf.mxu0
  %v940 = vadd.f32 %v851, %v939
  %v941 = vpop.f32.mrf.mxu0
  %v942 = vadd.f32 %v853, %v941
  %943 = vmatmul.bf16.gmra.mxu0 %v349
  %v944 = vpop.f32.mrf.mxu0
  %v945 = vadd.f32 %v856, %v944
  %v946 = vpop.f32.mrf.mxu0
  %v947 = vadd.f32 %v858, %v946
  %948 = vmatmul.bf16.gmra.mxu0 %v353
  %v949 = vpop.f32.mrf.mxu0
  %v950 = vadd.f32 %v861, %v949
  %v951 = vpop.f32.mrf.mxu0
  %v952 = vadd.f32 %v863, %v951
  %953 = vmatmul.bf16.gmra.mxu0 %v357
  %v954 = vpop.f32.mrf.mxu0
  %v955 = vadd.f32 %v866, %v954
  %v956 = vpop.f32.mrf.mxu0
  %v957 = vadd.f32 %v868, %v956
  %958 = vmatmul.bf16.gmra.mxu0 %v361
  %v959 = vpop.f32.mrf.mxu0
  %v960 = vadd.f32 %v871, %v959
  %v961 = vpop.f32.mrf.mxu0
  %v962 = vadd.f32 %v873, %v961
  %963 = vmatmul.bf16.gmra.mxu0 %v365
  %v964 = vpop.f32.mrf.mxu0
  %v965 = vadd.f32 %v876, %v964
  %v966 = vpop.f32.mrf.mxu0
  %v967 = vadd.f32 %v878, %v966
  %968 = vmatmul.bf16.gmra.mxu0 %v369
  %v969 = vpop.f32.mrf.mxu0
  %v970 = vadd.f32 %v881, %v969
  %v971 = vpop.f32.mrf.mxu0
  %v972 = vadd.f32 %v883, %v971
  %973 = vmatmul.bf16.gmra.mxu0 %v373
  %v974 = vpop.f32.mrf.mxu0
  %v975 = vadd.f32 %v886, %v974
  %v976 = vpop.f32.mrf.mxu0
  %v977 = vadd.f32 %v888, %v976
  %978 = vmatmul.bf16.gmra.mxu0 %v377
  %v979 = vpop.f32.mrf.mxu0
  %v980 = vadd.f32 %v891, %v979
  %v981 = vpop.f32.mrf.mxu0
  %v982 = vadd.f32 %v893, %v981
  %983 = vmatmul.bf16.gmra.mxu0 %v381
  %v984 = vpop.f32.mrf.mxu0
  %v985 = vadd.f32 %v896, %v984
  %v986 = vpop.f32.mrf.mxu0
  %v987 = vadd.f32 %v898, %v986
  %988 = vmatmul.bf16.gmra.mxu0 %v385
  %v989 = vpop.f32.mrf.mxu0
  %v990 = vadd.f32 %v901, %v989
  %v991 = vpop.f32.mrf.mxu0
  %v992 = vadd.f32 %v903, %v991
  %993 = vmatmul.bf16.gmra.mxu0 %v389
  %v994 = vpop.f32.mrf.mxu0
  %v995 = vadd.f32 %v906, %v994
  %v996 = vpop.f32.mrf.mxu0
  %v997 = vadd.f32 %v908, %v996
  %998 = vmatmul.bf16.gmra.mxu0 %v393
  %v999 = vpop.f32.mrf.mxu0
  %v1000 = vadd.f32 %v911, %v999
  %v1001 = vpop.f32.mrf.mxu0
  %v1002 = vadd.f32 %v913, %v1001
  %1003 = vmatmul.bf16.gmra.mxu0 %v397
  %v1004 = vpop.f32.mrf.mxu0
  %v1005 = vadd.f32 %v916, %v1004
  %v1006 = vpop.f32.mrf.mxu0
  %v1007 = vadd.f32 %v918, %v1006
  %1008 = vmatmul.bf16.gmra.mxu0 %v401
  %v1009 = vpop.f32.mrf.mxu0
  %v1010 = vadd.f32 %v921, %v1009
  %v1011 = vpop.f32.mrf.mxu0
  %v1012 = vadd.f32 %v923, %v1011
  %1013 = vdwg.mxu0
  %v1014 = vmax.f32 %v935, 0.0
  %v1015 = vmax.f32 %v937, 0.0
  %v1016 = vmax.f32 %v940, 0.0
  %v1017 = vmax.f32 %v942, 0.0
  %v1018 = vmax.f32 %v945, 0.0
  %v1019 = vmax.f32 %v947, 0.0
  %v1020 = vmax.f32 %v950, 0.0
  %v1021 = vmax.f32 %v952, 0.0
  %v1022 = vmax.f32 %v955, 0.0
  %v1023 = vmax.f32 %v957, 0.0
  %v1024 = vmax.f32 %v960, 0.0
  %v1025 = vmax.f32 %v962, 0.0
  %v1026 = vmax.f32 %v965, 0.0
  %v1027 = vmax.f32 %v967, 0.0
  %v1028 = vmax.f32 %v970, 0.0
  %v1029 = vmax.f32 %v972, 0.0
  %v1030 = vmax.f32 %v975, 0.0
  %v1031 = vmax.f32 %v977, 0.0
  %v1032 = vmax.f32 %v980, 0.0
  %v1033 = vmax.f32 %v982, 0.0
  %v1034 = vmax.f32 %v985, 0.0
  %v1035 = vmax.f32 %v987, 0.0
  %v1036 = vmax.f32 %v990, 0.0
  %v1037 = vmax.f32 %v992, 0.0
  %v1038 = vmax.f32 %v995, 0.0
  %v1039 = vmax.f32 %v997, 0.0
  %v1040 = vmax.f32 %v1000, 0.0
  %v1041 = vmax.f32 %v1002, 0.0
  %v1042 = vmax.f32 %v1005, 0.0
  %v1043 = vmax.f32 %v1007, 0.0
  %v1044 = vmax.f32 %v1010, 0.0
  %v1045 = vmax.f32 %v1012, 0.0
  %v1046 = vpack.c.bf16 %v1014, %v1014
  %v1047 = vpack.c.bf16 %v1015, %v1015
  %v1048 = vpack.c.bf16 %v1016, %v1016
  %v1049 = vpack.c.bf16 %v1017, %v1017
  %v1050 = vpack.c.bf16 %v1018, %v1018
  %v1051 = vpack.c.bf16 %v1019, %v1019
  %v1052 = vpack.c.bf16 %v1020, %v1020
  %v1053 = vpack.c.bf16 %v1021, %v1021
  %v1054 = vpack.c.bf16 %v1022, %v1022
  %v1055 = vpack.c.bf16 %v1023, %v1023
  %v1056 = vpack.c.bf16 %v1024, %v1024
  %v1057 = vpack.c.bf16 %v1025, %v1025
  %v1058 = vpack.c.bf16 %v1026, %v1026
  %v1059 = vpack.c.bf16 %v1027, %v1027
  %v1060 = vpack.c.bf16 %v1028, %v1028
  %v1061 = vpack.c.bf16 %v1029, %v1029
  %v1062 = vpack.c.bf16 %v1030, %v1030
  %v1063 = vpack.c.bf16 %v1031, %v1031
  %v1064 = vpack.c.bf16 %v1032, %v1032
  %v1065 = vpack.c.bf16 %v1033, %v1033
  %v1066 = vpack.c.bf16 %v1034, %v1034
  %v1067 = vpack.c.bf16 %v1035, %v1035
  %v1068 = vpack.c.bf16 %v1036, %v1036
  %v1069 = vpack.c.bf16 %v1037, %v1037
  %v1070 = vpack.c.bf16 %v1038, %v1038
  %v1071 = vpack.c.bf16 %v1039, %v1039
  %v1072 = vpack.c.bf16 %v1040, %v1040
  %v1073 = vpack.c.bf16 %v1041, %v1041
  %v1074 = vpack.c.bf16 %v1042, %v1042
  %v1075 = vpack.c.bf16 %v1043, %v1043
  %v1076 = vpack.c.bf16 %v1044, %v1044
  %v1077 = vpack.c.bf16 %v1045, %v1045
  %1078 = vst [vmem:[%s3] sm:$0xf] %v1046
  %1079 = vst [vmem:[%s3 + $0x4] sm:$0xf] %v1047
  %1080 = vst [vmem:[%s3 + $0x8] sm:$0xf] %v1048
  %1081 = vst [vmem:[%s3 + $0xc] sm:$0xf] %v1049
  %1082 = vst [vmem:[%s3 + $0x10] sm:$0xf] %v1050
  %1083 = vst [vmem:[%s3 + $0x14] sm:$0xf] %v1051
  %1084 = vst [vmem:[%s3 + $0x18] sm:$0xf] %v1052
  %1085 = vst [vmem:[%s3 + $0x1c] sm:$0xf] %v1053
  %1086 = vst [vmem:[%s3 + $0x20] sm:$0xf] %v1054
  %1087 = vst [vmem:[%s3 + $0x24] sm:$0xf] %v1055
  %1088 = vst [vmem:[%s3 + $0x28] sm:$0xf] %v1056
  %1089 = vst [vmem:[%s3 + $0x2c] sm:$0xf] %v1057
  %1090 = vst [vmem:[%s3 + $0x30] sm:$0xf] %v1058
  %1091 = vst [vmem:[%s3 + $0x34] sm:$0xf] %v1059
  %1092 = vst [vmem:[%s3 + $0x38] sm:$0xf] %v1060
  %1093 = vst [vmem:[%s3 + $0x3c] sm:$0xf] %v1061
  %1094 = vst [vmem:[%s3 + $0x40] sm:$0xf] %v1062
  %1095 = vst [vmem:[%s3 + $0x44] sm:$0xf] %v1063
  %1096 = vst [vmem:[%s3 + $0x48] sm:$0xf] %v1064
  %1097 = vst [vmem:[%s3 + $0x4c] sm:$0xf] %v1065
  %1098 = vst [vmem:[%s3 + $0x50] sm:$0xf] %v1066
  %1099 = vst [vmem:[%s3 + $0x54] sm:$0xf] %v1067
  %1100 = vst [vmem:[%s3 + $0x58] sm:$0xf] %v1068
  %1101 = vst [vmem:[%s3 + $0x5c] sm:$0xf] %v1069
  %1102 = vst [vmem:[%s3 + $0x60] sm:$0xf] %v1070
  %1103 = vst [vmem:[%s3 + $0x64] sm:$0xf] %v1071
  %1104 = vst [vmem:[%s3 + $0x68] sm:$0xf] %v1072
  %1105 = vst [vmem:[%s3 + $0x6c] sm:$0xf] %v1073
  %1106 = vst [vmem:[%s3 + $0x70] sm:$0xf] %v1074
  %1107 = vst [vmem:[%s3 + $0x74] sm:$0xf] %v1075
  %1108 = vst [vmem:[%s3 + $0x78] sm:$0xf] %v1076
  %1109 = vst [vmem:[%s3 + $0x7c] sm:$0xf] %v1077
  // Predicated region
  $region14: #{deepmind_forward.4} parent=0 // pred_check
    _
  $region15: #{deepmind_forward.4} parent=0 // pred_check_branch
    %1111 = sbr.rel (0) target = $region17
  $region16: #{deepmind_forward.4} parent=0 // pred_region
    _
  $region17: #{deepmind_forward.4} parent=0 // pred_fallthru
    _
  // Predicated region
  $region18: #{deepmind_forward.4} parent=0 // pred_check
    _
  $region19: #{deepmind_forward.4} parent=0 // pred_check_branch
    %1113 = sbr.rel (0) target = $region21
  $region20: #{deepmind_forward.4} parent=0 // pred_region
    _
  $region21: #{deepmind_forward.4} parent=0 // pred_fallthru
    _

// kernel: deepmind_forward.5
$region0: #{deepmind_forward.5}
  #allocation0 [shape = 'u32[]', space=smem, size = 0x4, offset = 0x4, fixed_abs, tag = 'smem constant byte address 0x4 - core index']
  #allocation1 [shape = 'u32[72,128]{1,0:T(1,128)}', space=vmem, size = 0x9000, scoped, tag = 'internal scratch']
  %s0 = inlined_call_operand.vmem [shape: bf16[128,640], index: 0, kind: input, shape index: {}]
  %s1 = inlined_call_operand.vmem [shape: bf16[640,128], index: 1, kind: input, shape index: {}]
  %s2 = inlined_call_operand.vmem [shape: f32[1,128], index: 2, kind: input, shape index: {}]
  %s3 = inlined_call_operand.vmem [shape: f32[128,128], index: 3, kind: output, shape index: {}]
  %s4 = sld [smem:[#allocation0]]
  $region22: #{deepmind_forward.5} parent=0
    _
  %s6 = ssub.s32 1, %s4
  %s7 = scalar_select 0, %s6, %s4
  // Predicated region
  $region2: #{deepmind_forward.5} parent=0 // pred_check
    _
  $region3: #{deepmind_forward.5} parent=0 // pred_check_branch
    %9 = sbr.rel (0) target = $region5
  $region4: #{deepmind_forward.5} parent=0 // pred_region
    _
  $region5: #{deepmind_forward.5} parent=0 // pred_fallthru
    _
  // Predicated region
  $region6: #{deepmind_forward.5} parent=0 // pred_check
    _
  $region7: #{deepmind_forward.5} parent=0 // pred_check_branch
    %11 = sbr.rel (0) target = $region9
  $region8: #{deepmind_forward.5} parent=0 // pred_region
    _
  $region9: #{deepmind_forward.5} parent=0 // pred_fallthru
    _
  // Predicated region
  $region10: #{deepmind_forward.5} parent=0 // pred_check
    _
  $region11: #{deepmind_forward.5} parent=0 // pred_check_branch
    %13 = sbr.rel (0) target = $region13
  $region12: #{deepmind_forward.5} parent=0 // pred_region
    _
  $region13: #{deepmind_forward.5} parent=0 // pred_fallthru
    _
  %v14 = vld [vmem:[%s0] sm:$0xff]
  %v15 = vld [vmem:[%s0 + $0x8] sm:$0xff]
  %v16 = vld [vmem:[%s0 + $0x10] sm:$0xf]
  %v17 = vld [vmem:[%s0 + $0x14] sm:$0xff]
  %v18 = vld [vmem:[%s0 + $0x1c] sm:$0xff]
  %v19 = vld [vmem:[%s0 + $0x24] sm:$0xf]
  %v20 = vld [vmem:[%s0 + $0x28] sm:$0xff]
  %v21 = vld [vmem:[%s0 + $0x30] sm:$0xff]
  %v22 = vld [vmem:[%s0 + $0x38] sm:$0xf]
  %v23 = vld [vmem:[%s0 + $0x3c] sm:$0xff]
  %v24 = vld [vmem:[%s0 + $0x44] sm:$0xff]
  %v25 = vld [vmem:[%s0 + $0x4c] sm:$0xf]
  %v26 = vld [vmem:[%s0 + $0x50] sm:$0xff]
  %v27 = vld [vmem:[%s0 + $0x58] sm:$0xff]
  %v28 = vld [vmem:[%s0 + $0x60] sm:$0xf]
  %v29 = vld [vmem:[%s0 + $0x64] sm:$0xff]
  %v30 = vld [vmem:[%s0 + $0x6c] sm:$0xff]
  %v31 = vld [vmem:[%s0 + $0x74] sm:$0xf]
  %v32 = vld [vmem:[%s0 + $0x78] sm:$0xff]
  %v33 = vld [vmem:[%s0 + $0x80] sm:$0xff]
  %v34 = vld [vmem:[%s0 + $0x88] sm:$0xf]
  %v35 = vld [vmem:[%s0 + $0x8c] sm:$0xff]
  %v36 = vld [vmem:[%s0 + $0x94] sm:$0xff]
  %v37 = vld [vmem:[%s0 + $0x9c] sm:$0xf]
  %v38 = vld [vmem:[%s0 + $0xa0] sm:$0xff]
  %v39 = vld [vmem:[%s0 + $0xa8] sm:$0xff]
  %v40 = vld [vmem:[%s0 + $0xb0] sm:$0xf]
  %v41 = vld [vmem:[%s0 + $0xb4] sm:$0xff]
  %v42 = vld [vmem:[%s0 + $0xbc] sm:$0xff]
  %v43 = vld [vmem:[%s0 + $0xc4] sm:$0xf]
  %v44 = vld [vmem:[%s0 + $0xc8] sm:$0xff]
  %v45 = vld [vmem:[%s0 + $0xd0] sm:$0xff]
  %v46 = vld [vmem:[%s0 + $0xd8] sm:$0xf]
  %v47 = vld [vmem:[%s0 + $0xdc] sm:$0xff]
  %v48 = vld [vmem:[%s0 + $0xe4] sm:$0xff]
  %v49 = vld [vmem:[%s0 + $0xec] sm:$0xf]
  %v50 = vld [vmem:[%s0 + $0xf0] sm:$0xff]
  %v51 = vld [vmem:[%s0 + $0xf8] sm:$0xff]
  %v52 = vld [vmem:[%s0 + $0x100] sm:$0xf]
  %v53 = vld [vmem:[%s0 + $0x104] sm:$0xff]
  %v54 = vld [vmem:[%s0 + $0x10c] sm:$0xff]
  %v55 = vld [vmem:[%s0 + $0x114] sm:$0xf]
  %v56 = vld [vmem:[%s0 + $0x118] sm:$0xff]
  %v57 = vld [vmem:[%s0 + $0x120] sm:$0xff]
  %v58 = vld [vmem:[%s0 + $0x128] sm:$0xf]
  %v59 = vld [vmem:[%s0 + $0x12c] sm:$0xff]
  %v60 = vld [vmem:[%s0 + $0x134] sm:$0xff]
  %v61 = vld [vmem:[%s0 + $0x13c] sm:$0xf]
  %v62 = vld [vmem:[%s1] sm:$0xf]
  %v63 = vld [vmem:[%s1 + $0x4] sm:$0xf]
  %v64 = vld [vmem:[%s1 + $0x8] sm:$0xf]
  %v65 = vld [vmem:[%s1 + $0xc] sm:$0xf]
  %v66 = vld [vmem:[%s1 + $0x10] sm:$0xf]
  %v67 = vld [vmem:[%s1 + $0x14] sm:$0xf]
  %v68 = vld [vmem:[%s1 + $0x18] sm:$0xf]
  %v69 = vld [vmem:[%s1 + $0x1c] sm:$0xf]
  %v70 = vld [vmem:[%s1 + $0x20] sm:$0xf]
  %v71 = vld [vmem:[%s1 + $0x24] sm:$0xf]
  %v72 = vld [vmem:[%s1 + $0x28] sm:$0xf]
  %v73 = vld [vmem:[%s1 + $0x2c] sm:$0xf]
  %v74 = vld [vmem:[%s1 + $0x30] sm:$0xf]
  %v75 = vld [vmem:[%s1 + $0x34] sm:$0xf]
  %v76 = vld [vmem:[%s1 + $0x38] sm:$0xf]
  %v77 = vld [vmem:[%s1 + $0x3c] sm:$0xf]
  %v78 = vld [vmem:[%s1 + $0x40] sm:$0xf]
  %v79 = vld [vmem:[%s1 + $0x44] sm:$0xf]
  %v80 = vld [vmem:[%s1 + $0x48] sm:$0xf]
  %v81 = vld [vmem:[%s1 + $0x4c] sm:$0xf]
  %v82 = vld [vmem:[%s1 + $0x50] sm:$0xf]
  %v83 = vld [vmem:[%s1 + $0x54] sm:$0xf]
  %v84 = vld [vmem:[%s1 + $0x58] sm:$0xf]
  %v85 = vld [vmem:[%s1 + $0x5c] sm:$0xf]
  %v86 = vld [vmem:[%s1 + $0x60] sm:$0xf]
  %v87 = vld [vmem:[%s1 + $0x64] sm:$0xf]
  %v88 = vld [vmem:[%s1 + $0x68] sm:$0xf]
  %v89 = vld [vmem:[%s1 + $0x6c] sm:$0xf]
  %v90 = vld [vmem:[%s1 + $0x70] sm:$0xf]
  %v91 = vld [vmem:[%s1 + $0x74] sm:$0xf]
  %v92 = vld [vmem:[%s1 + $0x78] sm:$0xf]
  %v93 = vld [vmem:[%s1 + $0x7c] sm:$0xf]
  %v94 = vld [vmem:[%s1 + $0x80] sm:$0xf]
  %v95 = vld [vmem:[%s1 + $0x84] sm:$0xf]
  %v96 = vld [vmem:[%s1 + $0x88] sm:$0xf]
  %v97 = vld [vmem:[%s1 + $0x8c] sm:$0xf]
  %v98 = vld [vmem:[%s1 + $0x90] sm:$0xf]
  %v99 = vld [vmem:[%s1 + $0x94] sm:$0xf]
  %v100 = vld [vmem:[%s1 + $0x98] sm:$0xf]
  %v101 = vld [vmem:[%s1 + $0x9c] sm:$0xf]
  %v102 = vld [vmem:[%s1 + $0xa0] sm:$0xf]
  %v103 = vld [vmem:[%s1 + $0xa4] sm:$0xf]
  %v104 = vld [vmem:[%s1 + $0xa8] sm:$0xf]
  %v105 = vld [vmem:[%s1 + $0xac] sm:$0xf]
  %v106 = vld [vmem:[%s1 + $0xb0] sm:$0xf]
  %v107 = vld [vmem:[%s1 + $0xb4] sm:$0xf]
  %v108 = vld [vmem:[%s1 + $0xb8] sm:$0xf]
  %v109 = vld [vmem:[%s1 + $0xbc] sm:$0xf]
  %v110 = vld [vmem:[%s1 + $0xc0] sm:$0xf]
  %v111 = vld [vmem:[%s1 + $0xc4] sm:$0xf]
  %v112 = vld [vmem:[%s1 + $0xc8] sm:$0xf]
  %v113 = vld [vmem:[%s1 + $0xcc] sm:$0xf]
  %v114 = vld [vmem:[%s1 + $0xd0] sm:$0xf]
  %v115 = vld [vmem:[%s1 + $0xd4] sm:$0xf]
  %v116 = vld [vmem:[%s1 + $0xd8] sm:$0xf]
  %v117 = vld [vmem:[%s1 + $0xdc] sm:$0xf]
  %v118 = vld [vmem:[%s1 + $0xe0] sm:$0xf]
  %v119 = vld [vmem:[%s1 + $0xe4] sm:$0xf]
  %v120 = vld [vmem:[%s1 + $0xe8] sm:$0xf]
  %v121 = vld [vmem:[%s1 + $0xec] sm:$0xf]
  %v122 = vld [vmem:[%s1 + $0xf0] sm:$0xf]
  %v123 = vld [vmem:[%s1 + $0xf4] sm:$0xf]
  %v124 = vld [vmem:[%s1 + $0xf8] sm:$0xf]
  %v125 = vld [vmem:[%s1 + $0xfc] sm:$0xf]
  %v126 = vld [vmem:[%s1 + $0x100] sm:$0xf]
  %v127 = vld [vmem:[%s1 + $0x104] sm:$0xf]
  %v128 = vld [vmem:[%s1 + $0x108] sm:$0xf]
  %v129 = vld [vmem:[%s1 + $0x10c] sm:$0xf]
  %v130 = vld [vmem:[%s1 + $0x110] sm:$0xf]
  %v131 = vld [vmem:[%s1 + $0x114] sm:$0xf]
  %v132 = vld [vmem:[%s1 + $0x118] sm:$0xf]
  %v133 = vld [vmem:[%s1 + $0x11c] sm:$0xf]
  %v134 = vld [vmem:[%s1 + $0x120] sm:$0xf]
  %v135 = vld [vmem:[%s1 + $0x124] sm:$0xf]
  %v136 = vld [vmem:[%s1 + $0x128] sm:$0xf]
  %v137 = vld [vmem:[%s1 + $0x12c] sm:$0xf]
  %v138 = vld [vmem:[%s1 + $0x130] sm:$0xf]
  %v139 = vld [vmem:[%s1 + $0x134] sm:$0xf]
  %v140 = vld [vmem:[%s1 + $0x138] sm:$0xf]
  %v141 = vld [vmem:[%s1 + $0x13c] sm:$0xf]
  %v142 = vld [vmem:[%s2] sm:$0x1]
  %v144 = vperm.slane %v142, 0
  %v194 = vunpack.c.l.b16 %v14
  %v195 = vunpack.c.h.b16 %v14
  %v196 = vunpack.c.l.b16 %v15
  %v197 = vunpack.c.h.b16 %v15
  %v198 = vunpack.c.l.b16 %v16
  %v199 = vunpack.c.l.b16 %v17
  %v200 = vunpack.c.h.b16 %v17
  %v201 = vunpack.c.l.b16 %v18
  %v202 = vunpack.c.h.b16 %v18
  %v203 = vunpack.c.l.b16 %v19
  %v204 = vunpack.c.l.b16 %v20
  %v205 = vunpack.c.h.b16 %v20
  %v206 = vunpack.c.l.b16 %v21
  %v207 = vunpack.c.h.b16 %v21
  %v208 = vunpack.c.l.b16 %v22
  %v209 = vunpack.c.l.b16 %v23
  %v210 = vunpack.c.h.b16 %v23
  %v211 = vunpack.c.l.b16 %v24
  %v212 = vunpack.c.h.b16 %v24
  %v213 = vunpack.c.l.b16 %v25
  %v214 = vunpack.c.l.b16 %v26
  %v215 = vunpack.c.h.b16 %v26
  %v216 = vunpack.c.l.b16 %v27
  %v217 = vunpack.c.h.b16 %v27
  %v218 = vunpack.c.l.b16 %v28
  %v219 = vunpack.c.l.b16 %v29
  %v220 = vunpack.c.h.b16 %v29
  %v221 = vunpack.c.l.b16 %v30
  %v222 = vunpack.c.h.b16 %v30
  %v223 = vunpack.c.l.b16 %v31
  %v224 = vunpack.c.l.b16 %v32
  %v225 = vunpack.c.h.b16 %v32
  %v226 = vunpack.c.l.b16 %v33
  %v227 = vunpack.c.h.b16 %v33
  %v228 = vunpack.c.l.b16 %v34
  %v229 = vunpack.c.l.b16 %v35
  %v230 = vunpack.c.h.b16 %v35
  %v231 = vunpack.c.l.b16 %v36
  %v232 = vunpack.c.h.b16 %v36
  %v233 = vunpack.c.l.b16 %v37
  %v234 = vunpack.c.l.b16 %v38
  %v235 = vunpack.c.h.b16 %v38
  %v236 = vunpack.c.l.b16 %v39
  %v237 = vunpack.c.h.b16 %v39
  %v238 = vunpack.c.l.b16 %v40
  %v239 = vunpack.c.l.b16 %v41
  %v240 = vunpack.c.h.b16 %v41
  %v241 = vunpack.c.l.b16 %v42
  %v242 = vunpack.c.h.b16 %v42
  %v243 = vunpack.c.l.b16 %v43
  %v244 = vunpack.c.l.b16 %v44
  %v245 = vunpack.c.h.b16 %v44
  %v246 = vunpack.c.l.b16 %v45
  %v247 = vunpack.c.h.b16 %v45
  %v248 = vunpack.c.l.b16 %v46
  %v249 = vunpack.c.l.b16 %v47
  %v250 = vunpack.c.h.b16 %v47
  %v251 = vunpack.c.l.b16 %v48
  %v252 = vunpack.c.h.b16 %v48
  %v253 = vunpack.c.l.b16 %v49
  %v254 = vunpack.c.l.b16 %v50
  %v255 = vunpack.c.h.b16 %v50
  %v256 = vunpack.c.l.b16 %v51
  %v257 = vunpack.c.h.b16 %v51
  %v258 = vunpack.c.l.b16 %v52
  %v259 = vunpack.c.l.b16 %v53
  %v260 = vunpack.c.h.b16 %v53
  %v261 = vunpack.c.l.b16 %v54
  %v262 = vunpack.c.h.b16 %v54
  %v263 = vunpack.c.l.b16 %v55
  %v264 = vunpack.c.l.b16 %v56
  %v265 = vunpack.c.h.b16 %v56
  %v266 = vunpack.c.l.b16 %v57
  %v267 = vunpack.c.h.b16 %v57
  %v268 = vunpack.c.l.b16 %v58
  %v269 = vunpack.c.l.b16 %v59
  %v270 = vunpack.c.h.b16 %v59
  %v271 = vunpack.c.l.b16 %v60
  %v272 = vunpack.c.h.b16 %v60
  %v273 = vunpack.c.l.b16 %v61
  %v274 = vpack.c.b16 %v199, %v194
  %v275 = vpack.c.b16 %v200, %v195
  %v276 = vpack.c.b16 %v201, %v196
  %v277 = vpack.c.b16 %v202, %v197
  %v278 = vpack.c.b16 %v203, %v198
  %v279 = vpack.c.b16 %v209, %v204
  %v280 = vpack.c.b16 %v210, %v205
  %v281 = vpack.c.b16 %v211, %v206
  %v282 = vpack.c.b16 %v212, %v207
  %v283 = vpack.c.b16 %v213, %v208
  %v284 = vpack.c.b16 %v219, %v214
  %v285 = vpack.c.b16 %v220, %v215
  %v286 = vpack.c.b16 %v221, %v216
  %v287 = vpack.c.b16 %v222, %v217
  %v288 = vpack.c.b16 %v223, %v218
  %v289 = vpack.c.b16 %v229, %v224
  %v290 = vpack.c.b16 %v230, %v225
  %v291 = vpack.c.b16 %v231, %v226
  %v292 = vpack.c.b16 %v232, %v227
  %v293 = vpack.c.b16 %v233, %v228
  %v294 = vpack.c.b16 %v239, %v234
  %v295 = vpack.c.b16 %v240, %v235
  %v296 = vpack.c.b16 %v241, %v236
  %v297 = vpack.c.b16 %v242, %v237
  %v298 = vpack.c.b16 %v243, %v238
  %v299 = vpack.c.b16 %v249, %v244
  %v300 = vpack.c.b16 %v250, %v245
  %v301 = vpack.c.b16 %v251, %v246
  %v302 = vpack.c.b16 %v252, %v247
  %v303 = vpack.c.b16 %v253, %v248
  %v304 = vpack.c.b16 %v259, %v254
  %v305 = vpack.c.b16 %v260, %v255
  %v306 = vpack.c.b16 %v261, %v256
  %v307 = vpack.c.b16 %v262, %v257
  %v308 = vpack.c.b16 %v263, %v258
  %v309 = vpack.c.b16 %v269, %v264
  %v310 = vpack.c.b16 %v270, %v265
  %v311 = vpack.c.b16 %v271, %v266
  %v312 = vpack.c.b16 %v272, %v267
  %v313 = vpack.c.b16 %v273, %v268
  %v434 = vunpack.c.l.b16 %v62
  %v435 = vunpack.c.l.b16 %v63
  %v436 = vunpack.c.l.b16 %v64
  %v437 = vunpack.c.l.b16 %v65
  %v438 = vunpack.c.l.b16 %v66
  %v439 = vunpack.c.l.b16 %v67
  %v440 = vunpack.c.l.b16 %v68
  %v441 = vunpack.c.l.b16 %v69
  %v442 = vunpack.c.l.b16 %v70
  %v443 = vunpack.c.l.b16 %v71
  %v444 = vunpack.c.l.b16 %v72
  %v445 = vunpack.c.l.b16 %v73
  %v446 = vunpack.c.l.b16 %v74
  %v447 = vunpack.c.l.b16 %v75
  %v448 = vunpack.c.l.b16 %v76
  %v449 = vunpack.c.l.b16 %v77
  %v450 = vunpack.c.l.b16 %v78
  %v451 = vunpack.c.l.b16 %v79
  %v452 = vunpack.c.l.b16 %v80
  %v453 = vunpack.c.l.b16 %v81
  %v454 = vunpack.c.l.b16 %v82
  %v455 = vunpack.c.l.b16 %v83
  %v456 = vunpack.c.l.b16 %v84
  %v457 = vunpack.c.l.b16 %v85
  %v458 = vunpack.c.l.b16 %v86
  %v459 = vunpack.c.l.b16 %v87
  %v460 = vunpack.c.l.b16 %v88
  %v461 = vunpack.c.l.b16 %v89
  %v462 = vunpack.c.l.b16 %v90
  %v463 = vunpack.c.l.b16 %v91
  %v464 = vunpack.c.l.b16 %v92
  %v465 = vunpack.c.l.b16 %v93
  %v466 = vunpack.c.l.b16 %v94
  %v467 = vunpack.c.l.b16 %v95
  %v468 = vunpack.c.l.b16 %v96
  %v469 = vunpack.c.l.b16 %v97
  %v470 = vunpack.c.l.b16 %v98
  %v471 = vunpack.c.l.b16 %v99
  %v472 = vunpack.c.l.b16 %v100
  %v473 = vunpack.c.l.b16 %v101
  %v474 = vunpack.c.l.b16 %v102
  %v475 = vunpack.c.l.b16 %v103
  %v476 = vunpack.c.l.b16 %v104
  %v477 = vunpack.c.l.b16 %v105
  %v478 = vunpack.c.l.b16 %v106
  %v479 = vunpack.c.l.b16 %v107
  %v480 = vunpack.c.l.b16 %v108
  %v481 = vunpack.c.l.b16 %v109
  %v482 = vunpack.c.l.b16 %v110
  %v483 = vunpack.c.l.b16 %v111
  %v484 = vunpack.c.l.b16 %v112
  %v485 = vunpack.c.l.b16 %v113
  %v486 = vunpack.c.l.b16 %v114
  %v487 = vunpack.c.l.b16 %v115
  %v488 = vunpack.c.l.b16 %v116
  %v489 = vunpack.c.l.b16 %v117
  %v490 = vunpack.c.l.b16 %v118
  %v491 = vunpack.c.l.b16 %v119
  %v492 = vunpack.c.l.b16 %v120
  %v493 = vunpack.c.l.b16 %v121
  %v494 = vunpack.c.l.b16 %v122
  %v495 = vunpack.c.l.b16 %v123
  %v496 = vunpack.c.l.b16 %v124
  %v497 = vunpack.c.l.b16 %v125
  %v498 = vunpack.c.l.b16 %v126
  %v499 = vunpack.c.l.b16 %v127
  %v500 = vunpack.c.l.b16 %v128
  %v501 = vunpack.c.l.b16 %v129
  %v502 = vunpack.c.l.b16 %v130
  %v503 = vunpack.c.l.b16 %v131
  %v504 = vunpack.c.l.b16 %v132
  %v505 = vunpack.c.l.b16 %v133
  %v506 = vunpack.c.l.b16 %v134
  %v507 = vunpack.c.l.b16 %v135
  %v508 = vunpack.c.l.b16 %v136
  %v509 = vunpack.c.l.b16 %v137
  %v510 = vunpack.c.l.b16 %v138
  %v511 = vunpack.c.l.b16 %v139
  %v512 = vunpack.c.l.b16 %v140
  %v513 = vunpack.c.l.b16 %v141
  %v514 = vpack.c.b16 %v435, %v434
  %v515 = vpack.c.b16 %v437, %v436
  %v516 = vpack.c.b16 %v439, %v438
  %v517 = vpack.c.b16 %v441, %v440
  %v518 = vpack.c.b16 %v443, %v442
  %v519 = vpack.c.b16 %v445, %v444
  %v520 = vpack.c.b16 %v447, %v446
  %v521 = vpack.c.b16 %v449, %v448
  %v522 = vpack.c.b16 %v451, %v450
  %v523 = vpack.c.b16 %v453, %v452
  %v524 = vpack.c.b16 %v455, %v454
  %v525 = vpack.c.b16 %v457, %v456
  %v526 = vpack.c.b16 %v459, %v458
  %v527 = vpack.c.b16 %v461, %v460
  %v528 = vpack.c.b16 %v463, %v462
  %v529 = vpack.c.b16 %v465, %v464
  %v530 = vpack.c.b16 %v467, %v466
  %v531 = vpack.c.b16 %v469, %v468
  %v532 = vpack.c.b16 %v471, %v470
  %v533 = vpack.c.b16 %v473, %v472
  %v534 = vpack.c.b16 %v475, %v474
  %v535 = vpack.c.b16 %v477, %v476
  %v536 = vpack.c.b16 %v479, %v478
  %v537 = vpack.c.b16 %v481, %v480
  %v538 = vpack.c.b16 %v483, %v482
  %v539 = vpack.c.b16 %v485, %v484
  %v540 = vpack.c.b16 %v487, %v486
  %v541 = vpack.c.b16 %v489, %v488
  %v542 = vpack.c.b16 %v491, %v490
  %v543 = vpack.c.b16 %v493, %v492
  %v544 = vpack.c.b16 %v495, %v494
  %v545 = vpack.c.b16 %v497, %v496
  %v546 = vpack.c.b16 %v499, %v498
  %v547 = vpack.c.b16 %v501, %v500
  %v548 = vpack.c.b16 %v503, %v502
  %v549 = vpack.c.b16 %v505, %v504
  %v550 = vpack.c.b16 %v507, %v506
  %v551 = vpack.c.b16 %v509, %v508
  %v552 = vpack.c.b16 %v511, %v510
  %v553 = vpack.c.b16 %v513, %v512
  %594 = vmatpush.bf16.msra.mxu0 %v521
  %595 = vmatpush.bf16.msra.mxu0 %v520
  %596 = vmatpush.bf16.msra.mxu0 %v519
  %597 = vmatpush.bf16.msra.mxu0 %v518
  %598 = vmatpush.bf16.msra.mxu0 %v517
  %599 = vmatpush.bf16.msra.mxu0 %v516
  %600 = vmatpush.bf16.msra.mxu0 %v515
  %601 = vmatpush.bf16.msra.mxu0 %v514
  %602 = vmatmul.bf16.gmra.mxu0 %v274
  %v603 = vpop.f32.mrf.mxu0
  %v604 = vadd.f32 %v144, %v603
  %v605 = vpop.f32.mrf.mxu0
  %v606 = vadd.f32 %v144, %v605
  %607 = vmatmul.bf16.gmra.mxu0 %v279
  %v608 = vpop.f32.mrf.mxu0
  %v609 = vadd.f32 %v144, %v608
  %v610 = vpop.f32.mrf.mxu0
  %v611 = vadd.f32 %v144, %v610
  %612 = vmatmul.bf16.gmra.mxu0 %v284
  %v613 = vpop.f32.mrf.mxu0
  %v614 = vadd.f32 %v144, %v613
  %v615 = vpop.f32.mrf.mxu0
  %v616 = vadd.f32 %v144, %v615
  %617 = vmatmul.bf16.gmra.mxu0 %v289
  %v618 = vpop.f32.mrf.mxu0
  %v619 = vadd.f32 %v144, %v618
  %v620 = vpop.f32.mrf.mxu0
  %v621 = vadd.f32 %v144, %v620
  %622 = vmatmul.bf16.gmra.mxu0 %v294
  %v623 = vpop.f32.mrf.mxu0
  %v624 = vadd.f32 %v144, %v623
  %v625 = vpop.f32.mrf.mxu0
  %v626 = vadd.f32 %v144, %v625
  %627 = vmatmul.bf16.gmra.mxu0 %v299
  %v628 = vpop.f32.mrf.mxu0
  %v629 = vadd.f32 %v144, %v628
  %v630 = vpop.f32.mrf.mxu0
  %v631 = vadd.f32 %v144, %v630
  %632 = vmatmul.bf16.gmra.mxu0 %v304
  %v633 = vpop.f32.mrf.mxu0
  %v634 = vadd.f32 %v144, %v633
  %v635 = vpop.f32.mrf.mxu0
  %v636 = vadd.f32 %v144, %v635
  %637 = vmatmul.bf16.gmra.mxu0 %v309
  %v638 = vpop.f32.mrf.mxu0
  %v639 = vadd.f32 %v144, %v638
  %v640 = vpop.f32.mrf.mxu0
  %v641 = vadd.f32 %v144, %v640
  %642 = vdwg.mxu0
  %643 = vmatpush.bf16.msra.mxu0 %v529
  %644 = vmatpush.bf16.msra.mxu0 %v528
  %645 = vmatpush.bf16.msra.mxu0 %v527
  %646 = vmatpush.bf16.msra.mxu0 %v526
  %647 = vmatpush.bf16.msra.mxu0 %v525
  %648 = vmatpush.bf16.msra.mxu0 %v524
  %649 = vmatpush.bf16.msra.mxu0 %v523
  %650 = vmatpush.bf16.msra.mxu0 %v522
  %651 = vmatmul.bf16.gmra.mxu0 %v275
  %v652 = vpop.f32.mrf.mxu0
  %v653 = vadd.f32 %v604, %v652
  %v654 = vpop.f32.mrf.mxu0
  %v655 = vadd.f32 %v606, %v654
  %656 = vmatmul.bf16.gmra.mxu0 %v280
  %v657 = vpop.f32.mrf.mxu0
  %v658 = vadd.f32 %v609, %v657
  %v659 = vpop.f32.mrf.mxu0
  %v660 = vadd.f32 %v611, %v659
  %661 = vmatmul.bf16.gmra.mxu0 %v285
  %v662 = vpop.f32.mrf.mxu0
  %v663 = vadd.f32 %v614, %v662
  %v664 = vpop.f32.mrf.mxu0
  %v665 = vadd.f32 %v616, %v664
  %666 = vmatmul.bf16.gmra.mxu0 %v290
  %v667 = vpop.f32.mrf.mxu0
  %v668 = vadd.f32 %v619, %v667
  %v669 = vpop.f32.mrf.mxu0
  %v670 = vadd.f32 %v621, %v669
  %671 = vmatmul.bf16.gmra.mxu0 %v295
  %v672 = vpop.f32.mrf.mxu0
  %v673 = vadd.f32 %v624, %v672
  %v674 = vpop.f32.mrf.mxu0
  %v675 = vadd.f32 %v626, %v674
  %676 = vmatmul.bf16.gmra.mxu0 %v300
  %v677 = vpop.f32.mrf.mxu0
  %v678 = vadd.f32 %v629, %v677
  %v679 = vpop.f32.mrf.mxu0
  %v680 = vadd.f32 %v631, %v679
  %681 = vmatmul.bf16.gmra.mxu0 %v305
  %v682 = vpop.f32.mrf.mxu0
  %v683 = vadd.f32 %v634, %v682
  %v684 = vpop.f32.mrf.mxu0
  %v685 = vadd.f32 %v636, %v684
  %686 = vmatmul.bf16.gmra.mxu0 %v310
  %v687 = vpop.f32.mrf.mxu0
  %v688 = vadd.f32 %v639, %v687
  %v689 = vpop.f32.mrf.mxu0
  %v690 = vadd.f32 %v641, %v689
  %691 = vdwg.mxu0
  %692 = vmatpush.bf16.msra.mxu0 %v537
  %693 = vmatpush.bf16.msra.mxu0 %v536
  %694 = vmatpush.bf16.msra.mxu0 %v535
  %695 = vmatpush.bf16.msra.mxu0 %v534
  %696 = vmatpush.bf16.msra.mxu0 %v533
  %697 = vmatpush.bf16.msra.mxu0 %v532
  %698 = vmatpush.bf16.msra.mxu0 %v531
  %699 = vmatpush.bf16.msra.mxu0 %v530
  %700 = vmatmul.bf16.gmra.mxu0 %v276
  %v701 = vpop.f32.mrf.mxu0
  %v702 = vadd.f32 %v653, %v701
  %v703 = vpop.f32.mrf.mxu0
  %v704 = vadd.f32 %v655, %v703
  %705 = vmatmul.bf16.gmra.mxu0 %v281
  %v706 = vpop.f32.mrf.mxu0
  %v707 = vadd.f32 %v658, %v706
  %v708 = vpop.f32.mrf.mxu0
  %v709 = vadd.f32 %v660, %v708
  %710 = vmatmul.bf16.gmra.mxu0 %v286
  %v711 = vpop.f32.mrf.mxu0
  %v712 = vadd.f32 %v663, %v711
  %v713 = vpop.f32.mrf.mxu0
  %v714 = vadd.f32 %v665, %v713
  %715 = vmatmul.bf16.gmra.mxu0 %v291
  %v716 = vpop.f32.mrf.mxu0
  %v717 = vadd.f32 %v668, %v716
  %v718 = vpop.f32.mrf.mxu0
  %v719 = vadd.f32 %v670, %v718
  %720 = vmatmul.bf16.gmra.mxu0 %v296
  %v721 = vpop.f32.mrf.mxu0
  %v722 = vadd.f32 %v673, %v721
  %v723 = vpop.f32.mrf.mxu0
  %v724 = vadd.f32 %v675, %v723
  %725 = vmatmul.bf16.gmra.mxu0 %v301
  %v726 = vpop.f32.mrf.mxu0
  %v727 = vadd.f32 %v678, %v726
  %v728 = vpop.f32.mrf.mxu0
  %v729 = vadd.f32 %v680, %v728
  %730 = vmatmul.bf16.gmra.mxu0 %v306
  %v731 = vpop.f32.mrf.mxu0
  %v732 = vadd.f32 %v683, %v731
  %v733 = vpop.f32.mrf.mxu0
  %v734 = vadd.f32 %v685, %v733
  %735 = vmatmul.bf16.gmra.mxu0 %v311
  %v736 = vpop.f32.mrf.mxu0
  %v737 = vadd.f32 %v688, %v736
  %v738 = vpop.f32.mrf.mxu0
  %v739 = vadd.f32 %v690, %v738
  %740 = vdwg.mxu0
  %741 = vmatpush.bf16.msra.mxu0 %v545
  %742 = vmatpush.bf16.msra.mxu0 %v544
  %743 = vmatpush.bf16.msra.mxu0 %v543
  %744 = vmatpush.bf16.msra.mxu0 %v542
  %745 = vmatpush.bf16.msra.mxu0 %v541
  %746 = vmatpush.bf16.msra.mxu0 %v540
  %747 = vmatpush.bf16.msra.mxu0 %v539
  %748 = vmatpush.bf16.msra.mxu0 %v538
  %749 = vmatmul.bf16.gmra.mxu0 %v277
  %v750 = vpop.f32.mrf.mxu0
  %v751 = vadd.f32 %v702, %v750
  %v752 = vpop.f32.mrf.mxu0
  %v753 = vadd.f32 %v704, %v752
  %754 = vmatmul.bf16.gmra.mxu0 %v282
  %v755 = vpop.f32.mrf.mxu0
  %v756 = vadd.f32 %v707, %v755
  %v757 = vpop.f32.mrf.mxu0
  %v758 = vadd.f32 %v709, %v757
  %759 = vmatmul.bf16.gmra.mxu0 %v287
  %v760 = vpop.f32.mrf.mxu0
  %v761 = vadd.f32 %v712, %v760
  %v762 = vpop.f32.mrf.mxu0
  %v763 = vadd.f32 %v714, %v762
  %764 = vmatmul.bf16.gmra.mxu0 %v292
  %v765 = vpop.f32.mrf.mxu0
  %v766 = vadd.f32 %v717, %v765
  %v767 = vpop.f32.mrf.mxu0
  %v768 = vadd.f32 %v719, %v767
  %769 = vmatmul.bf16.gmra.mxu0 %v297
  %v770 = vpop.f32.mrf.mxu0
  %v771 = vadd.f32 %v722, %v770
  %v772 = vpop.f32.mrf.mxu0
  %v773 = vadd.f32 %v724, %v772
  %774 = vmatmul.bf16.gmra.mxu0 %v302
  %v775 = vpop.f32.mrf.mxu0
  %v776 = vadd.f32 %v727, %v775
  %v777 = vpop.f32.mrf.mxu0
  %v778 = vadd.f32 %v729, %v777
  %779 = vmatmul.bf16.gmra.mxu0 %v307
  %v780 = vpop.f32.mrf.mxu0
  %v781 = vadd.f32 %v732, %v780
  %v782 = vpop.f32.mrf.mxu0
  %v783 = vadd.f32 %v734, %v782
  %784 = vmatmul.bf16.gmra.mxu0 %v312
  %v785 = vpop.f32.mrf.mxu0
  %v786 = vadd.f32 %v737, %v785
  %v787 = vpop.f32.mrf.mxu0
  %v788 = vadd.f32 %v739, %v787
  %789 = vdwg.mxu0
  %790 = vmatpush.bf16.msra.mxu0 %v553
  %791 = vmatpush.bf16.msra.mxu0 %v552
  %792 = vmatpush.bf16.msra.mxu0 %v551
  %793 = vmatpush.bf16.msra.mxu0 %v550
  %794 = vmatpush.bf16.msra.mxu0 %v549
  %795 = vmatpush.bf16.msra.mxu0 %v548
  %796 = vmatpush.bf16.msra.mxu0 %v547
  %797 = vmatpush.bf16.msra.mxu0 %v546
  %798 = vmatmul.bf16.gmra.mxu0 %v278
  %v799 = vpop.f32.mrf.mxu0
  %v800 = vadd.f32 %v751, %v799
  %v801 = vpop.f32.mrf.mxu0
  %v802 = vadd.f32 %v753, %v801
  %803 = vmatmul.bf16.gmra.mxu0 %v283
  %v804 = vpop.f32.mrf.mxu0
  %v805 = vadd.f32 %v756, %v804
  %v806 = vpop.f32.mrf.mxu0
  %v807 = vadd.f32 %v758, %v806
  %808 = vmatmul.bf16.gmra.mxu0 %v288
  %v809 = vpop.f32.mrf.mxu0
  %v810 = vadd.f32 %v761, %v809
  %v811 = vpop.f32.mrf.mxu0
  %v812 = vadd.f32 %v763, %v811
  %813 = vmatmul.bf16.gmra.mxu0 %v293
  %v814 = vpop.f32.mrf.mxu0
  %v815 = vadd.f32 %v766, %v814
  %v816 = vpop.f32.mrf.mxu0
  %v817 = vadd.f32 %v768, %v816
  %818 = vmatmul.bf16.gmra.mxu0 %v298
  %v819 = vpop.f32.mrf.mxu0
  %v820 = vadd.f32 %v771, %v819
  %v821 = vpop.f32.mrf.mxu0
  %v822 = vadd.f32 %v773, %v821
  %823 = vmatmul.bf16.gmra.mxu0 %v303
  %v824 = vpop.f32.mrf.mxu0
  %v825 = vadd.f32 %v776, %v824
  %v826 = vpop.f32.mrf.mxu0
  %v827 = vadd.f32 %v778, %v826
  %828 = vmatmul.bf16.gmra.mxu0 %v308
  %v829 = vpop.f32.mrf.mxu0
  %v830 = vadd.f32 %v781, %v829
  %v831 = vpop.f32.mrf.mxu0
  %v832 = vadd.f32 %v783, %v831
  %833 = vmatmul.bf16.gmra.mxu0 %v313
  %v834 = vpop.f32.mrf.mxu0
  %v835 = vadd.f32 %v786, %v834
  %v836 = vpop.f32.mrf.mxu0
  %v837 = vadd.f32 %v788, %v836
  %838 = vdwg.mxu0
  %v839 = vmax.f32 %v800, 0.0
  %v840 = vmax.f32 %v802, 0.0
  %v841 = vmax.f32 %v805, 0.0
  %v842 = vmax.f32 %v807, 0.0
  %v843 = vmax.f32 %v810, 0.0
  %v844 = vmax.f32 %v812, 0.0
  %v845 = vmax.f32 %v815, 0.0
  %v846 = vmax.f32 %v817, 0.0
  %v847 = vmax.f32 %v820, 0.0
  %v848 = vmax.f32 %v822, 0.0
  %v849 = vmax.f32 %v825, 0.0
  %v850 = vmax.f32 %v827, 0.0
  %v851 = vmax.f32 %v830, 0.0
  %v852 = vmax.f32 %v832, 0.0
  %v853 = vmax.f32 %v835, 0.0
  %v854 = vmax.f32 %v837, 0.0
  %855 = vst [vmem:[%s3] sm:$0xff] %v839
  %856 = vst [vmem:[%s3 + $0x8] sm:$0xff] %v840
  %857 = vst [vmem:[%s3 + $0x10] sm:$0xff] %v841
  %858 = vst [vmem:[%s3 + $0x18] sm:$0xff] %v842
  %859 = vst [vmem:[%s3 + $0x20] sm:$0xff] %v843
  %860 = vst [vmem:[%s3 + $0x28] sm:$0xff] %v844
  %861 = vst [vmem:[%s3 + $0x30] sm:$0xff] %v845
  %862 = vst [vmem:[%s3 + $0x38] sm:$0xff] %v846
  %863 = vst [vmem:[%s3 + $0x40] sm:$0xff] %v847
  %864 = vst [vmem:[%s3 + $0x48] sm:$0xff] %v848
  %865 = vst [vmem:[%s3 + $0x50] sm:$0xff] %v849
  %866 = vst [vmem:[%s3 + $0x58] sm:$0xff] %v850
  %867 = vst [vmem:[%s3 + $0x60] sm:$0xff] %v851
  %868 = vst [vmem:[%s3 + $0x68] sm:$0xff] %v852
  %869 = vst [vmem:[%s3 + $0x70] sm:$0xff] %v853
  %870 = vst [vmem:[%s3 + $0x78] sm:$0xff] %v854
  // Predicated region
  $region14: #{deepmind_forward.5} parent=0 // pred_check
    _
  $region15: #{deepmind_forward.5} parent=0 // pred_check_branch
    %872 = sbr.rel (0) target = $region17
  $region16: #{deepmind_forward.5} parent=0 // pred_region
    _
  $region17: #{deepmind_forward.5} parent=0 // pred_fallthru
    _
  // Predicated region
  $region18: #{deepmind_forward.5} parent=0 // pred_check
    _
  $region19: #{deepmind_forward.5} parent=0 // pred_check_branch
    %874 = sbr.rel (0) target = $region21
  $region20: #{deepmind_forward.5} parent=0 // pred_region
    _
  $region21: #{deepmind_forward.5} parent=0 // pred_fallthru
    _

</llo_original>
